<compile_context>
chip_gen: v5e
topology: v5e:2x2
jax: 0.10.0
libtpu: 0.0.40
codegen_flags: <defaults>
</compile_context>

<pallas_src>
import functools

import jax
import jax.numpy as jnp
from jax import lax
from jax.experimental import pallas as pl
from jax.experimental.pallas import tpu as pltpu

_EPS = 1e-5
_VMEM_LIMIT = 32 * 1024 * 1024  # safe on v5e / v6e / v7x
_LANES = 128


# ------------------------------ small helpers -------------------------------
def _rup(c, m=_LANES):
    return ((c + m - 1) // m) * m


def _pad_axis(a, axis, target):
    pad = target - a.shape[axis]
    if pad == 0:
        return a
    widths = [(0, 0)] * a.ndim
    widths[axis] = (0, pad)
    return jnp.pad(a, widths)


def _choose_tile(m, target=512):
    """Largest row tile <= target that divides m and is a multiple of 8."""
    for cand in range(min(target, m), 0, -1):
        if m % cand == 0 and cand % 8 == 0:
            return cand
    return m  # fall back to a single full block


def _row_spec(tile, c):
    def idx(i):
        return (i, 0)
    return pl.BlockSpec((tile, c), idx)


def _bcast_spec(shape):
    zeros = (0,) * len(shape)

    def idx(i):
        return zeros
    return pl.BlockSpec(shape, idx)


def _cparams(sem):
    return pltpu.CompilerParams(dimension_semantics=sem,
                                vmem_limit_bytes=_VMEM_LIMIT)


def _bn_from_stats(z, ssum, ssq, gamma, beta, count, eps):
    # Biased batch statistics from accumulated sum / sum-of-squares (f32).
    inv = 1.0 / count
    mean = ssum * inv
    var = jnp.maximum(ssq * inv - mean * mean, 0.0)
    return (z - mean) * (lax.rsqrt(var + eps) * gamma) + beta


# ------------------------------ kernel bodies --------------------------------
def _matmul_stats_kernel(x_ref, w_ref, z_ref, ssum_ref, ssq_ref):
    # z = x @ w (bf16 in, f32 acc); accumulate per-channel sum / sumsq.
    i = pl.program_id(0)
    z = jnp.dot(x_ref[...], w_ref[...], preferred_element_type=jnp.float32)
    z_ref[...] = z

    @pl.when(i == 0)
    def _():
        ssum_ref[...] = jnp.zeros_like(ssum_ref)
        ssq_ref[...] = jnp.zeros_like(ssq_ref)

    ssum_ref[...] += jnp.sum(z, axis=0, keepdims=True)
    ssq_ref[...] += jnp.sum(z * z, axis=0, keepdims=True)


def _bn_relu_kernel(z_ref, ssum_ref, ssq_ref, g_ref, b_ref, o_ref, *, count, eps):
    # Normalize + ReLU (pass 2); emits bf16 so the intermediate is half size.
    y = _bn_from_stats(z_ref[...], ssum_ref[...], ssq_ref[...],
                       g_ref[...], b_ref[...], count, eps)
    o_ref[...] = jnp.maximum(y, 0.0).astype(o_ref.dtype)


def _conv3x3_stats_kernel(ph_ref, w_ref, z_ref, ssum_ref, ssq_ref,
                          *, stride, ph_rows, ho, wo):
    # 3x3 conv as 9 tap matmuls accumulated in f32; one image per grid step.
    # ph_ref holds the stride-phase slabs stacked along the row axis.
    n = pl.program_id(0)
    c_out = w_ref.shape[2]
    acc = jnp.zeros((ho * wo, c_out), jnp.float32)
    for kh in range(3):
        for kw in range(3):
            p = (kh % stride) * stride + (kw % stride)
            r0 = p * ph_rows + kh // stride
            c0 = kw // stride
            xt = ph_ref[0, r0:r0 + ho, c0:c0 + wo, :]
            xt = xt.reshape(ho * wo, xt.shape[-1])
            acc = acc + jnp.dot(xt, w_ref[kh * 3 + kw],
                                preferred_element_type=jnp.float32)
    z_ref[0] = acc

    @pl.when(n == 0)
    def _():
        ssum_ref[...] = jnp.zeros_like(ssum_ref)
        ssq_ref[...] = jnp.zeros_like(ssq_ref)

    ssum_ref[...] += jnp.sum(acc, axis=0, keepdims=True)
    ssq_ref[...] += jnp.sum(acc * acc, axis=0, keepdims=True)


def _bn_relu_matmul_stats_kernel(z_ref, ssum_ref, ssq_ref, g_ref, b_ref, w_ref,
                                 o_ref, osum_ref, osq_ref, *, count, eps):
    # Fused: BN2-apply + ReLU + conv3 (1x1 matmul) + conv3 stats accumulation.
    i = pl.program_id(0)
    y = jnp.maximum(_bn_from_stats(z_ref[...], ssum_ref[...], ssq_ref[...],
                                   g_ref[...], b_ref[...], count, eps), 0.0)
    z = jnp.dot(y.astype(jnp.bfloat16), w_ref[...],
                preferred_element_type=jnp.float32)
    o_ref[...] = z

    @pl.when(i == 0)
    def _():
        osum_ref[...] = jnp.zeros_like(osum_ref)
        osq_ref[...] = jnp.zeros_like(osq_ref)

    osum_ref[...] += jnp.sum(z, axis=0, keepdims=True)
    osq_ref[...] += jnp.sum(z * z, axis=0, keepdims=True)


def _final_proj_kernel(z3_ref, s3s_ref, s3q_ref, g3_ref, b3_ref,
                       zs_ref, sss_ref, ssq_ref, gs_ref, bs_ref,
                       o_ref, *, count, eps):
    # BN3-apply + shortcut-BN-apply + add + ReLU.
    main = _bn_from_stats(z3_ref[...], s3s_ref[...], s3q_ref[...],
                          g3_ref[...], b3_ref[...], count, eps)
    sc = _bn_from_stats(zs_ref[...], sss_ref[...], ssq_ref[...],
                        gs_ref[...], bs_ref[...], count, eps)
    o_ref[...] = jnp.maximum(main + sc, 0.0)


def _final_id_kernel(z3_ref, s3s_ref, s3q_ref, g3_ref, b3_ref, xs_ref,
                     o_ref, *, count, eps):
    # BN3-apply + identity shortcut + add + ReLU.
    main = _bn_from_stats(z3_ref[...], s3s_ref[...], s3q_ref[...],
                          g3_ref[...], b3_ref[...], count, eps)
    o_ref[...] = jnp.maximum(main + xs_ref[...], 0.0)


# ------------------------------ pallas wrappers ------------------------------
def _matmul_stats(x2d, w, *, tile):
    m, k = x2d.shape
    c_out = w.shape[1]
    ce = pl.CostEstimate(flops=2 * m * k * c_out, transcendentals=0,
                         bytes_accessed=int(x2d.size * 2 + w.size * 2
                                            + m * c_out * 4 + 2 * c_out * 4))
    return pl.pallas_call(
        _matmul_stats_kernel,
        out_shape=(jax.ShapeDtypeStruct((m, c_out), jnp.float32),
                   jax.ShapeDtypeStruct((1, c_out), jnp.float32),
                   jax.ShapeDtypeStruct((1, c_out), jnp.float32)),
        grid=(m // tile,),
        in_specs=[_row_spec(tile, k), _bcast_spec((k, c_out))],
        out_specs=(_row_spec(tile, c_out),
                   _bcast_spec((1, c_out)), _bcast_spec((1, c_out))),
        compiler_params=_cparams(("arbitrary",)),
        cost_estimate=ce,
    )(x2d, w)


def _bn_relu(z, ssum, ssq, g, b, *, count, tile, out_dtype=jnp.bfloat16):
    m, c = z.shape
    return pl.pallas_call(
        functools.partial(_bn_relu_kernel, count=count, eps=_EPS),
        out_shape=jax.ShapeDtypeStruct((m, c), out_dtype),
        grid=(m // tile,),
        in_specs=[_row_spec(tile, c)] + [_bcast_spec((1, c))] * 4,
        out_specs=_row_spec(tile, c),
        compiler_params=_cparams(("parallel",)),
    )(z, ssum, ssq, g, b)


def _conv3x3_stats(phases, w2, *, stride, ph_rows, ho, wo):
    n, rows, pw, c = phases.shape
    c_out = w2.shape[2]
    ce = pl.CostEstimate(flops=2 * n * ho * wo * 9 * c * c_out,
                         transcendentals=0,
                         bytes_accessed=int(phases.size * 2 + w2.size * 2
                                            + n * ho * wo * c_out * 4))
    kern = functools.partial(_conv3x3_stats_kernel, stride=stride,
                             ph_rows=ph_rows, ho=ho, wo=wo)

    def in_idx(i):
        return (i, 0, 0, 0)

    def out_idx(i):
        return (i, 0, 0)

    return pl.pallas_call(
        kern,
        out_shape=(jax.ShapeDtypeStruct((n, ho * wo, c_out), jnp.float32),
                   jax.ShapeDtypeStruct((1, c_out), jnp.float32),
                   jax.ShapeDtypeStruct((1, c_out), jnp.float32)),
        grid=(n,),
        in_specs=[pl.BlockSpec((1, rows, pw, c), in_idx),
                  _bcast_spec((9, c, c_out))],
        out_specs=(pl.BlockSpec((1, ho * wo, c_out), out_idx),
                   _bcast_spec((1, c_out)), _bcast_spec((1, c_out))),
        compiler_params=_cparams(("arbitrary",)),
        cost_estimate=ce,
    )(phases, w2)


def _bn_relu_matmul_stats(z, ssum, ssq, g, b, w, *, count, tile):
    m, c = z.shape
    c_out = w.shape[1]
    ce = pl.CostEstimate(flops=2 * m * c * c_out, transcendentals=0,
                         bytes_accessed=int(z.size * 4 + w.size * 2
                                            + m * c_out * 4))
    kern = functools.partial(_bn_relu_matmul_stats_kernel, count=count, eps=_EPS)
    return pl.pallas_call(
        kern,
        out_shape=(jax.ShapeDtypeStruct((m, c_out), jnp.float32),
                   jax.ShapeDtypeStruct((1, c_out), jnp.float32),
                   jax.ShapeDtypeStruct((1, c_out), jnp.float32)),
        grid=(m // tile,),
        in_specs=[_row_spec(tile, c)] + [_bcast_spec((1, c))] * 4
                 + [_bcast_spec((c, c_out))],
        out_specs=(_row_spec(tile, c_out),
                   _bcast_spec((1, c_out)), _bcast_spec((1, c_out))),
        compiler_params=_cparams(("arbitrary",)),
        cost_estimate=ce,
    )(z, ssum, ssq, g, b, w)


def _final_proj(z3, s3, q3, g3, b3, zs, ss, qs, gs, bs, *, count, tile):
    m, c = z3.shape
    kern = functools.partial(_final_proj_kernel, count=count, eps=_EPS)
    return pl.pallas_call(
        kern,
        out_shape=jax.ShapeDtypeStruct((m, c), jnp.float32),
        grid=(m // tile,),
        in_specs=[_row_spec(tile, c)] + [_bcast_spec((1, c))] * 4
                 + [_row_spec(tile, c)] + [_bcast_spec((1, c))] * 4,
        out_specs=_row_spec(tile, c),
        compiler_params=_cparams(("parallel",)),
    )(z3, s3, q3, g3, b3, zs, ss, qs, gs, bs)


def _final_id(z3, s3, q3, g3, b3, xs, *, count, tile):
    m, c = z3.shape
    kern = functools.partial(_final_id_kernel, count=count, eps=_EPS)
    return pl.pallas_call(
        kern,
        out_shape=jax.ShapeDtypeStruct((m, c), jnp.float32),
        grid=(m // tile,),
        in_specs=[_row_spec(tile, c)] + [_bcast_spec((1, c))] * 4
                 + [_row_spec(tile, c)],
        out_specs=_row_spec(tile, c),
        compiler_params=_cparams(("parallel",)),
    )(z3, s3, q3, g3, b3, xs)


# ------------------------- conv2 stride-phase packing ------------------------
def _make_phases(y1p, stride, ho, wo):
    """Re-pack the spatially padded y1 into stride-phase slabs.

    Returns (N, stride^2 * PH, PW, C) and PH; tap (kh, kw) at phase
    p = (kh % s) * s + (kw % s) is the contiguous window
    [p*PH + kh//s : +Ho, kw//s : +Wo] — no strided loads inside the kernel,
    and total data is ~1x (not the 9x of im2col).
    """
    if stride == 1:
        return y1p, y1p.shape[1]
    s = stride
    ph_rows = ho + 2 // s
    ph_cols = wo + 2 // s
    parts = []
    for ph in range(s):
        for pw in range(s):
            a = y1p[:, ph::s, pw::s, :][:, :ph_rows, :ph_cols, :]
            pad_h = ph_rows - a.shape[1]
            pad_w = ph_cols - a.shape[2]
            if pad_h or pad_w:
                a = jnp.pad(a, ((0, 0), (0, pad_h), (0, pad_w), (0, 0)))
            parts.append(a)
    return jnp.concatenate(parts, axis=1), ph_rows


# ----------------------------- Bottleneck forward ----------------------------
@functools.partial(jax.jit, static_argnames=("stride",))
def bottleneck_forward(x_nchw, params, *, stride):
    x_nchw = x_nchw.astype(jnp.float32)
    n, cin, h, w = x_nchw.shape
    mid = params["w1"].shape[1]
    cout = params["w3"].shape[1]
    cin_p, mid_p, cout_p = _rup(cin), _rup(mid), _rup(cout)

    ho = (h - 1) // stride + 1
    wo = (w - 1) // stride + 1
    m1 = n * h * w
    m2 = n * ho * wo
    t1 = _choose_tile(m1)
    t2 = _choose_tile(m2)

    # NHWC, channels zero-padded to 128 lanes.
    x = jnp.transpose(x_nchw, (0, 2, 3, 1))
    xp = _pad_axis(x, 3, cin_p)                          # (N,H,W,Cin_p) f32

    # Padded parameters (weights bf16 for the MXU, gamma/beta f32).
    bf16 = jnp.bfloat16
    w1 = _pad_axis(_pad_axis(params["w1"], 0, cin_p), 1, mid_p).astype(bf16)
    g1 = _pad_axis(params["g1"], 1, mid_p)
    b1 = _pad_axis(params["b1"], 1, mid_p)
    w2 = params["w2"].reshape(9, mid, mid)
    w2 = _pad_axis(_pad_axis(w2, 1, mid_p), 2, mid_p).astype(bf16)
    g2 = _pad_axis(params["g2"], 1, mid_p)
    b2 = _pad_axis(params["b2"], 1, mid_p)
    w3 = _pad_axis(_pad_axis(params["w3"], 0, mid_p), 1, cout_p).astype(bf16)
    g3 = _pad_axis(params["g3"], 1, cout_p)
    b3 = _pad_axis(params["b3"], 1, cout_p)

    # conv1 (1x1) + BN1 stats  ->  BN1 apply + ReLU (two-pass BN).
    x2d = xp.reshape(m1, cin_p).astype(bf16)
    z1, s1, q1 = _matmul_stats(x2d, w1, tile=t1)
    y1 = _bn_relu(z1, s1, q1, g1, b1, count=m1, tile=t1)     # bf16 (M1, mid_p)

    # conv2 (3x3, stride, padding=1): in-kernel 9-tap accumulation + BN2 stats.
    y1p = jnp.pad(y1.reshape(n, h, w, mid_p), ((0, 0), (1, 1), (1, 1), (0, 0)))
    phases, ph_rows = _make_phases(y1p, stride, ho, wo)
    z2, s2, q2 = _conv3x3_stats(phases, w2, stride=stride,
                                ph_rows=ph_rows, ho=ho, wo=wo)
    z2 = z2.reshape(m2, mid_p)

    # BN2 apply + ReLU + conv3 (1x1) + BN3 stats — fused.
    z3, s3, q3 = _bn_relu_matmul_stats(z2, s2, q2, g2, b2, w3,
                                       count=m2, tile=t2)

    # Shortcut + final BN apply + add + ReLU.
    if stride != 1 or cin != cout:
        ws = _pad_axis(_pad_axis(params["ws"], 0, cin_p), 1, cout_p).astype(bf16)
        gs = _pad_axis(params["gs"], 1, cout_p)
        bs = _pad_axis(params["bs"], 1, cout_p)
        xs2d = xp[:, ::stride, ::stride, :].reshape(m2, cin_p).astype(bf16)
        zs, ss, qs = _matmul_stats(xs2d, ws, tile=t2)
        out2d = _final_proj(z3, s3, q3, g3, b3, zs, ss, qs, gs, bs,
                            count=m2, tile=t2)
    else:
        xs2d = xp.reshape(m2, cin_p)                          # f32 identity path
        out2d = _final_id(z3, s3, q3, g3, b3, xs2d, count=m2, tile=t2)

    out = out2d[:, :cout].reshape(n, ho, wo, cout)
    return jnp.transpose(out, (0, 3, 1, 2))                   # NCHW


# ----------------------------- pure-JAX reference ----------------------------
def bottleneck_reference(x_nchw, params, stride, eps=_EPS):
    x = jnp.transpose(x_nchw.astype(jnp.float32), (0, 2, 3, 1))
    cin = x.shape[-1]
    mid = params["w1"].shape[1]
    cout = params["w3"].shape[1]
    dn = ("NHWC", "HWIO", "NHWC")
    hi = lax.Precision.HIGHEST

    def bn(y, g, b):
        m = jnp.mean(y, axis=(0, 1, 2), keepdims=True)
        v = jnp.mean(jnp.square(y - m), axis=(0, 1, 2), keepdims=True)
        return ((y - m) * lax.rsqrt(v + eps) * g.reshape(1, 1, 1, -1)
                + b.reshape(1, 1, 1, -1))

    y = lax.conv_general_dilated(x, params["w1"].reshape(1, 1, cin, mid),
                                 (1, 1), "VALID", dimension_numbers=dn,
                                 precision=hi)
    y = jnp.maximum(bn(y, params["g1"], params["b1"]), 0.0)
    y = lax.conv_general_dilated(y, params["w2"], (stride, stride),
                                 ((1, 1), (1, 1)), dimension_numbers=dn,
                                 precision=hi)
    y = jnp.maximum(bn(y, params["g2"], params["b2"]), 0.0)
    y = bn(lax.conv_general_dilated(y, params["w3"].reshape(1, 1, mid, cout),
                                    (1, 1), "VALID", dimension_numbers=dn,
                                    precision=hi),
           params["g3"], params["b3"])
    if stride != 1 or cin != cout:
        sc = bn(lax.conv_general_dilated(x, params["ws"].reshape(1, 1, cin, cout),
                                         (stride, stride), "VALID",
                                         dimension_numbers=dn, precision=hi),
                params["gs"], params["bs"])
    else:
        sc = x
    return jnp.transpose(jnp.maximum(y + sc, 0.0), (0, 3, 1, 2))


# ----------------------------- deterministic params --------------------------
def init_params(key, in_channels, out_channels):
    mid = out_channels // 4  # Bottleneck.expansion == 4
    ks = jax.random.split(key, 12)
    f32 = jnp.float32
    return {
        "w1": 0.1 * jax.random.normal(ks[0], (in_channels, mid), f32),
        "g1": 1.0 + 0.1 * jax.random.normal(ks[1], (1, mid), f32),
        "b1": 0.1 * jax.random.normal(ks[2], (1, mid), f32),
        "w2": 0.1 * jax.random.normal(ks[3], (3, 3, mid, mid), f32),  # HWIO
        "g2": 1.0 + 0.1 * jax.random.normal(ks[4], (1, mid), f32),
        "b2": 0.1 * jax.random.normal(ks[5], (1, mid), f32),
        "w3": 0.1 * jax.random.normal(ks[6], (mid, out_channels), f32),
        "g3": 1.0 + 0.1 * jax.random.normal(ks[7], (1, out_channels), f32),
        "b3": 0.1 * jax.random.normal(ks[8], (1, out_channels), f32),
        "ws": 0.1 * jax.random.normal(ks[9], (in_channels, out_channels), f32),
        "gs": 1.0 + 0.1 * jax.random.normal(ks[10], (1, out_channels), f32),
        "bs": 0.1 * jax.random.normal(ks[11], (1, out_channels), f32),
    }


if __name__ == "__main__":
    key = jax.random.PRNGKey(0)
    kx, kp1, kp2 = jax.random.split(key, 3)

    # Case 1: projection shortcut (stride=2, channel expansion 4 -> 16).
    x = jax.random.normal(kx, (2, 4, 16, 16), jnp.float32)  # NCHW like PyTorch
    params = init_params(kp1, in_channels=4, out_channels=16)
    out = bottleneck_forward(x, params, stride=2)
    jax.block_until_ready(out)
    ref = bottleneck_reference(x, params, stride=2)
    assert out.shape == ref.shape == (2, 16, 8, 8), (out.shape, ref.shape)
    err = float(jnp.max(jnp.abs(out - ref)))
    assert jnp.allclose(out, ref, atol=3e-2, rtol=3e-2), err

    # Case 2: identity shortcut (stride=1, in_channels == out_channels).
    x2 = jax.random.normal(kx, (2, 16, 8, 8), jnp.float32)
    params2 = init_params(kp2, in_channels=16, out_channels=16)
    out2 = bottleneck_forward(x2, params2, stride=1)
    jax.block_until_ready(out2)
    ref2 = bottleneck_reference(x2, params2, stride=1)
    assert out2.shape == ref2.shape == (2, 16, 8, 8)
    err2 = float(jnp.max(jnp.abs(out2 - ref2)))
    assert jnp.allclose(out2, ref2, atol=3e-2, rtol=3e-2), err2

    print("KERNEL_OK")
</pallas_src>

<mosaic_0001>
module attributes {stable_mosaic.version = 11 : i64} {
  func.func @_bn_relu_kernel(%arg0: i32, %arg1: memref<512x128xf32, #tpu.memory_space<vmem>>, %arg2: memref<1x128xf32, #tpu.memory_space<vmem>>, %arg3: memref<1x128xf32, #tpu.memory_space<vmem>>, %arg4: memref<1x128xf32, #tpu.memory_space<vmem>>, %arg5: memref<1x128xf32, #tpu.memory_space<vmem>>, %arg6: memref<512x128xbf16, #tpu.memory_space<vmem>>) attributes {dimension_semantics = [#tpu.dimension_semantics<parallel>], iteration_bounds = array<i64: 1>, scalar_prefetch = 0 : i64, scratch_operands = 0 : i64, tpu.core_type = #tpu.core_type<tc>, window_params = [{transform_indices = @transform_0, window_bounds = array<i64: 512, 128>}, {pipeline_mode = #tpu.pipeline_mode<synchronous>, transform_indices = @transform_1, window_bounds = array<i64: 1, 128>}, {pipeline_mode = #tpu.pipeline_mode<synchronous>, transform_indices = @transform_2, window_bounds = array<i64: 1, 128>}, {pipeline_mode = #tpu.pipeline_mode<synchronous>, transform_indices = @transform_3, window_bounds = array<i64: 1, 128>}, {pipeline_mode = #tpu.pipeline_mode<synchronous>, transform_indices = @transform_4, window_bounds = array<i64: 1, 128>}, {transform_indices = @transform_5, window_bounds = array<i64: 512, 128>}]} {
    %c0 = arith.constant 0 : index
    %c0_0 = arith.constant 0 : index
    %0 = vector.load %arg1[%c0, %c0_0] : memref<512x128xf32, #tpu.memory_space<vmem>>, vector<512x128xf32>
    %c0_1 = arith.constant 0 : index
    %c0_2 = arith.constant 0 : index
    %1 = vector.load %arg2[%c0_1, %c0_2] : memref<1x128xf32, #tpu.memory_space<vmem>>, vector<1x128xf32>
    %c0_3 = arith.constant 0 : index
    %c0_4 = arith.constant 0 : index
    %2 = vector.load %arg3[%c0_3, %c0_4] : memref<1x128xf32, #tpu.memory_space<vmem>>, vector<1x128xf32>
    %c0_5 = arith.constant 0 : index
    %c0_6 = arith.constant 0 : index
    %3 = vector.load %arg4[%c0_5, %c0_6] : memref<1x128xf32, #tpu.memory_space<vmem>>, vector<1x128xf32>
    %c0_7 = arith.constant 0 : index
    %c0_8 = arith.constant 0 : index
    %4 = vector.load %arg5[%c0_7, %c0_8] : memref<1x128xf32, #tpu.memory_space<vmem>>, vector<1x128xf32>
    %cst = arith.constant 0.001953125 : f32
    %5 = vector.broadcast %cst : f32 to vector<1x128xf32>
    %6 = arith.mulf %1, %5 : vector<1x128xf32>
    %cst_9 = arith.constant 0.001953125 : f32
    %7 = vector.broadcast %cst_9 : f32 to vector<1x128xf32>
    %8 = arith.mulf %2, %7 : vector<1x128xf32>
    %9 = arith.mulf %6, %6 : vector<1x128xf32>
    %10 = arith.subf %8, %9 : vector<1x128xf32>
    %cst_10 = arith.constant 0.000000e+00 : f32
    %11 = vector.broadcast %cst_10 : f32 to vector<1x128xf32>
    %12 = arith.maximumf %10, %11 : vector<1x128xf32>
    %13 = vector.broadcast %6 : vector<1x128xf32> to vector<512x128xf32>
    %14 = arith.subf %0, %13 : vector<512x128xf32>
    %cst_11 = arith.constant 9.99999974E-6 : f32
    %15 = vector.broadcast %cst_11 : f32 to vector<1x128xf32>
    %16 = arith.addf %12, %15 : vector<1x128xf32>
    %17 = math.rsqrt %16 : vector<1x128xf32>
    %18 = arith.mulf %17, %3 : vector<1x128xf32>
    %19 = vector.broadcast %18 : vector<1x128xf32> to vector<512x128xf32>
    %20 = arith.mulf %14, %19 : vector<512x128xf32>
    %21 = vector.broadcast %4 : vector<1x128xf32> to vector<512x128xf32>
    %22 = arith.addf %20, %21 : vector<512x128xf32>
    %cst_12 = arith.constant 0.000000e+00 : f32
    %23 = vector.broadcast %cst_12 : f32 to vector<512x128xf32>
    %24 = arith.maximumf %22, %23 : vector<512x128xf32>
    %25 = arith.truncf %24 : vector<512x128xf32> to vector<512x128xbf16>
    %c0_13 = arith.constant 0 : index
    %c0_14 = arith.constant 0 : index
    %26 = vector.load %arg6[%c0_13, %c0_14] : memref<512x128xbf16, #tpu.memory_space<vmem>>, vector<512x128xbf16>
    tpu.vector_store %arg6[%c0_13, %c0_14], %25 {strides = array<i32>} : memref<512x128xbf16, #tpu.memory_space<vmem>>, vector<512x128xbf16>,
    return
  }
  func.func @transform_0(%arg0: i32) -> (i32, i32) {
    %c0_i32 = arith.constant 0 : i32
    %c0_i32_0 = arith.constant 0 : i32
    return %arg0, %c0_i32 : i32, i32
  }
  func.func @transform_1(%arg0: i32) -> (i32, i32) {
    %c0_i32 = arith.constant 0 : i32
    %c0_i32_0 = arith.constant 0 : i32
    %c0_i32_1 = arith.constant 0 : i32
    return %c0_i32, %c0_i32_0 : i32, i32
  }
  func.func @transform_2(%arg0: i32) -> (i32, i32) {
    %c0_i32 = arith.constant 0 : i32
    %c0_i32_0 = arith.constant 0 : i32
    %c0_i32_1 = arith.constant 0 : i32
    return %c0_i32, %c0_i32_0 : i32, i32
  }
  func.func @transform_3(%arg0: i32) -> (i32, i32) {
    %c0_i32 = arith.constant 0 : i32
    %c0_i32_0 = arith.constant 0 : i32
    %c0_i32_1 = arith.constant 0 : i32
    return %c0_i32, %c0_i32_0 : i32, i32
  }
  func.func @transform_4(%arg0: i32) -> (i32, i32) {
    %c0_i32 = arith.constant 0 : i32
    %c0_i32_0 = arith.constant 0 : i32
    %c0_i32_1 = arith.constant 0 : i32
    return %c0_i32, %c0_i32_0 : i32, i32
  }
  func.func @transform_5(%arg0: i32) -> (i32, i32) {
    %c0_i32 = arith.constant 0 : i32
    %c0_i32_0 = arith.constant 0 : i32
    return %arg0, %c0_i32 : i32, i32
  }
}

module attributes {stable_mosaic.version = 11 : i64} {
  func.func @_matmul_stats_kernel(%arg0: i32, %arg1: memref<512x128xbf16, #tpu.memory_space<vmem>>, %arg2: memref<128x128xbf16, #tpu.memory_space<vmem>>, %arg3: memref<512x128xf32, #tpu.memory_space<vmem>>, %arg4: memref<1x128xf32, #tpu.memory_space<vmem>>, %arg5: memref<1x128xf32, #tpu.memory_space<vmem>>) attributes {dimension_semantics = [#tpu.dimension_semantics<arbitrary>], iteration_bounds = array<i64: 1>, scalar_prefetch = 0 : i64, scratch_operands = 0 : i64, tpu.core_type = #tpu.core_type<tc>, window_params = [{transform_indices = @transform_0, window_bounds = array<i64: 512, 128>}, {pipeline_mode = #tpu.pipeline_mode<synchronous>, transform_indices = @transform_1, window_bounds = array<i64: 128, 128>}, {transform_indices = @transform_2, window_bounds = array<i64: 512, 128>}, {pipeline_mode = #tpu.pipeline_mode<synchronous>, transform_indices = @transform_3, window_bounds = array<i64: 1, 128>}, {pipeline_mode = #tpu.pipeline_mode<synchronous>, transform_indices = @transform_4, window_bounds = array<i64: 1, 128>}]} {
    %c0 = arith.constant 0 : index
    %c0_0 = arith.constant 0 : index
    %0 = vector.load %arg1[%c0, %c0_0] : memref<512x128xbf16, #tpu.memory_space<vmem>>, vector<512x128xbf16>
    %c0_1 = arith.constant 0 : index
    %c0_2 = arith.constant 0 : index
    %1 = vector.load %arg2[%c0_1, %c0_2] : memref<128x128xbf16, #tpu.memory_space<vmem>>, vector<128x128xbf16>
    %cst = arith.constant dense<0.000000e+00> : vector<512x128xf32>
    %2 = tpu.matmul %0, %1, %cst {dimension_numbers = #tpu.dot_dimension_numbers<[1], [0], [0], [1], [0, 0, 1, 1], [], []>} : vector<512x128xbf16>, vector<128x128xbf16>, vector<512x128xf32> -> vector<512x128xf32>
    %c0_3 = arith.constant 0 : index
    %c0_4 = arith.constant 0 : index
    %3 = vector.load %arg3[%c0_3, %c0_4] : memref<512x128xf32, #tpu.memory_space<vmem>>, vector<512x128xf32>
    tpu.vector_store %arg3[%c0_3, %c0_4], %2 {strides = array<i32>} : memref<512x128xf32, #tpu.memory_space<vmem>>, vector<512x128xf32>,
    %c0_i32 = arith.constant 0 : i32
    %4 = arith.cmpi eq, %arg0, %c0_i32 : i32
    %5 = arith.extui %4 : i1 to i32
    %c0_i32_5 = arith.constant 0 : i32
    %6 = arith.cmpi ne, %5, %c0_i32_5 : i32
    scf.if %6 {
      %cst_16 = arith.constant 0.000000e+00 : f32
      %18 = vector.broadcast %cst_16 : f32 to vector<1x128xf32>
      %c0_17 = arith.constant 0 : index
      %c0_18 = arith.constant 0 : index
      %19 = vector.load %arg4[%c0_17, %c0_18] : memref<1x128xf32, #tpu.memory_space<vmem>>, vector<1x128xf32>
      tpu.vector_store %arg4[%c0_17, %c0_18], %18 {strides = array<i32>} : memref<1x128xf32, #tpu.memory_space<vmem>>, vector<1x128xf32>,
      %cst_19 = arith.constant 0.000000e+00 : f32
      %20 = vector.broadcast %cst_19 : f32 to vector<1x128xf32>
      %c0_20 = arith.constant 0 : index
      %c0_21 = arith.constant 0 : index
      %21 = vector.load %arg5[%c0_20, %c0_21] : memref<1x128xf32, #tpu.memory_space<vmem>>, vector<1x128xf32>
      tpu.vector_store %arg5[%c0_20, %c0_21], %20 {strides = array<i32>} : memref<1x128xf32, #tpu.memory_space<vmem>>, vector<1x128xf32>,
    } else {
    }
    %c0_6 = arith.constant 0 : index
    %c0_7 = arith.constant 0 : index
    %7 = vector.load %arg4[%c0_6, %c0_7] : memref<1x128xf32, #tpu.memory_space<vmem>>, vector<1x128xf32>
    %cst_8 = arith.constant dense<0.000000e+00> : vector<128xf32>
    %8 = vector.multi_reduction <add>, %2, %cst_8 [0] : vector<512x128xf32> to vector<128xf32>
    %9 = vector.shape_cast %8 : vector<128xf32> to vector<1x128xf32>
    %10 = arith.addf %7, %9 : vector<1x128xf32>
    %c0_9 = arith.constant 0 : index
    %c0_10 = arith.constant 0 : index
    %11 = vector.load %arg4[%c0_9, %c0_10] : memref<1x128xf32, #tpu.memory_space<vmem>>, vector<1x128xf32>
    tpu.vector_store %arg4[%c0_9, %c0_10], %10 {strides = array<i32>} : memref<1x128xf32, #tpu.memory_space<vmem>>, vector<1x128xf32>,
    %c0_11 = arith.constant 0 : index
    %c0_12 = arith.constant 0 : index
    %12 = vector.load %arg5[%c0_11, %c0_12] : memref<1x128xf32, #tpu.memory_space<vmem>>, vector<1x128xf32>
    %13 = arith.mulf %2, %2 : vector<512x128xf32>
    %cst_13 = arith.constant dense<0.000000e+00> : vector<128xf32>
    %14 = vector.multi_reduction <add>, %13, %cst_13 [0] : vector<512x128xf32> to vector<128xf32>
    %15 = vector.shape_cast %14 : vector<128xf32> to vector<1x128xf32>
    %16 = arith.addf %12, %15 : vector<1x128xf32>
    %c0_14 = arith.constant 0 : index
    %c0_15 = arith.constant 0 : index
    %17 = vector.load %arg5[%c0_14, %c0_15] : memref<1x128xf32, #tpu.memory_space<vmem>>, vector<1x128xf32>
    tpu.vector_store %arg5[%c0_14, %c0_15], %16 {strides = array<i32>} : memref<1x128xf32, #tpu.memory_space<vmem>>, vector<1x128xf32>,
    return
  }
  func.func @transform_0(%arg0: i32) -> (i32, i32) {
    %c0_i32 = arith.constant 0 : i32
    %c0_i32_0 = arith.constant 0 : i32
    return %arg0, %c0_i32 : i32, i32
  }
  func.func @transform_1(%arg0: i32) -> (i32, i32) {
    %c0_i32 = arith.constant 0 : i32
    %c0_i32_0 = arith.constant 0 : i32
    %c0_i32_1 = arith.constant 0 : i32
    return %c0_i32, %c0_i32_0 : i32, i32
  }
  func.func @transform_2(%arg0: i32) -> (i32, i32) {
    %c0_i32 = arith.constant 0 : i32
    %c0_i32_0 = arith.constant 0 : i32
    return %arg0, %c0_i32 : i32, i32
  }
  func.func @transform_3(%arg0: i32) -> (i32, i32) {
    %c0_i32 = arith.constant 0 : i32
    %c0_i32_0 = arith.constant 0 : i32
    %c0_i32_1 = arith.constant 0 : i32
    return %c0_i32, %c0_i32_0 : i32, i32
  }
  func.func @transform_4(%arg0: i32) -> (i32, i32) {
    %c0_i32 = arith.constant 0 : i32
    %c0_i32_0 = arith.constant 0 : i32
    %c0_i32_1 = arith.constant 0 : i32
    return %c0_i32, %c0_i32_0 : i32, i32
  }
}

module attributes {stable_mosaic.version = 11 : i64} {
  func.func @_conv3x3_stats_kernel(%arg0: i32, %arg1: memref<1x36x9x128xbf16, #tpu.memory_space<vmem>>, %arg2: memref<9x128x128xbf16, #tpu.memory_space<vmem>>, %arg3: memref<1x64x128xf32, #tpu.memory_space<vmem>>, %arg4: memref<1x128xf32, #tpu.memory_space<vmem>>, %arg5: memref<1x128xf32, #tpu.memory_space<vmem>>) attributes {dimension_semantics = [#tpu.dimension_semantics<arbitrary>], iteration_bounds = array<i64: 2>, scalar_prefetch = 0 : i64, scratch_operands = 0 : i64, tpu.core_type = #tpu.core_type<tc>, window_params = [{transform_indices = @transform_0, window_bounds = array<i64: 1, 36, 9, 128>}, {pipeline_mode = #tpu.pipeline_mode<synchronous>, transform_indices = @transform_1, window_bounds = array<i64: 9, 128, 128>}, {transform_indices = @transform_2, window_bounds = array<i64: 1, 64, 128>}, {pipeline_mode = #tpu.pipeline_mode<synchronous>, transform_indices = @transform_3, window_bounds = array<i64: 1, 128>}, {pipeline_mode = #tpu.pipeline_mode<synchronous>, transform_indices = @transform_4, window_bounds = array<i64: 1, 128>}]} {
    %cst = arith.constant 0.000000e+00 : f32
    %0 = vector.broadcast %cst : f32 to vector<64x128xf32>
    %c0 = arith.constant 0 : index
    %c0_0 = arith.constant 0 : index
    %c0_1 = arith.constant 0 : index
    %c0_2 = arith.constant 0 : index
    %1 = vector.load %arg1[%c0, %c0_0, %c0_1, %c0_2] : memref<1x36x9x128xbf16, #tpu.memory_space<vmem>>, vector<1x8x8x128xbf16>
    %2 = vector.shape_cast %1 : vector<1x8x8x128xbf16> to vector<8x8x128xbf16>
    %3 = vector.shape_cast %2 : vector<8x8x128xbf16> to vector<64x128xbf16>
    %c0_3 = arith.constant 0 : index
    %c0_4 = arith.constant 0 : index
    %c0_5 = arith.constant 0 : index
    %4 = vector.load %arg2[%c0_3, %c0_4, %c0_5] : memref<9x128x128xbf16, #tpu.memory_space<vmem>>, vector<1x128x128xbf16>
    %5 = vector.shape_cast %4 : vector<1x128x128xbf16> to vector<128x128xbf16>
    %cst_6 = arith.constant dense<0.000000e+00> : vector<64x128xf32>
    %6 = tpu.matmul %3, %5, %cst_6 {dimension_numbers = #tpu.dot_dimension_numbers<[1], [0], [0], [1], [0, 0, 1, 1], [], []>} : vector<64x128xbf16>, vector<128x128xbf16>, vector<64x128xf32> -> vector<64x128xf32>
    %7 = arith.addf %0, %6 : vector<64x128xf32>
    %c0_7 = arith.constant 0 : index
    %c9 = arith.constant 9 : index
    %c0_8 = arith.constant 0 : index
    %c0_9 = arith.constant 0 : index
    %8 = vector.load %arg1[%c0_7, %c9, %c0_8, %c0_9] : memref<1x36x9x128xbf16, #tpu.memory_space<vmem>>, vector<1x8x8x128xbf16>
    %9 = vector.shape_cast %8 : vector<1x8x8x128xbf16> to vector<8x8x128xbf16>
    %10 = vector.shape_cast %9 : vector<8x8x128xbf16> to vector<64x128xbf16>
    %c1 = arith.constant 1 : index
    %c0_10 = arith.constant 0 : index
    %c0_11 = arith.constant 0 : index
    %11 = vector.load %arg2[%c1, %c0_10, %c0_11] : memref<9x128x128xbf16, #tpu.memory_space<vmem>>, vector<1x128x128xbf16>
    %12 = vector.shape_cast %11 : vector<1x128x128xbf16> to vector<128x128xbf16>
    %cst_12 = arith.constant dense<0.000000e+00> : vector<64x128xf32>
    %13 = tpu.matmul %10, %12, %cst_12 {dimension_numbers = #tpu.dot_dimension_numbers<[1], [0], [0], [1], [0, 0, 1, 1], [], []>} : vector<64x128xbf16>, vector<128x128xbf16>, vector<64x128xf32> -> vector<64x128xf32>
    %14 = arith.addf %7, %13 : vector<64x128xf32>
    %c0_13 = arith.constant 0 : index
    %c0_14 = arith.constant 0 : index
    %c1_15 = arith.constant 1 : index
    %c0_16 = arith.constant 0 : index
    %15 = vector.load %arg1[%c0_13, %c0_14, %c1_15, %c0_16] : memref<1x36x9x128xbf16, #tpu.memory_space<vmem>>, vector<1x8x8x128xbf16>
    %16 = vector.shape_cast %15 : vector<1x8x8x128xbf16> to vector<8x8x128xbf16>
    %17 = vector.shape_cast %16 : vector<8x8x128xbf16> to vector<64x128xbf16>
    %c2 = arith.constant 2 : index
    %c0_17 = arith.constant 0 : index
    %c0_18 = arith.constant 0 : index
    %18 = vector.load %arg2[%c2, %c0_17, %c0_18] : memref<9x128x128xbf16, #tpu.memory_space<vmem>>, vector<1x128x128xbf16>
    %19 = vector.shape_cast %18 : vector<1x128x128xbf16> to vector<128x128xbf16>
    %cst_19 = arith.constant dense<0.000000e+00> : vector<64x128xf32>
    %20 = tpu.matmul %17, %19, %cst_19 {dimension_numbers = #tpu.dot_dimension_numbers<[1], [0], [0], [1], [0, 0, 1, 1], [], []>} : vector<64x128xbf16>, vector<128x128xbf16>, vector<64x128xf32> -> vector<64x128xf32>
    %21 = arith.addf %14, %20 : vector<64x128xf32>
    %c0_20 = arith.constant 0 : index
    %c18 = arith.constant 18 : index
    %c0_21 = arith.constant 0 : index
    %c0_22 = arith.constant 0 : index
    %22 = vector.load %arg1[%c0_20, %c18, %c0_21, %c0_22] : memref<1x36x9x128xbf16, #tpu.memory_space<vmem>>, vector<1x8x8x128xbf16>
    %23 = vector.shape_cast %22 : vector<1x8x8x128xbf16> to vector<8x8x128xbf16>
    %24 = vector.shape_cast %23 : vector<8x8x128xbf16> to vector<64x128xbf16>
    %c3 = arith.constant 3 : index
    %c0_23 = arith.constant 0 : index
    %c0_24 = arith.constant 0 : index
    %25 = vector.load %arg2[%c3, %c0_23, %c0_24] : memref<9x128x128xbf16, #tpu.memory_space<vmem>>, vector<1x128x128xbf16>
    %26 = vector.shape_cast %25 : vector<1x128x128xbf16> to vector<128x128xbf16>
    %cst_25 = arith.constant dense<0.000000e+00> : vector<64x128xf32>
    %27 = tpu.matmul %24, %26, %cst_25 {dimension_numbers = #tpu.dot_dimension_numbers<[1], [0], [0], [1], [0, 0, 1, 1], [], []>} : vector<64x128xbf16>, vector<128x128xbf16>, vector<64x128xf32> -> vector<64x128xf32>
    %28 = arith.addf %21, %27 : vector<64x128xf32>
    %c0_26 = arith.constant 0 : index
    %c27 = arith.constant 27 : index
    %c0_27 = arith.constant 0 : index
    %c0_28 = arith.constant 0 : index
    %29 = vector.load %arg1[%c0_26, %c27, %c0_27, %c0_28] : memref<1x36x9x128xbf16, #tpu.memory_space<vmem>>, vector<1x8x8x128xbf16>
    %30 = vector.shape_cast %29 : vector<1x8x8x128xbf16> to vector<8x8x128xbf16>
    %31 = vector.shape_cast %30 : vector<8x8x128xbf16> to vector<64x128xbf16>
    %c4 = arith.constant 4 : index
    %c0_29 = arith.constant 0 : index
    %c0_30 = arith.constant 0 : index
    %32 = vector.load %arg2[%c4, %c0_29, %c0_30] : memref<9x128x128xbf16, #tpu.memory_space<vmem>>, vector<1x128x128xbf16>
    %33 = vector.shape_cast %32 : vector<1x128x128xbf16> to vector<128x128xbf16>
    %cst_31 = arith.constant dense<0.000000e+00> : vector<64x128xf32>
    %34 = tpu.matmul %31, %33, %cst_31 {dimension_numbers = #tpu.dot_dimension_numbers<[1], [0], [0], [1], [0, 0, 1, 1], [], []>} : vector<64x128xbf16>, vector<128x128xbf16>, vector<64x128xf32> -> vector<64x128xf32>
    %35 = arith.addf %28, %34 : vector<64x128xf32>
    %c0_32 = arith.constant 0 : index
    %c18_33 = arith.constant 18 : index
    %c1_34 = arith.constant 1 : index
    %c0_35 = arith.constant 0 : index
    %36 = vector.load %arg1[%c0_32, %c18_33, %c1_34, %c0_35] : memref<1x36x9x128xbf16, #tpu.memory_space<vmem>>, vector<1x8x8x128xbf16>
    %37 = vector.shape_cast %36 : vector<1x8x8x128xbf16> to vector<8x8x128xbf16>
    %38 = vector.shape_cast %37 : vector<8x8x128xbf16> to vector<64x128xbf16>
    %c5 = arith.constant 5 : index
    %c0_36 = arith.constant 0 : index
    %c0_37 = arith.constant 0 : index
    %39 = vector.load %arg2[%c5, %c0_36, %c0_37] : memref<9x128x128xbf16, #tpu.memory_space<vmem>>, vector<1x128x128xbf16>
    %40 = vector.shape_cast %39 : vector<1x128x128xbf16> to vector<128x128xbf16>
    %cst_38 = arith.constant dense<0.000000e+00> : vector<64x128xf32>
    %41 = tpu.matmul %38, %40, %cst_38 {dimension_numbers = #tpu.dot_dimension_numbers<[1], [0], [0], [1], [0, 0, 1, 1], [], []>} : vector<64x128xbf16>, vector<128x128xbf16>, vector<64x128xf32> -> vector<64x128xf32>
    %42 = arith.addf %35, %41 : vector<64x128xf32>
    %c0_39 = arith.constant 0 : index
    %c1_40 = arith.constant 1 : index
    %c0_41 = arith.constant 0 : index
    %c0_42 = arith.constant 0 : index
    %43 = vector.load %arg1[%c0_39, %c1_40, %c0_41, %c0_42] : memref<1x36x9x128xbf16, #tpu.memory_space<vmem>>, vector<1x8x8x128xbf16>
    %44 = vector.shape_cast %43 : vector<1x8x8x128xbf16> to vector<8x8x128xbf16>
    %45 = vector.shape_cast %44 : vector<8x8x128xbf16> to vector<64x128xbf16>
    %c6 = arith.constant 6 : index
    %c0_43 = arith.constant 0 : index
    %c0_44 = arith.constant 0 : index
    %46 = vector.load %arg2[%c6, %c0_43, %c0_44] : memref<9x128x128xbf16, #tpu.memory_space<vmem>>, vector<1x128x128xbf16>
    %47 = vector.shape_cast %46 : vector<1x128x128xbf16> to vector<128x128xbf16>
    %cst_45 = arith.constant dense<0.000000e+00> : vector<64x128xf32>
    %48 = tpu.matmul %45, %47, %cst_45 {dimension_numbers = #tpu.dot_dimension_numbers<[1], [0], [0], [1], [0, 0, 1, 1], [], []>} : vector<64x128xbf16>, vector<128x128xbf16>, vector<64x128xf32> -> vector<64x128xf32>
    %49 = arith.addf %42, %48 : vector<64x128xf32>
    %c0_46 = arith.constant 0 : index
    %c10 = arith.constant 10 : index
    %c0_47 = arith.constant 0 : index
    %c0_48 = arith.constant 0 : index
    %50 = vector.load %arg1[%c0_46, %c10, %c0_47, %c0_48] : memref<1x36x9x128xbf16, #tpu.memory_space<vmem>>, vector<1x8x8x128xbf16>
    %51 = vector.shape_cast %50 : vector<1x8x8x128xbf16> to vector<8x8x128xbf16>
    %52 = vector.shape_cast %51 : vector<8x8x128xbf16> to vector<64x128xbf16>
    %c7 = arith.constant 7 : index
    %c0_49 = arith.constant 0 : index
    %c0_50 = arith.constant 0 : index
    %53 = vector.load %arg2[%c7, %c0_49, %c0_50] : memref<9x128x128xbf16, #tpu.memory_space<vmem>>, vector<1x128x128xbf16>
    %54 = vector.shape_cast %53 : vector<1x128x128xbf16> to vector<128x128xbf16>
    %cst_51 = arith.constant dense<0.000000e+00> : vector<64x128xf32>
    %55 = tpu.matmul %52, %54, %cst_51 {dimension_numbers = #tpu.dot_dimension_numbers<[1], [0], [0], [1], [0, 0, 1, 1], [], []>} : vector<64x128xbf16>, vector<128x128xbf16>, vector<64x128xf32> -> vector<64x128xf32>
    %56 = arith.addf %49, %55 : vector<64x128xf32>
    %c0_52 = arith.constant 0 : index
    %c1_53 = arith.constant 1 : index
    %c1_54 = arith.constant 1 : index
    %c0_55 = arith.constant 0 : index
    %57 = vector.load %arg1[%c0_52, %c1_53, %c1_54, %c0_55] : memref<1x36x9x128xbf16, #tpu.memory_space<vmem>>, vector<1x8x8x128xbf16>
    %58 = vector.shape_cast %57 : vector<1x8x8x128xbf16> to vector<8x8x128xbf16>
    %59 = vector.shape_cast %58 : vector<8x8x128xbf16> to vector<64x128xbf16>
    %c8 = arith.constant 8 : index
    %c0_56 = arith.constant 0 : index
    %c0_57 = arith.constant 0 : index
    %60 = vector.load %arg2[%c8, %c0_56, %c0_57] : memref<9x128x128xbf16, #tpu.memory_space<vmem>>, vector<1x128x128xbf16>
    %61 = vector.shape_cast %60 : vector<1x128x128xbf16> to vector<128x128xbf16>
    %cst_58 = arith.constant dense<0.000000e+00> : vector<64x128xf32>
    %62 = tpu.matmul %59, %61, %cst_58 {dimension_numbers = #tpu.dot_dimension_numbers<[1], [0], [0], [1], [0, 0, 1, 1], [], []>} : vector<64x128xbf16>, vector<128x128xbf16>, vector<64x128xf32> -> vector<64x128xf32>
    %63 = arith.addf %56, %62 : vector<64x128xf32>
    %c0_59 = arith.constant 0 : index
    %c0_60 = arith.constant 0 : index
    %c0_61 = arith.constant 0 : index
    %64 = vector.load %arg3[%c0_59, %c0_60, %c0_61] : memref<1x64x128xf32, #tpu.memory_space<vmem>>, vector<1x64x128xf32>
    %65 = vector.shape_cast %64 : vector<1x64x128xf32> to vector<64x128xf32>
    %66 = vector.shape_cast %63 : vector<64x128xf32> to vector<1x64x128xf32>
    tpu.vector_store %arg3[%c0_59, %c0_60, %c0_61], %66 {strides = array<i32>} : memref<1x64x128xf32, #tpu.memory_space<vmem>>, vector<1x64x128xf32>,
    %c0_i32 = arith.constant 0 : i32
    %67 = arith.cmpi eq, %arg0, %c0_i32 : i32
    %68 = arith.extui %67 : i1 to i32
    %c0_i32_62 = arith.constant 0 : i32
    %69 = arith.cmpi ne, %68, %c0_i32_62 : i32
    scf.if %69 {
      %cst_73 = arith.constant 0.000000e+00 : f32
      %81 = vector.broadcast %cst_73 : f32 to vector<1x128xf32>
      %c0_74 = arith.constant 0 : index
      %c0_75 = arith.constant 0 : index
      %82 = vector.load %arg4[%c0_74, %c0_75] : memref<1x128xf32, #tpu.memory_space<vmem>>, vector<1x128xf32>
      tpu.vector_store %arg4[%c0_74, %c0_75], %81 {strides = array<i32>} : memref<1x128xf32, #tpu.memory_space<vmem>>, vector<1x128xf32>,
      %cst_76 = arith.constant 0.000000e+00 : f32
      %83 = vector.broadcast %cst_76 : f32 to vector<1x128xf32>
      %c0_77 = arith.constant 0 : index
      %c0_78 = arith.constant 0 : index
      %84 = vector.load %arg5[%c0_77, %c0_78] : memref<1x128xf32, #tpu.memory_space<vmem>>, vector<1x128xf32>
      tpu.vector_store %arg5[%c0_77, %c0_78], %83 {strides = array<i32>} : memref<1x128xf32, #tpu.memory_space<vmem>>, vector<1x128xf32>,
    } else {
    }
    %c0_63 = arith.constant 0 : index
    %c0_64 = arith.constant 0 : index
    %70 = vector.load %arg4[%c0_63, %c0_64] : memref<1x128xf32, #tpu.memory_space<vmem>>, vector<1x128xf32>
    %cst_65 = arith.constant dense<0.000000e+00> : vector<128xf32>
    %71 = vector.multi_reduction <add>, %63, %cst_65 [0] : vector<64x128xf32> to vector<128xf32>
    %72 = vector.shape_cast %71 : vector<128xf32> to vector<1x128xf32>
    %73 = arith.addf %70, %72 : vector<1x128xf32>
    %c0_66 = arith.constant 0 : index
    %c0_67 = arith.constant 0 : index
    %74 = vector.load %arg4[%c0_66, %c0_67] : memref<1x128xf32, #tpu.memory_space<vmem>>, vector<1x128xf32>
    tpu.vector_store %arg4[%c0_66, %c0_67], %73 {strides = array<i32>} : memref<1x128xf32, #tpu.memory_space<vmem>>, vector<1x128xf32>,
    %c0_68 = arith.constant 0 : index
    %c0_69 = arith.constant 0 : index
    %75 = vector.load %arg5[%c0_68, %c0_69] : memref<1x128xf32, #tpu.memory_space<vmem>>, vector<1x128xf32>
    %76 = arith.mulf %63, %63 : vector<64x128xf32>
    %cst_70 = arith.constant dense<0.000000e+00> : vector<128xf32>
    %77 = vector.multi_reduction <add>, %76, %cst_70 [0] : vector<64x128xf32> to vector<128xf32>
    %78 = vector.shape_cast %77 : vector<128xf32> to vector<1x128xf32>
    %79 = arith.addf %75, %78 : vector<1x128xf32>
    %c0_71 = arith.constant 0 : index
    %c0_72 = arith.constant 0 : index
    %80 = vector.load %arg5[%c0_71, %c0_72] : memref<1x128xf32, #tpu.memory_space<vmem>>, vector<1x128xf32>
    tpu.vector_store %arg5[%c0_71, %c0_72], %79 {strides = array<i32>} : memref<1x128xf32, #tpu.memory_space<vmem>>, vector<1x128xf32>,
    return
  }
  func.func @transform_0(%arg0: i32) -> (i32, i32, i32, i32) {
    %c0_i32 = arith.constant 0 : i32
    %c0_i32_0 = arith.constant 0 : i32
    %c0_i32_1 = arith.constant 0 : i32
    %c0_i32_2 = arith.constant 0 : i32
    return %arg0, %c0_i32, %c0_i32_0, %c0_i32_1 : i32, i32, i32, i32
  }
  func.func @transform_1(%arg0: i32) -> (i32, i32, i32) {
    %c0_i32 = arith.constant 0 : i32
    %c0_i32_0 = arith.constant 0 : i32
    %c0_i32_1 = arith.constant 0 : i32
    %c0_i32_2 = arith.constant 0 : i32
    return %c0_i32, %c0_i32_0, %c0_i32_1 : i32, i32, i32
  }
  func.func @transform_2(%arg0: i32) -> (i32, i32, i32) {
    %c0_i32 = arith.constant 0 : i32
    %c0_i32_0 = arith.constant 0 : i32
    %c0_i32_1 = arith.constant 0 : i32
    return %arg0, %c0_i32, %c0_i32_0 : i32, i32, i32
  }
  func.func @transform_3(%arg0: i32) -> (i32, i32) {
    %c0_i32 = arith.constant 0 : i32
    %c0_i32_0 = arith.constant 0 : i32
    %c0_i32_1 = arith.constant 0 : i32
    return %c0_i32, %c0_i32_0 : i32, i32
  }
  func.func @transform_4(%arg0: i32) -> (i32, i32) {
    %c0_i32 = arith.constant 0 : i32
    %c0_i32_0 = arith.constant 0 : i32
    %c0_i32_1 = arith.constant 0 : i32
    return %c0_i32, %c0_i32_0 : i32, i32
  }
}

module attributes {stable_mosaic.version = 11 : i64} {
  func.func @_bn_relu_matmul_stats_kernel(%arg0: i32, %arg1: memref<128x128xf32, #tpu.memory_space<vmem>>, %arg2: memref<1x128xf32, #tpu.memory_space<vmem>>, %arg3: memref<1x128xf32, #tpu.memory_space<vmem>>, %arg4: memref<1x128xf32, #tpu.memory_space<vmem>>, %arg5: memref<1x128xf32, #tpu.memory_space<vmem>>, %arg6: memref<128x128xbf16, #tpu.memory_space<vmem>>, %arg7: memref<128x128xf32, #tpu.memory_space<vmem>>, %arg8: memref<1x128xf32, #tpu.memory_space<vmem>>, %arg9: memref<1x128xf32, #tpu.memory_space<vmem>>) attributes {dimension_semantics = [#tpu.dimension_semantics<arbitrary>], iteration_bounds = array<i64: 1>, scalar_prefetch = 0 : i64, scratch_operands = 0 : i64, tpu.core_type = #tpu.core_type<tc>, window_params = [{transform_indices = @transform_0, window_bounds = array<i64: 128, 128>}, {pipeline_mode = #tpu.pipeline_mode<synchronous>, transform_indices = @transform_1, window_bounds = array<i64: 1, 128>}, {pipeline_mode = #tpu.pipeline_mode<synchronous>, transform_indices = @transform_2, window_bounds = array<i64: 1, 128>}, {pipeline_mode = #tpu.pipeline_mode<synchronous>, transform_indices = @transform_3, window_bounds = array<i64: 1, 128>}, {pipeline_mode = #tpu.pipeline_mode<synchronous>, transform_indices = @transform_4, window_bounds = array<i64: 1, 128>}, {pipeline_mode = #tpu.pipeline_mode<synchronous>, transform_indices = @transform_5, window_bounds = array<i64: 128, 128>}, {transform_indices = @transform_6, window_bounds = array<i64: 128, 128>}, {pipeline_mode = #tpu.pipeline_mode<synchronous>, transform_indices = @transform_7, window_bounds = array<i64: 1, 128>}, {pipeline_mode = #tpu.pipeline_mode<synchronous>, transform_indices = @transform_8, window_bounds = array<i64: 1, 128>}]} {
    %c0 = arith.constant 0 : index
    %c0_0 = arith.constant 0 : index
    %0 = vector.load %arg1[%c0, %c0_0] : memref<128x128xf32, #tpu.memory_space<vmem>>, vector<128x128xf32>
    %c0_1 = arith.constant 0 : index
    %c0_2 = arith.constant 0 : index
    %1 = vector.load %arg2[%c0_1, %c0_2] : memref<1x128xf32, #tpu.memory_space<vmem>>, vector<1x128xf32>
    %c0_3 = arith.constant 0 : index
    %c0_4 = arith.constant 0 : index
    %2 = vector.load %arg3[%c0_3, %c0_4] : memref<1x128xf32, #tpu.memory_space<vmem>>, vector<1x128xf32>
    %c0_5 = arith.constant 0 : index
    %c0_6 = arith.constant 0 : index
    %3 = vector.load %arg4[%c0_5, %c0_6] : memref<1x128xf32, #tpu.memory_space<vmem>>, vector<1x128xf32>
    %c0_7 = arith.constant 0 : index
    %c0_8 = arith.constant 0 : index
    %4 = vector.load %arg5[%c0_7, %c0_8] : memref<1x128xf32, #tpu.memory_space<vmem>>, vector<1x128xf32>
    %cst = arith.constant 7.812500e-03 : f32
    %5 = vector.broadcast %cst : f32 to vector<1x128xf32>
    %6 = arith.mulf %1, %5 : vector<1x128xf32>
    %cst_9 = arith.constant 7.812500e-03 : f32
    %7 = vector.broadcast %cst_9 : f32 to vector<1x128xf32>
    %8 = arith.mulf %2, %7 : vector<1x128xf32>
    %9 = arith.mulf %6, %6 : vector<1x128xf32>
    %10 = arith.subf %8, %9 : vector<1x128xf32>
    %cst_10 = arith.constant 0.000000e+00 : f32
    %11 = vector.broadcast %cst_10 : f32 to vector<1x128xf32>
    %12 = arith.maximumf %10, %11 : vector<1x128xf32>
    %13 = vector.broadcast %6 : vector<1x128xf32> to vector<128x128xf32>
    %14 = arith.subf %0, %13 : vector<128x128xf32>
    %cst_11 = arith.constant 9.99999974E-6 : f32
    %15 = vector.broadcast %cst_11 : f32 to vector<1x128xf32>
    %16 = arith.addf %12, %15 : vector<1x128xf32>
    %17 = math.rsqrt %16 : vector<1x128xf32>
    %18 = arith.mulf %17, %3 : vector<1x128xf32>
    %19 = vector.broadcast %18 : vector<1x128xf32> to vector<128x128xf32>
    %20 = arith.mulf %14, %19 : vector<128x128xf32>
    %21 = vector.broadcast %4 : vector<1x128xf32> to vector<128x128xf32>
    %22 = arith.addf %20, %21 : vector<128x128xf32>
    %cst_12 = arith.constant 0.000000e+00 : f32
    %23 = vector.broadcast %cst_12 : f32 to vector<128x128xf32>
    %24 = arith.maximumf %22, %23 : vector<128x128xf32>
    %25 = arith.truncf %24 : vector<128x128xf32> to vector<128x128xbf16>
    %c0_13 = arith.constant 0 : index
    %c0_14 = arith.constant 0 : index
    %26 = vector.load %arg6[%c0_13, %c0_14] : memref<128x128xbf16, #tpu.memory_space<vmem>>, vector<128x128xbf16>
    %cst_15 = arith.constant dense<0.000000e+00> : vector<128x128xf32>
    %27 = tpu.matmul %25, %26, %cst_15 {dimension_numbers = #tpu.dot_dimension_numbers<[1], [0], [0], [1], [0, 0, 1, 1], [], []>} : vector<128x128xbf16>, vector<128x128xbf16>, vector<128x128xf32> -> vector<128x128xf32>
    %c0_16 = arith.constant 0 : index
    %c0_17 = arith.constant 0 : index
    %28 = vector.load %arg7[%c0_16, %c0_17] : memref<128x128xf32, #tpu.memory_space<vmem>>, vector<128x128xf32>
    tpu.vector_store %arg7[%c0_16, %c0_17], %27 {strides = array<i32>} : memref<128x128xf32, #tpu.memory_space<vmem>>, vector<128x128xf32>,
    %c0_i32 = arith.constant 0 : i32
    %29 = arith.cmpi eq, %arg0, %c0_i32 : i32
    %30 = arith.extui %29 : i1 to i32
    %c0_i32_18 = arith.constant 0 : i32
    %31 = arith.cmpi ne, %30, %c0_i32_18 : i32
    scf.if %31 {
      %cst_29 = arith.constant 0.000000e+00 : f32
      %43 = vector.broadcast %cst_29 : f32 to vector<1x128xf32>
      %c0_30 = arith.constant 0 : index
      %c0_31 = arith.constant 0 : index
      %44 = vector.load %arg8[%c0_30, %c0_31] : memref<1x128xf32, #tpu.memory_space<vmem>>, vector<1x128xf32>
      tpu.vector_store %arg8[%c0_30, %c0_31], %43 {strides = array<i32>} : memref<1x128xf32, #tpu.memory_space<vmem>>, vector<1x128xf32>,
      %cst_32 = arith.constant 0.000000e+00 : f32
      %45 = vector.broadcast %cst_32 : f32 to vector<1x128xf32>
      %c0_33 = arith.constant 0 : index
      %c0_34 = arith.constant 0 : index
      %46 = vector.load %arg9[%c0_33, %c0_34] : memref<1x128xf32, #tpu.memory_space<vmem>>, vector<1x128xf32>
      tpu.vector_store %arg9[%c0_33, %c0_34], %45 {strides = array<i32>} : memref<1x128xf32, #tpu.memory_space<vmem>>, vector<1x128xf32>,
    } else {
    }
    %c0_19 = arith.constant 0 : index
    %c0_20 = arith.constant 0 : index
    %32 = vector.load %arg8[%c0_19, %c0_20] : memref<1x128xf32, #tpu.memory_space<vmem>>, vector<1x128xf32>
    %cst_21 = arith.constant dense<0.000000e+00> : vector<128xf32>
    %33 = vector.multi_reduction <add>, %27, %cst_21 [0] : vector<128x128xf32> to vector<128xf32>
    %34 = vector.shape_cast %33 : vector<128xf32> to vector<1x128xf32>
    %35 = arith.addf %32, %34 : vector<1x128xf32>
    %c0_22 = arith.constant 0 : index
    %c0_23 = arith.constant 0 : index
    %36 = vector.load %arg8[%c0_22, %c0_23] : memref<1x128xf32, #tpu.memory_space<vmem>>, vector<1x128xf32>
    tpu.vector_store %arg8[%c0_22, %c0_23], %35 {strides = array<i32>} : memref<1x128xf32, #tpu.memory_space<vmem>>, vector<1x128xf32>,
    %c0_24 = arith.constant 0 : index
    %c0_25 = arith.constant 0 : index
    %37 = vector.load %arg9[%c0_24, %c0_25] : memref<1x128xf32, #tpu.memory_space<vmem>>, vector<1x128xf32>
    %38 = arith.mulf %27, %27 : vector<128x128xf32>
    %cst_26 = arith.constant dense<0.000000e+00> : vector<128xf32>
    %39 = vector.multi_reduction <add>, %38, %cst_26 [0] : vector<128x128xf32> to vector<128xf32>
    %40 = vector.shape_cast %39 : vector<128xf32> to vector<1x128xf32>
    %41 = arith.addf %37, %40 : vector<1x128xf32>
    %c0_27 = arith.constant 0 : index
    %c0_28 = arith.constant 0 : index
    %42 = vector.load %arg9[%c0_27, %c0_28] : memref<1x128xf32, #tpu.memory_space<vmem>>, vector<1x128xf32>
    tpu.vector_store %arg9[%c0_27, %c0_28], %41 {strides = array<i32>} : memref<1x128xf32, #tpu.memory_space<vmem>>, vector<1x128xf32>,
    return
  }
  func.func @transform_0(%arg0: i32) -> (i32, i32) {
    %c0_i32 = arith.constant 0 : i32
    %c0_i32_0 = arith.constant 0 : i32
    return %arg0, %c0_i32 : i32, i32
  }
  func.func @transform_1(%arg0: i32) -> (i32, i32) {
    %c0_i32 = arith.constant 0 : i32
    %c0_i32_0 = arith.constant 0 : i32
    %c0_i32_1 = arith.constant 0 : i32
    return %c0_i32, %c0_i32_0 : i32, i32
  }
  func.func @transform_2(%arg0: i32) -> (i32, i32) {
    %c0_i32 = arith.constant 0 : i32
    %c0_i32_0 = arith.constant 0 : i32
    %c0_i32_1 = arith.constant 0 : i32
    return %c0_i32, %c0_i32_0 : i32, i32
  }
  func.func @transform_3(%arg0: i32) -> (i32, i32) {
    %c0_i32 = arith.constant 0 : i32
    %c0_i32_0 = arith.constant 0 : i32
    %c0_i32_1 = arith.constant 0 : i32
    return %c0_i32, %c0_i32_0 : i32, i32
  }
  func.func @transform_4(%arg0: i32) -> (i32, i32) {
    %c0_i32 = arith.constant 0 : i32
    %c0_i32_0 = arith.constant 0 : i32
    %c0_i32_1 = arith.constant 0 : i32
    return %c0_i32, %c0_i32_0 : i32, i32
  }
  func.func @transform_5(%arg0: i32) -> (i32, i32) {
    %c0_i32 = arith.constant 0 : i32
    %c0_i32_0 = arith.constant 0 : i32
    %c0_i32_1 = arith.constant 0 : i32
    return %c0_i32, %c0_i32_0 : i32, i32
  }
  func.func @transform_6(%arg0: i32) -> (i32, i32) {
    %c0_i32 = arith.constant 0 : i32
    %c0_i32_0 = arith.constant 0 : i32
    return %arg0, %c0_i32 : i32, i32
  }
  func.func @transform_7(%arg0: i32) -> (i32, i32) {
    %c0_i32 = arith.constant 0 : i32
    %c0_i32_0 = arith.constant 0 : i32
    %c0_i32_1 = arith.constant 0 : i32
    return %c0_i32, %c0_i32_0 : i32, i32
  }
  func.func @transform_8(%arg0: i32) -> (i32, i32) {
    %c0_i32 = arith.constant 0 : i32
    %c0_i32_0 = arith.constant 0 : i32
    %c0_i32_1 = arith.constant 0 : i32
    return %c0_i32, %c0_i32_0 : i32, i32
  }
}

module attributes {stable_mosaic.version = 11 : i64} {
  func.func @_matmul_stats_kernel(%arg0: i32, %arg1: memref<128x128xbf16, #tpu.memory_space<vmem>>, %arg2: memref<128x128xbf16, #tpu.memory_space<vmem>>, %arg3: memref<128x128xf32, #tpu.memory_space<vmem>>, %arg4: memref<1x128xf32, #tpu.memory_space<vmem>>, %arg5: memref<1x128xf32, #tpu.memory_space<vmem>>) attributes {dimension_semantics = [#tpu.dimension_semantics<arbitrary>], iteration_bounds = array<i64: 1>, scalar_prefetch = 0 : i64, scratch_operands = 0 : i64, tpu.core_type = #tpu.core_type<tc>, window_params = [{transform_indices = @transform_0, window_bounds = array<i64: 128, 128>}, {pipeline_mode = #tpu.pipeline_mode<synchronous>, transform_indices = @transform_1, window_bounds = array<i64: 128, 128>}, {transform_indices = @transform_2, window_bounds = array<i64: 128, 128>}, {pipeline_mode = #tpu.pipeline_mode<synchronous>, transform_indices = @transform_3, window_bounds = array<i64: 1, 128>}, {pipeline_mode = #tpu.pipeline_mode<synchronous>, transform_indices = @transform_4, window_bounds = array<i64: 1, 128>}]} {
    %c0 = arith.constant 0 : index
    %c0_0 = arith.constant 0 : index
    %0 = vector.load %arg1[%c0, %c0_0] : memref<128x128xbf16, #tpu.memory_space<vmem>>, vector<128x128xbf16>
    %c0_1 = arith.constant 0 : index
    %c0_2 = arith.constant 0 : index
    %1 = vector.load %arg2[%c0_1, %c0_2] : memref<128x128xbf16, #tpu.memory_space<vmem>>, vector<128x128xbf16>
    %cst = arith.constant dense<0.000000e+00> : vector<128x128xf32>
    %2 = tpu.matmul %0, %1, %cst {dimension_numbers = #tpu.dot_dimension_numbers<[1], [0], [0], [1], [0, 0, 1, 1], [], []>} : vector<128x128xbf16>, vector<128x128xbf16>, vector<128x128xf32> -> vector<128x128xf32>
    %c0_3 = arith.constant 0 : index
    %c0_4 = arith.constant 0 : index
    %3 = vector.load %arg3[%c0_3, %c0_4] : memref<128x128xf32, #tpu.memory_space<vmem>>, vector<128x128xf32>
    tpu.vector_store %arg3[%c0_3, %c0_4], %2 {strides = array<i32>} : memref<128x128xf32, #tpu.memory_space<vmem>>, vector<128x128xf32>,
    %c0_i32 = arith.constant 0 : i32
    %4 = arith.cmpi eq, %arg0, %c0_i32 : i32
    %5 = arith.extui %4 : i1 to i32
    %c0_i32_5 = arith.constant 0 : i32
    %6 = arith.cmpi ne, %5, %c0_i32_5 : i32
    scf.if %6 {
      %cst_16 = arith.constant 0.000000e+00 : f32
      %18 = vector.broadcast %cst_16 : f32 to vector<1x128xf32>
      %c0_17 = arith.constant 0 : index
      %c0_18 = arith.constant 0 : index
      %19 = vector.load %arg4[%c0_17, %c0_18] : memref<1x128xf32, #tpu.memory_space<vmem>>, vector<1x128xf32>
      tpu.vector_store %arg4[%c0_17, %c0_18], %18 {strides = array<i32>} : memref<1x128xf32, #tpu.memory_space<vmem>>, vector<1x128xf32>,
      %cst_19 = arith.constant 0.000000e+00 : f32
      %20 = vector.broadcast %cst_19 : f32 to vector<1x128xf32>
      %c0_20 = arith.constant 0 : index
      %c0_21 = arith.constant 0 : index
      %21 = vector.load %arg5[%c0_20, %c0_21] : memref<1x128xf32, #tpu.memory_space<vmem>>, vector<1x128xf32>
      tpu.vector_store %arg5[%c0_20, %c0_21], %20 {strides = array<i32>} : memref<1x128xf32, #tpu.memory_space<vmem>>, vector<1x128xf32>,
    } else {
    }
    %c0_6 = arith.constant 0 : index
    %c0_7 = arith.constant 0 : index
    %7 = vector.load %arg4[%c0_6, %c0_7] : memref<1x128xf32, #tpu.memory_space<vmem>>, vector<1x128xf32>
    %cst_8 = arith.constant dense<0.000000e+00> : vector<128xf32>
    %8 = vector.multi_reduction <add>, %2, %cst_8 [0] : vector<128x128xf32> to vector<128xf32>
    %9 = vector.shape_cast %8 : vector<128xf32> to vector<1x128xf32>
    %10 = arith.addf %7, %9 : vector<1x128xf32>
    %c0_9 = arith.constant 0 : index
    %c0_10 = arith.constant 0 : index
    %11 = vector.load %arg4[%c0_9, %c0_10] : memref<1x128xf32, #tpu.memory_space<vmem>>, vector<1x128xf32>
    tpu.vector_store %arg4[%c0_9, %c0_10], %10 {strides = array<i32>} : memref<1x128xf32, #tpu.memory_space<vmem>>, vector<1x128xf32>,
    %c0_11 = arith.constant 0 : index
    %c0_12 = arith.constant 0 : index
    %12 = vector.load %arg5[%c0_11, %c0_12] : memref<1x128xf32, #tpu.memory_space<vmem>>, vector<1x128xf32>
    %13 = arith.mulf %2, %2 : vector<128x128xf32>
    %cst_13 = arith.constant dense<0.000000e+00> : vector<128xf32>
    %14 = vector.multi_reduction <add>, %13, %cst_13 [0] : vector<128x128xf32> to vector<128xf32>
    %15 = vector.shape_cast %14 : vector<128xf32> to vector<1x128xf32>
    %16 = arith.addf %12, %15 : vector<1x128xf32>
    %c0_14 = arith.constant 0 : index
    %c0_15 = arith.constant 0 : index
    %17 = vector.load %arg5[%c0_14, %c0_15] : memref<1x128xf32, #tpu.memory_space<vmem>>, vector<1x128xf32>
    tpu.vector_store %arg5[%c0_14, %c0_15], %16 {strides = array<i32>} : memref<1x128xf32, #tpu.memory_space<vmem>>, vector<1x128xf32>,
    return
  }
  func.func @transform_0(%arg0: i32) -> (i32, i32) {
    %c0_i32 = arith.constant 0 : i32
    %c0_i32_0 = arith.constant 0 : i32
    return %arg0, %c0_i32 : i32, i32
  }
  func.func @transform_1(%arg0: i32) -> (i32, i32) {
    %c0_i32 = arith.constant 0 : i32
    %c0_i32_0 = arith.constant 0 : i32
    %c0_i32_1 = arith.constant 0 : i32
    return %c0_i32, %c0_i32_0 : i32, i32
  }
  func.func @transform_2(%arg0: i32) -> (i32, i32) {
    %c0_i32 = arith.constant 0 : i32
    %c0_i32_0 = arith.constant 0 : i32
    return %arg0, %c0_i32 : i32, i32
  }
  func.func @transform_3(%arg0: i32) -> (i32, i32) {
    %c0_i32 = arith.constant 0 : i32
    %c0_i32_0 = arith.constant 0 : i32
    %c0_i32_1 = arith.constant 0 : i32
    return %c0_i32, %c0_i32_0 : i32, i32
  }
  func.func @transform_4(%arg0: i32) -> (i32, i32) {
    %c0_i32 = arith.constant 0 : i32
    %c0_i32_0 = arith.constant 0 : i32
    %c0_i32_1 = arith.constant 0 : i32
    return %c0_i32, %c0_i32_0 : i32, i32
  }
}

module attributes {stable_mosaic.version = 11 : i64} {
  func.func @_final_proj_kernel(%arg0: i32, %arg1: memref<128x128xf32, #tpu.memory_space<vmem>>, %arg2: memref<1x128xf32, #tpu.memory_space<vmem>>, %arg3: memref<1x128xf32, #tpu.memory_space<vmem>>, %arg4: memref<1x128xf32, #tpu.memory_space<vmem>>, %arg5: memref<1x128xf32, #tpu.memory_space<vmem>>, %arg6: memref<128x128xf32, #tpu.memory_space<vmem>>, %arg7: memref<1x128xf32, #tpu.memory_space<vmem>>, %arg8: memref<1x128xf32, #tpu.memory_space<vmem>>, %arg9: memref<1x128xf32, #tpu.memory_space<vmem>>, %arg10: memref<1x128xf32, #tpu.memory_space<vmem>>, %arg11: memref<128x128xf32, #tpu.memory_space<vmem>>) attributes {dimension_semantics = [#tpu.dimension_semantics<parallel>], iteration_bounds = array<i64: 1>, scalar_prefetch = 0 : i64, scratch_operands = 0 : i64, tpu.core_type = #tpu.core_type<tc>, window_params = [{transform_indices = @transform_0, window_bounds = array<i64: 128, 128>}, {pipeline_mode = #tpu.pipeline_mode<synchronous>, transform_indices = @transform_1, window_bounds = array<i64: 1, 128>}, {pipeline_mode = #tpu.pipeline_mode<synchronous>, transform_indices = @transform_2, window_bounds = array<i64: 1, 128>}, {pipeline_mode = #tpu.pipeline_mode<synchronous>, transform_indices = @transform_3, window_bounds = array<i64: 1, 128>}, {pipeline_mode = #tpu.pipeline_mode<synchronous>, transform_indices = @transform_4, window_bounds = array<i64: 1, 128>}, {transform_indices = @transform_5, window_bounds = array<i64: 128, 128>}, {pipeline_mode = #tpu.pipeline_mode<synchronous>, transform_indices = @transform_6, window_bounds = array<i64: 1, 128>}, {pipeline_mode = #tpu.pipeline_mode<synchronous>, transform_indices = @transform_7, window_bounds = array<i64: 1, 128>}, {pipeline_mode = #tpu.pipeline_mode<synchronous>, transform_indices = @transform_8, window_bounds = array<i64: 1, 128>}, {pipeline_mode = #tpu.pipeline_mode<synchronous>, transform_indices = @transform_9, window_bounds = array<i64: 1, 128>}, {transform_indices = @transform_10, window_bounds = array<i64: 128, 128>}]} {
    %c0 = arith.constant 0 : index
    %c0_0 = arith.constant 0 : index
    %0 = vector.load %arg1[%c0, %c0_0] : memref<128x128xf32, #tpu.memory_space<vmem>>, vector<128x128xf32>
    %c0_1 = arith.constant 0 : index
    %c0_2 = arith.constant 0 : index
    %1 = vector.load %arg2[%c0_1, %c0_2] : memref<1x128xf32, #tpu.memory_space<vmem>>, vector<1x128xf32>
    %c0_3 = arith.constant 0 : index
    %c0_4 = arith.constant 0 : index
    %2 = vector.load %arg3[%c0_3, %c0_4] : memref<1x128xf32, #tpu.memory_space<vmem>>, vector<1x128xf32>
    %c0_5 = arith.constant 0 : index
    %c0_6 = arith.constant 0 : index
    %3 = vector.load %arg4[%c0_5, %c0_6] : memref<1x128xf32, #tpu.memory_space<vmem>>, vector<1x128xf32>
    %c0_7 = arith.constant 0 : index
    %c0_8 = arith.constant 0 : index
    %4 = vector.load %arg5[%c0_7, %c0_8] : memref<1x128xf32, #tpu.memory_space<vmem>>, vector<1x128xf32>
    %cst = arith.constant 7.812500e-03 : f32
    %5 = vector.broadcast %cst : f32 to vector<1x128xf32>
    %6 = arith.mulf %1, %5 : vector<1x128xf32>
    %cst_9 = arith.constant 7.812500e-03 : f32
    %7 = vector.broadcast %cst_9 : f32 to vector<1x128xf32>
    %8 = arith.mulf %2, %7 : vector<1x128xf32>
    %9 = arith.mulf %6, %6 : vector<1x128xf32>
    %10 = arith.subf %8, %9 : vector<1x128xf32>
    %cst_10 = arith.constant 0.000000e+00 : f32
    %11 = vector.broadcast %cst_10 : f32 to vector<1x128xf32>
    %12 = arith.maximumf %10, %11 : vector<1x128xf32>
    %13 = vector.broadcast %6 : vector<1x128xf32> to vector<128x128xf32>
    %14 = arith.subf %0, %13 : vector<128x128xf32>
    %cst_11 = arith.constant 9.99999974E-6 : f32
    %15 = vector.broadcast %cst_11 : f32 to vector<1x128xf32>
    %16 = arith.addf %12, %15 : vector<1x128xf32>
    %17 = math.rsqrt %16 : vector<1x128xf32>
    %18 = arith.mulf %17, %3 : vector<1x128xf32>
    %19 = vector.broadcast %18 : vector<1x128xf32> to vector<128x128xf32>
    %20 = arith.mulf %14, %19 : vector<128x128xf32>
    %21 = vector.broadcast %4 : vector<1x128xf32> to vector<128x128xf32>
    %22 = arith.addf %20, %21 : vector<128x128xf32>
    %c0_12 = arith.constant 0 : index
    %c0_13 = arith.constant 0 : index
    %23 = vector.load %arg6[%c0_12, %c0_13] : memref<128x128xf32, #tpu.memory_space<vmem>>, vector<128x128xf32>
    %c0_14 = arith.constant 0 : index
    %c0_15 = arith.constant 0 : index
    %24 = vector.load %arg7[%c0_14, %c0_15] : memref<1x128xf32, #tpu.memory_space<vmem>>, vector<1x128xf32>
    %c0_16 = arith.constant 0 : index
    %c0_17 = arith.constant 0 : index
    %25 = vector.load %arg8[%c0_16, %c0_17] : memref<1x128xf32, #tpu.memory_space<vmem>>, vector<1x128xf32>
    %c0_18 = arith.constant 0 : index
    %c0_19 = arith.constant 0 : index
    %26 = vector.load %arg9[%c0_18, %c0_19] : memref<1x128xf32, #tpu.memory_space<vmem>>, vector<1x128xf32>
    %c0_20 = arith.constant 0 : index
    %c0_21 = arith.constant 0 : index
    %27 = vector.load %arg10[%c0_20, %c0_21] : memref<1x128xf32, #tpu.memory_space<vmem>>, vector<1x128xf32>
    %cst_22 = arith.constant 7.812500e-03 : f32
    %28 = vector.broadcast %cst_22 : f32 to vector<1x128xf32>
    %29 = arith.mulf %24, %28 : vector<1x128xf32>
    %cst_23 = arith.constant 7.812500e-03 : f32
    %30 = vector.broadcast %cst_23 : f32 to vector<1x128xf32>
    %31 = arith.mulf %25, %30 : vector<1x128xf32>
    %32 = arith.mulf %29, %29 : vector<1x128xf32>
    %33 = arith.subf %31, %32 : vector<1x128xf32>
    %cst_24 = arith.constant 0.000000e+00 : f32
    %34 = vector.broadcast %cst_24 : f32 to vector<1x128xf32>
    %35 = arith.maximumf %33, %34 : vector<1x128xf32>
    %36 = vector.broadcast %29 : vector<1x128xf32> to vector<128x128xf32>
    %37 = arith.subf %23, %36 : vector<128x128xf32>
    %cst_25 = arith.constant 9.99999974E-6 : f32
    %38 = vector.broadcast %cst_25 : f32 to vector<1x128xf32>
    %39 = arith.addf %35, %38 : vector<1x128xf32>
    %40 = math.rsqrt %39 : vector<1x128xf32>
    %41 = arith.mulf %40, %26 : vector<1x128xf32>
    %42 = vector.broadcast %41 : vector<1x128xf32> to vector<128x128xf32>
    %43 = arith.mulf %37, %42 : vector<128x128xf32>
    %44 = vector.broadcast %27 : vector<1x128xf32> to vector<128x128xf32>
    %45 = arith.addf %43, %44 : vector<128x128xf32>
    %46 = arith.addf %22, %45 : vector<128x128xf32>
    %cst_26 = arith.constant 0.000000e+00 : f32
    %47 = vector.broadcast %cst_26 : f32 to vector<128x128xf32>
    %48 = arith.maximumf %46, %47 : vector<128x128xf32>
    %c0_27 = arith.constant 0 : index
    %c0_28 = arith.constant 0 : index
    %49 = vector.load %arg11[%c0_27, %c0_28] : memref<128x128xf32, #tpu.memory_space<vmem>>, vector<128x128xf32>
    tpu.vector_store %arg11[%c0_27, %c0_28], %48 {strides = array<i32>} : memref<128x128xf32, #tpu.memory_space<vmem>>, vector<128x128xf32>,
    return
  }
  func.func @transform_0(%arg0: i32) -> (i32, i32) {
    %c0_i32 = arith.constant 0 : i32
    %c0_i32_0 = arith.constant 0 : i32
    return %arg0, %c0_i32 : i32, i32
  }
  func.func @transform_1(%arg0: i32) -> (i32, i32) {
    %c0_i32 = arith.constant 0 : i32
    %c0_i32_0 = arith.constant 0 : i32
    %c0_i32_1 = arith.constant 0 : i32
    return %c0_i32, %c0_i32_0 : i32, i32
  }
  func.func @transform_2(%arg0: i32) -> (i32, i32) {
    %c0_i32 = arith.constant 0 : i32
    %c0_i32_0 = arith.constant 0 : i32
    %c0_i32_1 = arith.constant 0 : i32
    return %c0_i32, %c0_i32_0 : i32, i32
  }
  func.func @transform_3(%arg0: i32) -> (i32, i32) {
    %c0_i32 = arith.constant 0 : i32
    %c0_i32_0 = arith.constant 0 : i32
    %c0_i32_1 = arith.constant 0 : i32
    return %c0_i32, %c0_i32_0 : i32, i32
  }
  func.func @transform_4(%arg0: i32) -> (i32, i32) {
    %c0_i32 = arith.constant 0 : i32
    %c0_i32_0 = arith.constant 0 : i32
    %c0_i32_1 = arith.constant 0 : i32
    return %c0_i32, %c0_i32_0 : i32, i32
  }
  func.func @transform_5(%arg0: i32) -> (i32, i32) {
    %c0_i32 = arith.constant 0 : i32
    %c0_i32_0 = arith.constant 0 : i32
    return %arg0, %c0_i32 : i32, i32
  }
  func.func @transform_6(%arg0: i32) -> (i32, i32) {
    %c0_i32 = arith.constant 0 : i32
    %c0_i32_0 = arith.constant 0 : i32
    %c0_i32_1 = arith.constant 0 : i32
    return %c0_i32, %c0_i32_0 : i32, i32
  }
  func.func @transform_7(%arg0: i32) -> (i32, i32) {
    %c0_i32 = arith.constant 0 : i32
    %c0_i32_0 = arith.constant 0 : i32
    %c0_i32_1 = arith.constant 0 : i32
    return %c0_i32, %c0_i32_0 : i32, i32
  }
  func.func @transform_8(%arg0: i32) -> (i32, i32) {
    %c0_i32 = arith.constant 0 : i32
    %c0_i32_0 = arith.constant 0 : i32
    %c0_i32_1 = arith.constant 0 : i32
    return %c0_i32, %c0_i32_0 : i32, i32
  }
  func.func @transform_9(%arg0: i32) -> (i32, i32) {
    %c0_i32 = arith.constant 0 : i32
    %c0_i32_0 = arith.constant 0 : i32
    %c0_i32_1 = arith.constant 0 : i32
    return %c0_i32, %c0_i32_0 : i32, i32
  }
  func.func @transform_10(%arg0: i32) -> (i32, i32) {
    %c0_i32 = arith.constant 0 : i32
    %c0_i32_0 = arith.constant 0 : i32
    return %arg0, %c0_i32 : i32, i32
  }
}

</mosaic_0001>

<llo_original>
// kernel: bottleneck_forward.7
$region0: #{bottleneck_forward.7}
  #allocation0 [shape = 'u32[]', space=smem, size = 0x4, offset = 0x4, fixed_abs, tag = 'smem constant byte address 0x4 - core index']
  #allocation1 [shape = 'u32[72,128]{1,0:T(1,128)}', space=vmem, size = 0x9000, scoped, tag = 'internal scratch']
  %s0 = inlined_call_operand.vmem [shape: f32[512,128], index: 0, kind: input, shape index: {}]
  %s1 = inlined_call_operand.vmem [shape: f32[1,128], index: 1, kind: input, shape index: {}]
  %s2 = inlined_call_operand.vmem [shape: f32[1,128], index: 2, kind: input, shape index: {}]
  %s3 = inlined_call_operand.vmem [shape: f32[1,128], index: 3, kind: input, shape index: {}]
  %s4 = inlined_call_operand.vmem [shape: f32[1,128], index: 4, kind: input, shape index: {}]
  %s5 = inlined_call_operand.vmem [shape: bf16[512,128], index: 5, kind: output, shape index: {}]
  %s6 = sld [smem:[#allocation0]]
  $region30: #{bottleneck_forward.7} parent=0
    _
  %s8 = ssub.s32 1, %s6
  %s9 = scalar_select 0, %s8, %s6
  // Predicated region
  $region2: #{bottleneck_forward.7} parent=0 // pred_check
    _
  $region3: #{bottleneck_forward.7} parent=0 // pred_check_branch
    %11 = sbr.rel (0) target = $region5
  $region4: #{bottleneck_forward.7} parent=0 // pred_region
    _
  $region5: #{bottleneck_forward.7} parent=0 // pred_fallthru
    _
  // Predicated region
  $region6: #{bottleneck_forward.7} parent=0 // pred_check
    _
  $region7: #{bottleneck_forward.7} parent=0 // pred_check_branch
    %13 = sbr.rel (0) target = $region9
  $region8: #{bottleneck_forward.7} parent=0 // pred_region
    _
  $region9: #{bottleneck_forward.7} parent=0 // pred_fallthru
    _
  // Predicated region
  $region10: #{bottleneck_forward.7} parent=0 // pred_check
    _
  $region11: #{bottleneck_forward.7} parent=0 // pred_check_branch
    %15 = sbr.rel (0) target = $region13
  $region12: #{bottleneck_forward.7} parent=0 // pred_region
    _
  $region13: #{bottleneck_forward.7} parent=0 // pred_fallthru
    _
  // Predicated region
  $region14: #{bottleneck_forward.7} parent=0 // pred_check
    _
  $region15: #{bottleneck_forward.7} parent=0 // pred_check_branch
    %17 = sbr.rel (0) target = $region17
  $region16: #{bottleneck_forward.7} parent=0 // pred_region
    _
  $region17: #{bottleneck_forward.7} parent=0 // pred_fallthru
    _
  // Predicated region
  $region18: #{bottleneck_forward.7} parent=0 // pred_check
    _
  $region19: #{bottleneck_forward.7} parent=0 // pred_check_branch
    %19 = sbr.rel (0) target = $region21
  $region20: #{bottleneck_forward.7} parent=0 // pred_region
    _
  $region21: #{bottleneck_forward.7} parent=0 // pred_fallthru
    _
  %v20 = vld [vmem:[%s0] sm:$0xff]
  %v21 = vld [vmem:[%s0 + $0x8] sm:$0xff]
  %v22 = vld [vmem:[%s0 + $0x10] sm:$0xff]
  %v23 = vld [vmem:[%s0 + $0x18] sm:$0xff]
  %v24 = vld [vmem:[%s0 + $0x20] sm:$0xff]
  %v25 = vld [vmem:[%s0 + $0x28] sm:$0xff]
  %v26 = vld [vmem:[%s0 + $0x30] sm:$0xff]
  %v27 = vld [vmem:[%s0 + $0x38] sm:$0xff]
  %v28 = vld [vmem:[%s0 + $0x40] sm:$0xff]
  %v29 = vld [vmem:[%s0 + $0x48] sm:$0xff]
  %v30 = vld [vmem:[%s0 + $0x50] sm:$0xff]
  %v31 = vld [vmem:[%s0 + $0x58] sm:$0xff]
  %v32 = vld [vmem:[%s0 + $0x60] sm:$0xff]
  %v33 = vld [vmem:[%s0 + $0x68] sm:$0xff]
  %v34 = vld [vmem:[%s0 + $0x70] sm:$0xff]
  %v35 = vld [vmem:[%s0 + $0x78] sm:$0xff]
  %v36 = vld [vmem:[%s0 + $0x80] sm:$0xff]
  %v37 = vld [vmem:[%s0 + $0x88] sm:$0xff]
  %v38 = vld [vmem:[%s0 + $0x90] sm:$0xff]
  %v39 = vld [vmem:[%s0 + $0x98] sm:$0xff]
  %v40 = vld [vmem:[%s0 + $0xa0] sm:$0xff]
  %v41 = vld [vmem:[%s0 + $0xa8] sm:$0xff]
  %v42 = vld [vmem:[%s0 + $0xb0] sm:$0xff]
  %v43 = vld [vmem:[%s0 + $0xb8] sm:$0xff]
  %v44 = vld [vmem:[%s0 + $0xc0] sm:$0xff]
  %v45 = vld [vmem:[%s0 + $0xc8] sm:$0xff]
  %v46 = vld [vmem:[%s0 + $0xd0] sm:$0xff]
  %v47 = vld [vmem:[%s0 + $0xd8] sm:$0xff]
  %v48 = vld [vmem:[%s0 + $0xe0] sm:$0xff]
  %v49 = vld [vmem:[%s0 + $0xe8] sm:$0xff]
  %v50 = vld [vmem:[%s0 + $0xf0] sm:$0xff]
  %v51 = vld [vmem:[%s0 + $0xf8] sm:$0xff]
  %v52 = vld [vmem:[%s0 + $0x100] sm:$0xff]
  %v53 = vld [vmem:[%s0 + $0x108] sm:$0xff]
  %v54 = vld [vmem:[%s0 + $0x110] sm:$0xff]
  %v55 = vld [vmem:[%s0 + $0x118] sm:$0xff]
  %v56 = vld [vmem:[%s0 + $0x120] sm:$0xff]
  %v57 = vld [vmem:[%s0 + $0x128] sm:$0xff]
  %v58 = vld [vmem:[%s0 + $0x130] sm:$0xff]
  %v59 = vld [vmem:[%s0 + $0x138] sm:$0xff]
  %v60 = vld [vmem:[%s0 + $0x140] sm:$0xff]
  %v61 = vld [vmem:[%s0 + $0x148] sm:$0xff]
  %v62 = vld [vmem:[%s0 + $0x150] sm:$0xff]
  %v63 = vld [vmem:[%s0 + $0x158] sm:$0xff]
  %v64 = vld [vmem:[%s0 + $0x160] sm:$0xff]
  %v65 = vld [vmem:[%s0 + $0x168] sm:$0xff]
  %v66 = vld [vmem:[%s0 + $0x170] sm:$0xff]
  %v67 = vld [vmem:[%s0 + $0x178] sm:$0xff]
  %v68 = vld [vmem:[%s0 + $0x180] sm:$0xff]
  %v69 = vld [vmem:[%s0 + $0x188] sm:$0xff]
  %v70 = vld [vmem:[%s0 + $0x190] sm:$0xff]
  %v71 = vld [vmem:[%s0 + $0x198] sm:$0xff]
  %v72 = vld [vmem:[%s0 + $0x1a0] sm:$0xff]
  %v73 = vld [vmem:[%s0 + $0x1a8] sm:$0xff]
  %v74 = vld [vmem:[%s0 + $0x1b0] sm:$0xff]
  %v75 = vld [vmem:[%s0 + $0x1b8] sm:$0xff]
  %v76 = vld [vmem:[%s0 + $0x1c0] sm:$0xff]
  %v77 = vld [vmem:[%s0 + $0x1c8] sm:$0xff]
  %v78 = vld [vmem:[%s0 + $0x1d0] sm:$0xff]
  %v79 = vld [vmem:[%s0 + $0x1d8] sm:$0xff]
  %v80 = vld [vmem:[%s0 + $0x1e0] sm:$0xff]
  %v81 = vld [vmem:[%s0 + $0x1e8] sm:$0xff]
  %v82 = vld [vmem:[%s0 + $0x1f0] sm:$0xff]
  %v83 = vld [vmem:[%s0 + $0x1f8] sm:$0xff]
  %v84 = vld [vmem:[%s1] sm:$0x1]
  %v85 = vld [vmem:[%s2] sm:$0x1]
  %v86 = vld [vmem:[%s3] sm:$0x1]
  %v87 = vld [vmem:[%s4] sm:$0x1]
  %v88 = vmul.f32 %v84, 0.001953125
  %v89 = vmul.f32 %v85, 0.001953125
  %v90 = vmul.f32 %v88, %v88
  %v91 = vsub.f32 %v89, %v90
  %v92 = vmax.f32 %v91, 0.0
  %v94 = vperm.slane %v88, 0
  %v96 = vsub.f32 %v20, %v94
  %v97 = vsub.f32 %v21, %v94
  %v98 = vsub.f32 %v22, %v94
  %v99 = vsub.f32 %v23, %v94
  %v100 = vsub.f32 %v24, %v94
  %v101 = vsub.f32 %v25, %v94
  %v102 = vsub.f32 %v26, %v94
  %v103 = vsub.f32 %v27, %v94
  %v104 = vsub.f32 %v28, %v94
  %v105 = vsub.f32 %v29, %v94
  %v106 = vsub.f32 %v30, %v94
  %v107 = vsub.f32 %v31, %v94
  %v108 = vsub.f32 %v32, %v94
  %v109 = vsub.f32 %v33, %v94
  %v110 = vsub.f32 %v34, %v94
  %v111 = vsub.f32 %v35, %v94
  %v112 = vsub.f32 %v36, %v94
  %v113 = vsub.f32 %v37, %v94
  %v114 = vsub.f32 %v38, %v94
  %v115 = vsub.f32 %v39, %v94
  %v116 = vsub.f32 %v40, %v94
  %v117 = vsub.f32 %v41, %v94
  %v118 = vsub.f32 %v42, %v94
  %v119 = vsub.f32 %v43, %v94
  %v120 = vsub.f32 %v44, %v94
  %v121 = vsub.f32 %v45, %v94
  %v122 = vsub.f32 %v46, %v94
  %v123 = vsub.f32 %v47, %v94
  %v124 = vsub.f32 %v48, %v94
  %v125 = vsub.f32 %v49, %v94
  %v126 = vsub.f32 %v50, %v94
  %v127 = vsub.f32 %v51, %v94
  %v128 = vsub.f32 %v52, %v94
  %v129 = vsub.f32 %v53, %v94
  %v130 = vsub.f32 %v54, %v94
  %v131 = vsub.f32 %v55, %v94
  %v132 = vsub.f32 %v56, %v94
  %v133 = vsub.f32 %v57, %v94
  %v134 = vsub.f32 %v58, %v94
  %v135 = vsub.f32 %v59, %v94
  %v136 = vsub.f32 %v60, %v94
  %v137 = vsub.f32 %v61, %v94
  %v138 = vsub.f32 %v62, %v94
  %v139 = vsub.f32 %v63, %v94
  %v140 = vsub.f32 %v64, %v94
  %v141 = vsub.f32 %v65, %v94
  %v142 = vsub.f32 %v66, %v94
  %v143 = vsub.f32 %v67, %v94
  %v144 = vsub.f32 %v68, %v94
  %v145 = vsub.f32 %v69, %v94
  %v146 = vsub.f32 %v70, %v94
  %v147 = vsub.f32 %v71, %v94
  %v148 = vsub.f32 %v72, %v94
  %v149 = vsub.f32 %v73, %v94
  %v150 = vsub.f32 %v74, %v94
  %v151 = vsub.f32 %v75, %v94
  %v152 = vsub.f32 %v76, %v94
  %v153 = vsub.f32 %v77, %v94
  %v154 = vsub.f32 %v78, %v94
  %v155 = vsub.f32 %v79, %v94
  %v156 = vsub.f32 %v80, %v94
  %v157 = vsub.f32 %v81, %v94
  %v158 = vsub.f32 %v82, %v94
  %v159 = vsub.f32 %v83, %v94
  %v160 = vadd.f32 %v92, 1e-05
  %v161 = vrsqrt.pop %v160
  %v162 = vmul.f32 %v161, %v160
  %v163 = vmul.f32 %v162, %v161
  %v164 = vmul.f32 0.5, %v163
  %v165 = vsub.f32 1.5, %v164
  %v166 = vmul.f32 %v161, %v165
  %vm167 = vweird.f32 %v160
  %vm168 = vweird.f32 %v161
  %vm169 = vmor %vm167, %vm168
  %v170 = vsel %vm169, %v161, %v166
  %v171 = vmul.f32 %v170, %v86
  %v173 = vperm.slane %v171, 0
  %v175 = vmul.f32 %v96, %v173
  %v176 = vmul.f32 %v97, %v173
  %v177 = vmul.f32 %v98, %v173
  %v178 = vmul.f32 %v99, %v173
  %v179 = vmul.f32 %v100, %v173
  %v180 = vmul.f32 %v101, %v173
  %v181 = vmul.f32 %v102, %v173
  %v182 = vmul.f32 %v103, %v173
  %v183 = vmul.f32 %v104, %v173
  %v184 = vmul.f32 %v105, %v173
  %v185 = vmul.f32 %v106, %v173
  %v186 = vmul.f32 %v107, %v173
  %v187 = vmul.f32 %v108, %v173
  %v188 = vmul.f32 %v109, %v173
  %v189 = vmul.f32 %v110, %v173
  %v190 = vmul.f32 %v111, %v173
  %v191 = vmul.f32 %v112, %v173
  %v192 = vmul.f32 %v113, %v173
  %v193 = vmul.f32 %v114, %v173
  %v194 = vmul.f32 %v115, %v173
  %v195 = vmul.f32 %v116, %v173
  %v196 = vmul.f32 %v117, %v173
  %v197 = vmul.f32 %v118, %v173
  %v198 = vmul.f32 %v119, %v173
  %v199 = vmul.f32 %v120, %v173
  %v200 = vmul.f32 %v121, %v173
  %v201 = vmul.f32 %v122, %v173
  %v202 = vmul.f32 %v123, %v173
  %v203 = vmul.f32 %v124, %v173
  %v204 = vmul.f32 %v125, %v173
  %v205 = vmul.f32 %v126, %v173
  %v206 = vmul.f32 %v127, %v173
  %v207 = vmul.f32 %v128, %v173
  %v208 = vmul.f32 %v129, %v173
  %v209 = vmul.f32 %v130, %v173
  %v210 = vmul.f32 %v131, %v173
  %v211 = vmul.f32 %v132, %v173
  %v212 = vmul.f32 %v133, %v173
  %v213 = vmul.f32 %v134, %v173
  %v214 = vmul.f32 %v135, %v173
  %v215 = vmul.f32 %v136, %v173
  %v216 = vmul.f32 %v137, %v173
  %v217 = vmul.f32 %v138, %v173
  %v218 = vmul.f32 %v139, %v173
  %v219 = vmul.f32 %v140, %v173
  %v220 = vmul.f32 %v141, %v173
  %v221 = vmul.f32 %v142, %v173
  %v222 = vmul.f32 %v143, %v173
  %v223 = vmul.f32 %v144, %v173
  %v224 = vmul.f32 %v145, %v173
  %v225 = vmul.f32 %v146, %v173
  %v226 = vmul.f32 %v147, %v173
  %v227 = vmul.f32 %v148, %v173
  %v228 = vmul.f32 %v149, %v173
  %v229 = vmul.f32 %v150, %v173
  %v230 = vmul.f32 %v151, %v173
  %v231 = vmul.f32 %v152, %v173
  %v232 = vmul.f32 %v153, %v173
  %v233 = vmul.f32 %v154, %v173
  %v234 = vmul.f32 %v155, %v173
  %v235 = vmul.f32 %v156, %v173
  %v236 = vmul.f32 %v157, %v173
  %v237 = vmul.f32 %v158, %v173
  %v238 = vmul.f32 %v159, %v173
  %v240 = vperm.slane %v87, 0
  %v242 = vadd.f32 %v175, %v240
  %v243 = vadd.f32 %v176, %v240
  %v244 = vadd.f32 %v177, %v240
  %v245 = vadd.f32 %v178, %v240
  %v246 = vadd.f32 %v179, %v240
  %v247 = vadd.f32 %v180, %v240
  %v248 = vadd.f32 %v181, %v240
  %v249 = vadd.f32 %v182, %v240
  %v250 = vadd.f32 %v183, %v240
  %v251 = vadd.f32 %v184, %v240
  %v252 = vadd.f32 %v185, %v240
  %v253 = vadd.f32 %v186, %v240
  %v254 = vadd.f32 %v187, %v240
  %v255 = vadd.f32 %v188, %v240
  %v256 = vadd.f32 %v189, %v240
  %v257 = vadd.f32 %v190, %v240
  %v258 = vadd.f32 %v191, %v240
  %v259 = vadd.f32 %v192, %v240
  %v260 = vadd.f32 %v193, %v240
  %v261 = vadd.f32 %v194, %v240
  %v262 = vadd.f32 %v195, %v240
  %v263 = vadd.f32 %v196, %v240
  %v264 = vadd.f32 %v197, %v240
  %v265 = vadd.f32 %v198, %v240
  %v266 = vadd.f32 %v199, %v240
  %v267 = vadd.f32 %v200, %v240
  %v268 = vadd.f32 %v201, %v240
  %v269 = vadd.f32 %v202, %v240
  %v270 = vadd.f32 %v203, %v240
  %v271 = vadd.f32 %v204, %v240
  %v272 = vadd.f32 %v205, %v240
  %v273 = vadd.f32 %v206, %v240
  %v274 = vadd.f32 %v207, %v240
  %v275 = vadd.f32 %v208, %v240
  %v276 = vadd.f32 %v209, %v240
  %v277 = vadd.f32 %v210, %v240
  %v278 = vadd.f32 %v211, %v240
  %v279 = vadd.f32 %v212, %v240
  %v280 = vadd.f32 %v213, %v240
  %v281 = vadd.f32 %v214, %v240
  %v282 = vadd.f32 %v215, %v240
  %v283 = vadd.f32 %v216, %v240
  %v284 = vadd.f32 %v217, %v240
  %v285 = vadd.f32 %v218, %v240
  %v286 = vadd.f32 %v219, %v240
  %v287 = vadd.f32 %v220, %v240
  %v288 = vadd.f32 %v221, %v240
  %v289 = vadd.f32 %v222, %v240
  %v290 = vadd.f32 %v223, %v240
  %v291 = vadd.f32 %v224, %v240
  %v292 = vadd.f32 %v225, %v240
  %v293 = vadd.f32 %v226, %v240
  %v294 = vadd.f32 %v227, %v240
  %v295 = vadd.f32 %v228, %v240
  %v296 = vadd.f32 %v229, %v240
  %v297 = vadd.f32 %v230, %v240
  %v298 = vadd.f32 %v231, %v240
  %v299 = vadd.f32 %v232, %v240
  %v300 = vadd.f32 %v233, %v240
  %v301 = vadd.f32 %v234, %v240
  %v302 = vadd.f32 %v235, %v240
  %v303 = vadd.f32 %v236, %v240
  %v304 = vadd.f32 %v237, %v240
  %v305 = vadd.f32 %v238, %v240
  %v306 = vmax.f32 %v242, 0.0
  %v307 = vmax.f32 %v243, 0.0
  %v308 = vmax.f32 %v244, 0.0
  %v309 = vmax.f32 %v245, 0.0
  %v310 = vmax.f32 %v246, 0.0
  %v311 = vmax.f32 %v247, 0.0
  %v312 = vmax.f32 %v248, 0.0
  %v313 = vmax.f32 %v249, 0.0
  %v314 = vmax.f32 %v250, 0.0
  %v315 = vmax.f32 %v251, 0.0
  %v316 = vmax.f32 %v252, 0.0
  %v317 = vmax.f32 %v253, 0.0
  %v318 = vmax.f32 %v254, 0.0
  %v319 = vmax.f32 %v255, 0.0
  %v320 = vmax.f32 %v256, 0.0
  %v321 = vmax.f32 %v257, 0.0
  %v322 = vmax.f32 %v258, 0.0
  %v323 = vmax.f32 %v259, 0.0
  %v324 = vmax.f32 %v260, 0.0
  %v325 = vmax.f32 %v261, 0.0
  %v326 = vmax.f32 %v262, 0.0
  %v327 = vmax.f32 %v263, 0.0
  %v328 = vmax.f32 %v264, 0.0
  %v329 = vmax.f32 %v265, 0.0
  %v330 = vmax.f32 %v266, 0.0
  %v331 = vmax.f32 %v267, 0.0
  %v332 = vmax.f32 %v268, 0.0
  %v333 = vmax.f32 %v269, 0.0
  %v334 = vmax.f32 %v270, 0.0
  %v335 = vmax.f32 %v271, 0.0
  %v336 = vmax.f32 %v272, 0.0
  %v337 = vmax.f32 %v273, 0.0
  %v338 = vmax.f32 %v274, 0.0
  %v339 = vmax.f32 %v275, 0.0
  %v340 = vmax.f32 %v276, 0.0
  %v341 = vmax.f32 %v277, 0.0
  %v342 = vmax.f32 %v278, 0.0
  %v343 = vmax.f32 %v279, 0.0
  %v344 = vmax.f32 %v280, 0.0
  %v345 = vmax.f32 %v281, 0.0
  %v346 = vmax.f32 %v282, 0.0
  %v347 = vmax.f32 %v283, 0.0
  %v348 = vmax.f32 %v284, 0.0
  %v349 = vmax.f32 %v285, 0.0
  %v350 = vmax.f32 %v286, 0.0
  %v351 = vmax.f32 %v287, 0.0
  %v352 = vmax.f32 %v288, 0.0
  %v353 = vmax.f32 %v289, 0.0
  %v354 = vmax.f32 %v290, 0.0
  %v355 = vmax.f32 %v291, 0.0
  %v356 = vmax.f32 %v292, 0.0
  %v357 = vmax.f32 %v293, 0.0
  %v358 = vmax.f32 %v294, 0.0
  %v359 = vmax.f32 %v295, 0.0
  %v360 = vmax.f32 %v296, 0.0
  %v361 = vmax.f32 %v297, 0.0
  %v362 = vmax.f32 %v298, 0.0
  %v363 = vmax.f32 %v299, 0.0
  %v364 = vmax.f32 %v300, 0.0
  %v365 = vmax.f32 %v301, 0.0
  %v366 = vmax.f32 %v302, 0.0
  %v367 = vmax.f32 %v303, 0.0
  %v368 = vmax.f32 %v304, 0.0
  %v369 = vmax.f32 %v305, 0.0
  %v370 = vpack.c.bf16 %v306, %v306
  %v371 = vpack.c.bf16 %v307, %v307
  %v372 = vpack.c.bf16 %v308, %v308
  %v373 = vpack.c.bf16 %v309, %v309
  %v374 = vpack.c.bf16 %v310, %v310
  %v375 = vpack.c.bf16 %v311, %v311
  %v376 = vpack.c.bf16 %v312, %v312
  %v377 = vpack.c.bf16 %v313, %v313
  %v378 = vpack.c.bf16 %v314, %v314
  %v379 = vpack.c.bf16 %v315, %v315
  %v380 = vpack.c.bf16 %v316, %v316
  %v381 = vpack.c.bf16 %v317, %v317
  %v382 = vpack.c.bf16 %v318, %v318
  %v383 = vpack.c.bf16 %v319, %v319
  %v384 = vpack.c.bf16 %v320, %v320
  %v385 = vpack.c.bf16 %v321, %v321
  %v386 = vpack.c.bf16 %v322, %v322
  %v387 = vpack.c.bf16 %v323, %v323
  %v388 = vpack.c.bf16 %v324, %v324
  %v389 = vpack.c.bf16 %v325, %v325
  %v390 = vpack.c.bf16 %v326, %v326
  %v391 = vpack.c.bf16 %v327, %v327
  %v392 = vpack.c.bf16 %v328, %v328
  %v393 = vpack.c.bf16 %v329, %v329
  %v394 = vpack.c.bf16 %v330, %v330
  %v395 = vpack.c.bf16 %v331, %v331
  %v396 = vpack.c.bf16 %v332, %v332
  %v397 = vpack.c.bf16 %v333, %v333
  %v398 = vpack.c.bf16 %v334, %v334
  %v399 = vpack.c.bf16 %v335, %v335
  %v400 = vpack.c.bf16 %v336, %v336
  %v401 = vpack.c.bf16 %v337, %v337
  %v402 = vpack.c.bf16 %v338, %v338
  %v403 = vpack.c.bf16 %v339, %v339
  %v404 = vpack.c.bf16 %v340, %v340
  %v405 = vpack.c.bf16 %v341, %v341
  %v406 = vpack.c.bf16 %v342, %v342
  %v407 = vpack.c.bf16 %v343, %v343
  %v408 = vpack.c.bf16 %v344, %v344
  %v409 = vpack.c.bf16 %v345, %v345
  %v410 = vpack.c.bf16 %v346, %v346
  %v411 = vpack.c.bf16 %v347, %v347
  %v412 = vpack.c.bf16 %v348, %v348
  %v413 = vpack.c.bf16 %v349, %v349
  %v414 = vpack.c.bf16 %v350, %v350
  %v415 = vpack.c.bf16 %v351, %v351
  %v416 = vpack.c.bf16 %v352, %v352
  %v417 = vpack.c.bf16 %v353, %v353
  %v418 = vpack.c.bf16 %v354, %v354
  %v419 = vpack.c.bf16 %v355, %v355
  %v420 = vpack.c.bf16 %v356, %v356
  %v421 = vpack.c.bf16 %v357, %v357
  %v422 = vpack.c.bf16 %v358, %v358
  %v423 = vpack.c.bf16 %v359, %v359
  %v424 = vpack.c.bf16 %v360, %v360
  %v425 = vpack.c.bf16 %v361, %v361
  %v426 = vpack.c.bf16 %v362, %v362
  %v427 = vpack.c.bf16 %v363, %v363
  %v428 = vpack.c.bf16 %v364, %v364
  %v429 = vpack.c.bf16 %v365, %v365
  %v430 = vpack.c.bf16 %v366, %v366
  %v431 = vpack.c.bf16 %v367, %v367
  %v432 = vpack.c.bf16 %v368, %v368
  %v433 = vpack.c.bf16 %v369, %v369
  %434 = vst [vmem:[%s5] sm:$0xf] %v370
  %435 = vst [vmem:[%s5 + $0x4] sm:$0xf] %v371
  %436 = vst [vmem:[%s5 + $0x8] sm:$0xf] %v372
  %437 = vst [vmem:[%s5 + $0xc] sm:$0xf] %v373
  %438 = vst [vmem:[%s5 + $0x10] sm:$0xf] %v374
  %439 = vst [vmem:[%s5 + $0x14] sm:$0xf] %v375
  %440 = vst [vmem:[%s5 + $0x18] sm:$0xf] %v376
  %441 = vst [vmem:[%s5 + $0x1c] sm:$0xf] %v377
  %442 = vst [vmem:[%s5 + $0x20] sm:$0xf] %v378
  %443 = vst [vmem:[%s5 + $0x24] sm:$0xf] %v379
  %444 = vst [vmem:[%s5 + $0x28] sm:$0xf] %v380
  %445 = vst [vmem:[%s5 + $0x2c] sm:$0xf] %v381
  %446 = vst [vmem:[%s5 + $0x30] sm:$0xf] %v382
  %447 = vst [vmem:[%s5 + $0x34] sm:$0xf] %v383
  %448 = vst [vmem:[%s5 + $0x38] sm:$0xf] %v384
  %449 = vst [vmem:[%s5 + $0x3c] sm:$0xf] %v385
  %450 = vst [vmem:[%s5 + $0x40] sm:$0xf] %v386
  %451 = vst [vmem:[%s5 + $0x44] sm:$0xf] %v387
  %452 = vst [vmem:[%s5 + $0x48] sm:$0xf] %v388
  %453 = vst [vmem:[%s5 + $0x4c] sm:$0xf] %v389
  %454 = vst [vmem:[%s5 + $0x50] sm:$0xf] %v390
  %455 = vst [vmem:[%s5 + $0x54] sm:$0xf] %v391
  %456 = vst [vmem:[%s5 + $0x58] sm:$0xf] %v392
  %457 = vst [vmem:[%s5 + $0x5c] sm:$0xf] %v393
  %458 = vst [vmem:[%s5 + $0x60] sm:$0xf] %v394
  %459 = vst [vmem:[%s5 + $0x64] sm:$0xf] %v395
  %460 = vst [vmem:[%s5 + $0x68] sm:$0xf] %v396
  %461 = vst [vmem:[%s5 + $0x6c] sm:$0xf] %v397
  %462 = vst [vmem:[%s5 + $0x70] sm:$0xf] %v398
  %463 = vst [vmem:[%s5 + $0x74] sm:$0xf] %v399
  %464 = vst [vmem:[%s5 + $0x78] sm:$0xf] %v400
  %465 = vst [vmem:[%s5 + $0x7c] sm:$0xf] %v401
  %466 = vst [vmem:[%s5 + $0x80] sm:$0xf] %v402
  %467 = vst [vmem:[%s5 + $0x84] sm:$0xf] %v403
  %468 = vst [vmem:[%s5 + $0x88] sm:$0xf] %v404
  %469 = vst [vmem:[%s5 + $0x8c] sm:$0xf] %v405
  %470 = vst [vmem:[%s5 + $0x90] sm:$0xf] %v406
  %471 = vst [vmem:[%s5 + $0x94] sm:$0xf] %v407
  %472 = vst [vmem:[%s5 + $0x98] sm:$0xf] %v408
  %473 = vst [vmem:[%s5 + $0x9c] sm:$0xf] %v409
  %474 = vst [vmem:[%s5 + $0xa0] sm:$0xf] %v410
  %475 = vst [vmem:[%s5 + $0xa4] sm:$0xf] %v411
  %476 = vst [vmem:[%s5 + $0xa8] sm:$0xf] %v412
  %477 = vst [vmem:[%s5 + $0xac] sm:$0xf] %v413
  %478 = vst [vmem:[%s5 + $0xb0] sm:$0xf] %v414
  %479 = vst [vmem:[%s5 + $0xb4] sm:$0xf] %v415
  %480 = vst [vmem:[%s5 + $0xb8] sm:$0xf] %v416
  %481 = vst [vmem:[%s5 + $0xbc] sm:$0xf] %v417
  %482 = vst [vmem:[%s5 + $0xc0] sm:$0xf] %v418
  %483 = vst [vmem:[%s5 + $0xc4] sm:$0xf] %v419
  %484 = vst [vmem:[%s5 + $0xc8] sm:$0xf] %v420
  %485 = vst [vmem:[%s5 + $0xcc] sm:$0xf] %v421
  %486 = vst [vmem:[%s5 + $0xd0] sm:$0xf] %v422
  %487 = vst [vmem:[%s5 + $0xd4] sm:$0xf] %v423
  %488 = vst [vmem:[%s5 + $0xd8] sm:$0xf] %v424
  %489 = vst [vmem:[%s5 + $0xdc] sm:$0xf] %v425
  %490 = vst [vmem:[%s5 + $0xe0] sm:$0xf] %v426
  %491 = vst [vmem:[%s5 + $0xe4] sm:$0xf] %v427
  %492 = vst [vmem:[%s5 + $0xe8] sm:$0xf] %v428
  %493 = vst [vmem:[%s5 + $0xec] sm:$0xf] %v429
  %494 = vst [vmem:[%s5 + $0xf0] sm:$0xf] %v430
  %495 = vst [vmem:[%s5 + $0xf4] sm:$0xf] %v431
  %496 = vst [vmem:[%s5 + $0xf8] sm:$0xf] %v432
  %497 = vst [vmem:[%s5 + $0xfc] sm:$0xf] %v433
  // Predicated region
  $region22: #{bottleneck_forward.7} parent=0 // pred_check
    _
  $region23: #{bottleneck_forward.7} parent=0 // pred_check_branch
    %499 = sbr.rel (0) target = $region25
  $region24: #{bottleneck_forward.7} parent=0 // pred_region
    _
  $region25: #{bottleneck_forward.7} parent=0 // pred_fallthru
    _
  // Predicated region
  $region26: #{bottleneck_forward.7} parent=0 // pred_check
    _
  $region27: #{bottleneck_forward.7} parent=0 // pred_check_branch
    %501 = sbr.rel (0) target = $region29
  $region28: #{bottleneck_forward.7} parent=0 // pred_region
    _
  $region29: #{bottleneck_forward.7} parent=0 // pred_fallthru
    _

// kernel: bottleneck_forward.6
$region0: #{bottleneck_forward.6}
  #allocation0 [shape = 'u32[]', space=smem, size = 0x4, offset = 0x4, fixed_abs, tag = 'smem constant byte address 0x4 - core index']
  #allocation1 [shape = 'u32[72,128]{1,0:T(1,128)}', space=vmem, size = 0x9000, scoped, tag = 'internal scratch']
  %s0 = inlined_call_operand.vmem [shape: bf16[512,128], index: 0, kind: input, shape index: {}]
  %s1 = inlined_call_operand.vmem [shape: bf16[128,128], index: 1, kind: input, shape index: {}]
  %s2 = inlined_call_operand.vmem [shape: f32[512,128], index: 2, kind: output, shape index: {0}]
  %s3 = inlined_call_operand.vmem [shape: f32[1,128], index: 3, kind: output, shape index: {1}]
  %s4 = inlined_call_operand.vmem [shape: f32[1,128], index: 4, kind: output, shape index: {2}]
  %5 = xla_tuple %s2, %s3, %s4
  %s6 = sld [smem:[#allocation0]]
  $region38: #{bottleneck_forward.6} parent=0
    _
  %s8 = ssub.s32 1, %s6
  %s9 = scalar_select 0, %s8, %s6
  // Predicated region
  $region2: #{bottleneck_forward.6} parent=0 // pred_check
    _
  $region3: #{bottleneck_forward.6} parent=0 // pred_check_branch
    %11 = sbr.rel (0) target = $region5
  $region4: #{bottleneck_forward.6} parent=0 // pred_region
    _
  $region5: #{bottleneck_forward.6} parent=0 // pred_fallthru
    _
  // Predicated region
  $region6: #{bottleneck_forward.6} parent=0 // pred_check
    _
  $region7: #{bottleneck_forward.6} parent=0 // pred_check_branch
    %13 = sbr.rel (0) target = $region9
  $region8: #{bottleneck_forward.6} parent=0 // pred_region
    _
  $region9: #{bottleneck_forward.6} parent=0 // pred_fallthru
    _
  %v14 = vld [vmem:[%s0] sm:$0xf]
  %v15 = vld [vmem:[%s0 + $0x4] sm:$0xf]
  %v16 = vld [vmem:[%s0 + $0x8] sm:$0xf]
  %v17 = vld [vmem:[%s0 + $0xc] sm:$0xf]
  %v18 = vld [vmem:[%s0 + $0x10] sm:$0xf]
  %v19 = vld [vmem:[%s0 + $0x14] sm:$0xf]
  %v20 = vld [vmem:[%s0 + $0x18] sm:$0xf]
  %v21 = vld [vmem:[%s0 + $0x1c] sm:$0xf]
  %v22 = vld [vmem:[%s0 + $0x20] sm:$0xf]
  %v23 = vld [vmem:[%s0 + $0x24] sm:$0xf]
  %v24 = vld [vmem:[%s0 + $0x28] sm:$0xf]
  %v25 = vld [vmem:[%s0 + $0x2c] sm:$0xf]
  %v26 = vld [vmem:[%s0 + $0x30] sm:$0xf]
  %v27 = vld [vmem:[%s0 + $0x34] sm:$0xf]
  %v28 = vld [vmem:[%s0 + $0x38] sm:$0xf]
  %v29 = vld [vmem:[%s0 + $0x3c] sm:$0xf]
  %v30 = vld [vmem:[%s0 + $0x40] sm:$0xf]
  %v31 = vld [vmem:[%s0 + $0x44] sm:$0xf]
  %v32 = vld [vmem:[%s0 + $0x48] sm:$0xf]
  %v33 = vld [vmem:[%s0 + $0x4c] sm:$0xf]
  %v34 = vld [vmem:[%s0 + $0x50] sm:$0xf]
  %v35 = vld [vmem:[%s0 + $0x54] sm:$0xf]
  %v36 = vld [vmem:[%s0 + $0x58] sm:$0xf]
  %v37 = vld [vmem:[%s0 + $0x5c] sm:$0xf]
  %v38 = vld [vmem:[%s0 + $0x60] sm:$0xf]
  %v39 = vld [vmem:[%s0 + $0x64] sm:$0xf]
  %v40 = vld [vmem:[%s0 + $0x68] sm:$0xf]
  %v41 = vld [vmem:[%s0 + $0x6c] sm:$0xf]
  %v42 = vld [vmem:[%s0 + $0x70] sm:$0xf]
  %v43 = vld [vmem:[%s0 + $0x74] sm:$0xf]
  %v44 = vld [vmem:[%s0 + $0x78] sm:$0xf]
  %v45 = vld [vmem:[%s0 + $0x7c] sm:$0xf]
  %v46 = vld [vmem:[%s0 + $0x80] sm:$0xf]
  %v47 = vld [vmem:[%s0 + $0x84] sm:$0xf]
  %v48 = vld [vmem:[%s0 + $0x88] sm:$0xf]
  %v49 = vld [vmem:[%s0 + $0x8c] sm:$0xf]
  %v50 = vld [vmem:[%s0 + $0x90] sm:$0xf]
  %v51 = vld [vmem:[%s0 + $0x94] sm:$0xf]
  %v52 = vld [vmem:[%s0 + $0x98] sm:$0xf]
  %v53 = vld [vmem:[%s0 + $0x9c] sm:$0xf]
  %v54 = vld [vmem:[%s0 + $0xa0] sm:$0xf]
  %v55 = vld [vmem:[%s0 + $0xa4] sm:$0xf]
  %v56 = vld [vmem:[%s0 + $0xa8] sm:$0xf]
  %v57 = vld [vmem:[%s0 + $0xac] sm:$0xf]
  %v58 = vld [vmem:[%s0 + $0xb0] sm:$0xf]
  %v59 = vld [vmem:[%s0 + $0xb4] sm:$0xf]
  %v60 = vld [vmem:[%s0 + $0xb8] sm:$0xf]
  %v61 = vld [vmem:[%s0 + $0xbc] sm:$0xf]
  %v62 = vld [vmem:[%s0 + $0xc0] sm:$0xf]
  %v63 = vld [vmem:[%s0 + $0xc4] sm:$0xf]
  %v64 = vld [vmem:[%s0 + $0xc8] sm:$0xf]
  %v65 = vld [vmem:[%s0 + $0xcc] sm:$0xf]
  %v66 = vld [vmem:[%s0 + $0xd0] sm:$0xf]
  %v67 = vld [vmem:[%s0 + $0xd4] sm:$0xf]
  %v68 = vld [vmem:[%s0 + $0xd8] sm:$0xf]
  %v69 = vld [vmem:[%s0 + $0xdc] sm:$0xf]
  %v70 = vld [vmem:[%s0 + $0xe0] sm:$0xf]
  %v71 = vld [vmem:[%s0 + $0xe4] sm:$0xf]
  %v72 = vld [vmem:[%s0 + $0xe8] sm:$0xf]
  %v73 = vld [vmem:[%s0 + $0xec] sm:$0xf]
  %v74 = vld [vmem:[%s0 + $0xf0] sm:$0xf]
  %v75 = vld [vmem:[%s0 + $0xf4] sm:$0xf]
  %v76 = vld [vmem:[%s0 + $0xf8] sm:$0xf]
  %v77 = vld [vmem:[%s0 + $0xfc] sm:$0xf]
  %v78 = vld [vmem:[%s1] sm:$0xf]
  %v79 = vld [vmem:[%s1 + $0x4] sm:$0xf]
  %v80 = vld [vmem:[%s1 + $0x8] sm:$0xf]
  %v81 = vld [vmem:[%s1 + $0xc] sm:$0xf]
  %v82 = vld [vmem:[%s1 + $0x10] sm:$0xf]
  %v83 = vld [vmem:[%s1 + $0x14] sm:$0xf]
  %v84 = vld [vmem:[%s1 + $0x18] sm:$0xf]
  %v85 = vld [vmem:[%s1 + $0x1c] sm:$0xf]
  %v86 = vld [vmem:[%s1 + $0x20] sm:$0xf]
  %v87 = vld [vmem:[%s1 + $0x24] sm:$0xf]
  %v88 = vld [vmem:[%s1 + $0x28] sm:$0xf]
  %v89 = vld [vmem:[%s1 + $0x2c] sm:$0xf]
  %v90 = vld [vmem:[%s1 + $0x30] sm:$0xf]
  %v91 = vld [vmem:[%s1 + $0x34] sm:$0xf]
  %v92 = vld [vmem:[%s1 + $0x38] sm:$0xf]
  %v93 = vld [vmem:[%s1 + $0x3c] sm:$0xf]
  %v158 = vunpack.c.l.b16 %v14
  %v159 = vunpack.c.l.b16 %v15
  %v160 = vunpack.c.l.b16 %v16
  %v161 = vunpack.c.l.b16 %v17
  %v162 = vunpack.c.l.b16 %v18
  %v163 = vunpack.c.l.b16 %v19
  %v164 = vunpack.c.l.b16 %v20
  %v165 = vunpack.c.l.b16 %v21
  %v166 = vunpack.c.l.b16 %v22
  %v167 = vunpack.c.l.b16 %v23
  %v168 = vunpack.c.l.b16 %v24
  %v169 = vunpack.c.l.b16 %v25
  %v170 = vunpack.c.l.b16 %v26
  %v171 = vunpack.c.l.b16 %v27
  %v172 = vunpack.c.l.b16 %v28
  %v173 = vunpack.c.l.b16 %v29
  %v174 = vunpack.c.l.b16 %v30
  %v175 = vunpack.c.l.b16 %v31
  %v176 = vunpack.c.l.b16 %v32
  %v177 = vunpack.c.l.b16 %v33
  %v178 = vunpack.c.l.b16 %v34
  %v179 = vunpack.c.l.b16 %v35
  %v180 = vunpack.c.l.b16 %v36
  %v181 = vunpack.c.l.b16 %v37
  %v182 = vunpack.c.l.b16 %v38
  %v183 = vunpack.c.l.b16 %v39
  %v184 = vunpack.c.l.b16 %v40
  %v185 = vunpack.c.l.b16 %v41
  %v186 = vunpack.c.l.b16 %v42
  %v187 = vunpack.c.l.b16 %v43
  %v188 = vunpack.c.l.b16 %v44
  %v189 = vunpack.c.l.b16 %v45
  %v190 = vunpack.c.l.b16 %v46
  %v191 = vunpack.c.l.b16 %v47
  %v192 = vunpack.c.l.b16 %v48
  %v193 = vunpack.c.l.b16 %v49
  %v194 = vunpack.c.l.b16 %v50
  %v195 = vunpack.c.l.b16 %v51
  %v196 = vunpack.c.l.b16 %v52
  %v197 = vunpack.c.l.b16 %v53
  %v198 = vunpack.c.l.b16 %v54
  %v199 = vunpack.c.l.b16 %v55
  %v200 = vunpack.c.l.b16 %v56
  %v201 = vunpack.c.l.b16 %v57
  %v202 = vunpack.c.l.b16 %v58
  %v203 = vunpack.c.l.b16 %v59
  %v204 = vunpack.c.l.b16 %v60
  %v205 = vunpack.c.l.b16 %v61
  %v206 = vunpack.c.l.b16 %v62
  %v207 = vunpack.c.l.b16 %v63
  %v208 = vunpack.c.l.b16 %v64
  %v209 = vunpack.c.l.b16 %v65
  %v210 = vunpack.c.l.b16 %v66
  %v211 = vunpack.c.l.b16 %v67
  %v212 = vunpack.c.l.b16 %v68
  %v213 = vunpack.c.l.b16 %v69
  %v214 = vunpack.c.l.b16 %v70
  %v215 = vunpack.c.l.b16 %v71
  %v216 = vunpack.c.l.b16 %v72
  %v217 = vunpack.c.l.b16 %v73
  %v218 = vunpack.c.l.b16 %v74
  %v219 = vunpack.c.l.b16 %v75
  %v220 = vunpack.c.l.b16 %v76
  %v221 = vunpack.c.l.b16 %v77
  %v222 = vpack.c.b16 %v159, %v158
  %v223 = vpack.c.b16 %v161, %v160
  %v224 = vpack.c.b16 %v163, %v162
  %v225 = vpack.c.b16 %v165, %v164
  %v226 = vpack.c.b16 %v167, %v166
  %v227 = vpack.c.b16 %v169, %v168
  %v228 = vpack.c.b16 %v171, %v170
  %v229 = vpack.c.b16 %v173, %v172
  %v230 = vpack.c.b16 %v175, %v174
  %v231 = vpack.c.b16 %v177, %v176
  %v232 = vpack.c.b16 %v179, %v178
  %v233 = vpack.c.b16 %v181, %v180
  %v234 = vpack.c.b16 %v183, %v182
  %v235 = vpack.c.b16 %v185, %v184
  %v236 = vpack.c.b16 %v187, %v186
  %v237 = vpack.c.b16 %v189, %v188
  %v238 = vpack.c.b16 %v191, %v190
  %v239 = vpack.c.b16 %v193, %v192
  %v240 = vpack.c.b16 %v195, %v194
  %v241 = vpack.c.b16 %v197, %v196
  %v242 = vpack.c.b16 %v199, %v198
  %v243 = vpack.c.b16 %v201, %v200
  %v244 = vpack.c.b16 %v203, %v202
  %v245 = vpack.c.b16 %v205, %v204
  %v246 = vpack.c.b16 %v207, %v206
  %v247 = vpack.c.b16 %v209, %v208
  %v248 = vpack.c.b16 %v211, %v210
  %v249 = vpack.c.b16 %v213, %v212
  %v250 = vpack.c.b16 %v215, %v214
  %v251 = vpack.c.b16 %v217, %v216
  %v252 = vpack.c.b16 %v219, %v218
  %v253 = vpack.c.b16 %v221, %v220
  %v302 = vunpack.c.l.b16 %v78
  %v303 = vunpack.c.l.b16 %v79
  %v304 = vunpack.c.l.b16 %v80
  %v305 = vunpack.c.l.b16 %v81
  %v306 = vunpack.c.l.b16 %v82
  %v307 = vunpack.c.l.b16 %v83
  %v308 = vunpack.c.l.b16 %v84
  %v309 = vunpack.c.l.b16 %v85
  %v310 = vunpack.c.l.b16 %v86
  %v311 = vunpack.c.l.b16 %v87
  %v312 = vunpack.c.l.b16 %v88
  %v313 = vunpack.c.l.b16 %v89
  %v314 = vunpack.c.l.b16 %v90
  %v315 = vunpack.c.l.b16 %v91
  %v316 = vunpack.c.l.b16 %v92
  %v317 = vunpack.c.l.b16 %v93
  %v318 = vpack.c.b16 %v303, %v302
  %v319 = vpack.c.b16 %v305, %v304
  %v320 = vpack.c.b16 %v307, %v306
  %v321 = vpack.c.b16 %v309, %v308
  %v322 = vpack.c.b16 %v311, %v310
  %v323 = vpack.c.b16 %v313, %v312
  %v324 = vpack.c.b16 %v315, %v314
  %v325 = vpack.c.b16 %v317, %v316
  %334 = vmatpush.bf16.msra.mxu0 %v325
  %335 = vmatpush.bf16.msra.mxu0 %v324
  %336 = vmatpush.bf16.msra.mxu0 %v323
  %337 = vmatpush.bf16.msra.mxu0 %v322
  %338 = vmatpush.bf16.msra.mxu0 %v321
  %339 = vmatpush.bf16.msra.mxu0 %v320
  %340 = vmatpush.bf16.msra.mxu0 %v319
  %341 = vmatpush.bf16.msra.mxu0 %v318
  %342 = vmatmul.bf16.gmra.mxu0 %v222
  %v343 = vpop.f32.mrf.mxu0
  %v344 = vadd.f32 0.0, %v343
  %v345 = vpop.f32.mrf.mxu0
  %v346 = vadd.f32 0.0, %v345
  %347 = vmatmul.bf16.gmra.mxu0 %v223
  %v348 = vpop.f32.mrf.mxu0
  %v349 = vadd.f32 0.0, %v348
  %v350 = vpop.f32.mrf.mxu0
  %v351 = vadd.f32 0.0, %v350
  %352 = vmatmul.bf16.gmra.mxu0 %v224
  %v353 = vpop.f32.mrf.mxu0
  %v354 = vadd.f32 0.0, %v353
  %v355 = vpop.f32.mrf.mxu0
  %v356 = vadd.f32 0.0, %v355
  %357 = vmatmul.bf16.gmra.mxu0 %v225
  %v358 = vpop.f32.mrf.mxu0
  %v359 = vadd.f32 0.0, %v358
  %v360 = vpop.f32.mrf.mxu0
  %v361 = vadd.f32 0.0, %v360
  %362 = vmatmul.bf16.gmra.mxu0 %v226
  %v363 = vpop.f32.mrf.mxu0
  %v364 = vadd.f32 0.0, %v363
  %v365 = vpop.f32.mrf.mxu0
  %v366 = vadd.f32 0.0, %v365
  %367 = vmatmul.bf16.gmra.mxu0 %v227
  %v368 = vpop.f32.mrf.mxu0
  %v369 = vadd.f32 0.0, %v368
  %v370 = vpop.f32.mrf.mxu0
  %v371 = vadd.f32 0.0, %v370
  %372 = vmatmul.bf16.gmra.mxu0 %v228
  %v373 = vpop.f32.mrf.mxu0
  %v374 = vadd.f32 0.0, %v373
  %v375 = vpop.f32.mrf.mxu0
  %v376 = vadd.f32 0.0, %v375
  %377 = vmatmul.bf16.gmra.mxu0 %v229
  %v378 = vpop.f32.mrf.mxu0
  %v379 = vadd.f32 0.0, %v378
  %v380 = vpop.f32.mrf.mxu0
  %v381 = vadd.f32 0.0, %v380
  %382 = vmatmul.bf16.gmra.mxu0 %v230
  %v383 = vpop.f32.mrf.mxu0
  %v384 = vadd.f32 0.0, %v383
  %v385 = vpop.f32.mrf.mxu0
  %v386 = vadd.f32 0.0, %v385
  %387 = vmatmul.bf16.gmra.mxu0 %v231
  %v388 = vpop.f32.mrf.mxu0
  %v389 = vadd.f32 0.0, %v388
  %v390 = vpop.f32.mrf.mxu0
  %v391 = vadd.f32 0.0, %v390
  %392 = vmatmul.bf16.gmra.mxu0 %v232
  %v393 = vpop.f32.mrf.mxu0
  %v394 = vadd.f32 0.0, %v393
  %v395 = vpop.f32.mrf.mxu0
  %v396 = vadd.f32 0.0, %v395
  %397 = vmatmul.bf16.gmra.mxu0 %v233
  %v398 = vpop.f32.mrf.mxu0
  %v399 = vadd.f32 0.0, %v398
  %v400 = vpop.f32.mrf.mxu0
  %v401 = vadd.f32 0.0, %v400
  %402 = vmatmul.bf16.gmra.mxu0 %v234
  %v403 = vpop.f32.mrf.mxu0
  %v404 = vadd.f32 0.0, %v403
  %v405 = vpop.f32.mrf.mxu0
  %v406 = vadd.f32 0.0, %v405
  %407 = vmatmul.bf16.gmra.mxu0 %v235
  %v408 = vpop.f32.mrf.mxu0
  %v409 = vadd.f32 0.0, %v408
  %v410 = vpop.f32.mrf.mxu0
  %v411 = vadd.f32 0.0, %v410
  %412 = vmatmul.bf16.gmra.mxu0 %v236
  %v413 = vpop.f32.mrf.mxu0
  %v414 = vadd.f32 0.0, %v413
  %v415 = vpop.f32.mrf.mxu0
  %v416 = vadd.f32 0.0, %v415
  %417 = vmatmul.bf16.gmra.mxu0 %v237
  %v418 = vpop.f32.mrf.mxu0
  %v419 = vadd.f32 0.0, %v418
  %v420 = vpop.f32.mrf.mxu0
  %v421 = vadd.f32 0.0, %v420
  %422 = vmatmul.bf16.gmra.mxu0 %v238
  %v423 = vpop.f32.mrf.mxu0
  %v424 = vadd.f32 0.0, %v423
  %v425 = vpop.f32.mrf.mxu0
  %v426 = vadd.f32 0.0, %v425
  %427 = vmatmul.bf16.gmra.mxu0 %v239
  %v428 = vpop.f32.mrf.mxu0
  %v429 = vadd.f32 0.0, %v428
  %v430 = vpop.f32.mrf.mxu0
  %v431 = vadd.f32 0.0, %v430
  %432 = vmatmul.bf16.gmra.mxu0 %v240
  %v433 = vpop.f32.mrf.mxu0
  %v434 = vadd.f32 0.0, %v433
  %v435 = vpop.f32.mrf.mxu0
  %v436 = vadd.f32 0.0, %v435
  %437 = vmatmul.bf16.gmra.mxu0 %v241
  %v438 = vpop.f32.mrf.mxu0
  %v439 = vadd.f32 0.0, %v438
  %v440 = vpop.f32.mrf.mxu0
  %v441 = vadd.f32 0.0, %v440
  %442 = vmatmul.bf16.gmra.mxu0 %v242
  %v443 = vpop.f32.mrf.mxu0
  %v444 = vadd.f32 0.0, %v443
  %v445 = vpop.f32.mrf.mxu0
  %v446 = vadd.f32 0.0, %v445
  %447 = vmatmul.bf16.gmra.mxu0 %v243
  %v448 = vpop.f32.mrf.mxu0
  %v449 = vadd.f32 0.0, %v448
  %v450 = vpop.f32.mrf.mxu0
  %v451 = vadd.f32 0.0, %v450
  %452 = vmatmul.bf16.gmra.mxu0 %v244
  %v453 = vpop.f32.mrf.mxu0
  %v454 = vadd.f32 0.0, %v453
  %v455 = vpop.f32.mrf.mxu0
  %v456 = vadd.f32 0.0, %v455
  %457 = vmatmul.bf16.gmra.mxu0 %v245
  %v458 = vpop.f32.mrf.mxu0
  %v459 = vadd.f32 0.0, %v458
  %v460 = vpop.f32.mrf.mxu0
  %v461 = vadd.f32 0.0, %v460
  %462 = vmatmul.bf16.gmra.mxu0 %v246
  %v463 = vpop.f32.mrf.mxu0
  %v464 = vadd.f32 0.0, %v463
  %v465 = vpop.f32.mrf.mxu0
  %v466 = vadd.f32 0.0, %v465
  %467 = vmatmul.bf16.gmra.mxu0 %v247
  %v468 = vpop.f32.mrf.mxu0
  %v469 = vadd.f32 0.0, %v468
  %v470 = vpop.f32.mrf.mxu0
  %v471 = vadd.f32 0.0, %v470
  %472 = vmatmul.bf16.gmra.mxu0 %v248
  %v473 = vpop.f32.mrf.mxu0
  %v474 = vadd.f32 0.0, %v473
  %v475 = vpop.f32.mrf.mxu0
  %v476 = vadd.f32 0.0, %v475
  %477 = vmatmul.bf16.gmra.mxu0 %v249
  %v478 = vpop.f32.mrf.mxu0
  %v479 = vadd.f32 0.0, %v478
  %v480 = vpop.f32.mrf.mxu0
  %v481 = vadd.f32 0.0, %v480
  %482 = vmatmul.bf16.gmra.mxu0 %v250
  %v483 = vpop.f32.mrf.mxu0
  %v484 = vadd.f32 0.0, %v483
  %v485 = vpop.f32.mrf.mxu0
  %v486 = vadd.f32 0.0, %v485
  %487 = vmatmul.bf16.gmra.mxu0 %v251
  %v488 = vpop.f32.mrf.mxu0
  %v489 = vadd.f32 0.0, %v488
  %v490 = vpop.f32.mrf.mxu0
  %v491 = vadd.f32 0.0, %v490
  %492 = vmatmul.bf16.gmra.mxu0 %v252
  %v493 = vpop.f32.mrf.mxu0
  %v494 = vadd.f32 0.0, %v493
  %v495 = vpop.f32.mrf.mxu0
  %v496 = vadd.f32 0.0, %v495
  %497 = vmatmul.bf16.gmra.mxu0 %v253
  %v498 = vpop.f32.mrf.mxu0
  %v499 = vadd.f32 0.0, %v498
  %v500 = vpop.f32.mrf.mxu0
  %v501 = vadd.f32 0.0, %v500
  %502 = vdwg.mxu0
  %503 = vst [vmem:[%s2] sm:$0xff] %v344
  %504 = vst [vmem:[%s2 + $0x8] sm:$0xff] %v346
  %505 = vst [vmem:[%s2 + $0x10] sm:$0xff] %v349
  %506 = vst [vmem:[%s2 + $0x18] sm:$0xff] %v351
  %507 = vst [vmem:[%s2 + $0x20] sm:$0xff] %v354
  %508 = vst [vmem:[%s2 + $0x28] sm:$0xff] %v356
  %509 = vst [vmem:[%s2 + $0x30] sm:$0xff] %v359
  %510 = vst [vmem:[%s2 + $0x38] sm:$0xff] %v361
  %511 = vst [vmem:[%s2 + $0x40] sm:$0xff] %v364
  %512 = vst [vmem:[%s2 + $0x48] sm:$0xff] %v366
  %513 = vst [vmem:[%s2 + $0x50] sm:$0xff] %v369
  %514 = vst [vmem:[%s2 + $0x58] sm:$0xff] %v371
  %515 = vst [vmem:[%s2 + $0x60] sm:$0xff] %v374
  %516 = vst [vmem:[%s2 + $0x68] sm:$0xff] %v376
  %517 = vst [vmem:[%s2 + $0x70] sm:$0xff] %v379
  %518 = vst [vmem:[%s2 + $0x78] sm:$0xff] %v381
  %519 = vst [vmem:[%s2 + $0x80] sm:$0xff] %v384
  %520 = vst [vmem:[%s2 + $0x88] sm:$0xff] %v386
  %521 = vst [vmem:[%s2 + $0x90] sm:$0xff] %v389
  %522 = vst [vmem:[%s2 + $0x98] sm:$0xff] %v391
  %523 = vst [vmem:[%s2 + $0xa0] sm:$0xff] %v394
  %524 = vst [vmem:[%s2 + $0xa8] sm:$0xff] %v396
  %525 = vst [vmem:[%s2 + $0xb0] sm:$0xff] %v399
  %526 = vst [vmem:[%s2 + $0xb8] sm:$0xff] %v401
  %527 = vst [vmem:[%s2 + $0xc0] sm:$0xff] %v404
  %528 = vst [vmem:[%s2 + $0xc8] sm:$0xff] %v406
  %529 = vst [vmem:[%s2 + $0xd0] sm:$0xff] %v409
  %530 = vst [vmem:[%s2 + $0xd8] sm:$0xff] %v411
  %531 = vst [vmem:[%s2 + $0xe0] sm:$0xff] %v414
  %532 = vst [vmem:[%s2 + $0xe8] sm:$0xff] %v416
  %533 = vst [vmem:[%s2 + $0xf0] sm:$0xff] %v419
  %534 = vst [vmem:[%s2 + $0xf8] sm:$0xff] %v421
  %535 = vst [vmem:[%s2 + $0x100] sm:$0xff] %v424
  %536 = vst [vmem:[%s2 + $0x108] sm:$0xff] %v426
  %537 = vst [vmem:[%s2 + $0x110] sm:$0xff] %v429
  %538 = vst [vmem:[%s2 + $0x118] sm:$0xff] %v431
  %539 = vst [vmem:[%s2 + $0x120] sm:$0xff] %v434
  %540 = vst [vmem:[%s2 + $0x128] sm:$0xff] %v436
  %541 = vst [vmem:[%s2 + $0x130] sm:$0xff] %v439
  %542 = vst [vmem:[%s2 + $0x138] sm:$0xff] %v441
  %543 = vst [vmem:[%s2 + $0x140] sm:$0xff] %v444
  %544 = vst [vmem:[%s2 + $0x148] sm:$0xff] %v446
  %545 = vst [vmem:[%s2 + $0x150] sm:$0xff] %v449
  %546 = vst [vmem:[%s2 + $0x158] sm:$0xff] %v451
  %547 = vst [vmem:[%s2 + $0x160] sm:$0xff] %v454
  %548 = vst [vmem:[%s2 + $0x168] sm:$0xff] %v456
  %549 = vst [vmem:[%s2 + $0x170] sm:$0xff] %v459
  %550 = vst [vmem:[%s2 + $0x178] sm:$0xff] %v461
  %551 = vst [vmem:[%s2 + $0x180] sm:$0xff] %v464
  %552 = vst [vmem:[%s2 + $0x188] sm:$0xff] %v466
  %553 = vst [vmem:[%s2 + $0x190] sm:$0xff] %v469
  %554 = vst [vmem:[%s2 + $0x198] sm:$0xff] %v471
  %555 = vst [vmem:[%s2 + $0x1a0] sm:$0xff] %v474
  %556 = vst [vmem:[%s2 + $0x1a8] sm:$0xff] %v476
  %557 = vst [vmem:[%s2 + $0x1b0] sm:$0xff] %v479
  %558 = vst [vmem:[%s2 + $0x1b8] sm:$0xff] %v481
  %559 = vst [vmem:[%s2 + $0x1c0] sm:$0xff] %v484
  %560 = vst [vmem:[%s2 + $0x1c8] sm:$0xff] %v486
  %561 = vst [vmem:[%s2 + $0x1d0] sm:$0xff] %v489
  %562 = vst [vmem:[%s2 + $0x1d8] sm:$0xff] %v491
  %563 = vst [vmem:[%s2 + $0x1e0] sm:$0xff] %v494
  %564 = vst [vmem:[%s2 + $0x1e8] sm:$0xff] %v496
  %565 = vst [vmem:[%s2 + $0x1f0] sm:$0xff] %v499
  %566 = vst [vmem:[%s2 + $0x1f8] sm:$0xff] %v501
  %p567 = scmp.eq.s32.totalorder 0, 0
  // Predicated region
  $region10: #{bottleneck_forward.6} parent=0 // pred_check
    %p568 = pneg %p567
  $region11: #{bottleneck_forward.6} parent=0 // pred_check_branch
    %570 = sbr.rel (%p568) target = $region13
  $region12: #{bottleneck_forward.6} parent=0 // pred_region
    %571 = vst [vmem:[%s3] sm:$0x1] 0.0
    %572 = vst [vmem:[%s4] sm:$0x1] 0.0
  $region13: #{bottleneck_forward.6} parent=0 // pred_fallthru
    _
  %v573 = vld [vmem:[%s3] sm:$0x1]
  %v574 = vadd.f32 %v344, %v346
  %v575 = vadd.f32 %v574, %v349
  %v576 = vadd.f32 %v575, %v351
  %v577 = vadd.f32 %v576, %v354
  %v578 = vadd.f32 %v577, %v356
  %v579 = vadd.f32 %v578, %v359
  %v580 = vadd.f32 %v579, %v361
  %v581 = vadd.f32 %v580, %v364
  %v582 = vadd.f32 %v581, %v366
  %v583 = vadd.f32 %v582, %v369
  %v584 = vadd.f32 %v583, %v371
  %v585 = vadd.f32 %v584, %v374
  %v586 = vadd.f32 %v585, %v376
  %v587 = vadd.f32 %v586, %v379
  %v588 = vadd.f32 %v587, %v381
  %v589 = vadd.f32 %v588, %v384
  %v590 = vadd.f32 %v589, %v386
  %v591 = vadd.f32 %v590, %v389
  %v592 = vadd.f32 %v591, %v391
  %v593 = vadd.f32 %v592, %v394
  %v594 = vadd.f32 %v593, %v396
  %v595 = vadd.f32 %v594, %v399
  %v596 = vadd.f32 %v595, %v401
  %v597 = vadd.f32 %v596, %v404
  %v598 = vadd.f32 %v597, %v406
  %v599 = vadd.f32 %v598, %v409
  %v600 = vadd.f32 %v599, %v411
  %v601 = vadd.f32 %v600, %v414
  %v602 = vadd.f32 %v601, %v416
  %v603 = vadd.f32 %v602, %v419
  %v604 = vadd.f32 %v603, %v421
  %v605 = vadd.f32 %v604, %v424
  %v606 = vadd.f32 %v605, %v426
  %v607 = vadd.f32 %v606, %v429
  %v608 = vadd.f32 %v607, %v431
  %v609 = vadd.f32 %v608, %v434
  %v610 = vadd.f32 %v609, %v436
  %v611 = vadd.f32 %v610, %v439
  %v612 = vadd.f32 %v611, %v441
  %v613 = vadd.f32 %v612, %v444
  %v614 = vadd.f32 %v613, %v446
  %v615 = vadd.f32 %v614, %v449
  %v616 = vadd.f32 %v615, %v451
  %v617 = vadd.f32 %v616, %v454
  %v618 = vadd.f32 %v617, %v456
  %v619 = vadd.f32 %v618, %v459
  %v620 = vadd.f32 %v619, %v461
  %v621 = vadd.f32 %v620, %v464
  %v622 = vadd.f32 %v621, %v466
  %v623 = vadd.f32 %v622, %v469
  %v624 = vadd.f32 %v623, %v471
  %v625 = vadd.f32 %v624, %v474
  %v626 = vadd.f32 %v625, %v476
  %v627 = vadd.f32 %v626, %v479
  %v628 = vadd.f32 %v627, %v481
  %v629 = vadd.f32 %v628, %v484
  %v630 = vadd.f32 %v629, %v486
  %v631 = vadd.f32 %v630, %v489
  %v632 = vadd.f32 %v631, %v491
  %v633 = vadd.f32 %v632, %v494
  %v634 = vadd.f32 %v633, %v496
  %v635 = vadd.f32 %v634, %v499
  %v636 = vadd.f32 %v635, %v501
  %v637 = vrot.slane %v636, 4
  %v638 = vadd.f32 %v636, %v637
  %v639 = vrot.slane %v638, 2
  %v640 = vadd.f32 %v638, %v639
  %v641 = vrot.slane %v640, 1
  %v642 = vadd.f32 %v640, %v641
  %v643 = vadd.f32 %v573, %v642
  %644 = vst [vmem:[%s3] sm:$0x1] %v643
  %v645 = vld [vmem:[%s4] sm:$0x1]
  %v646 = vmul.f32 %v344, %v344
  %v647 = vmul.f32 %v346, %v346
  %v648 = vmul.f32 %v349, %v349
  %v649 = vmul.f32 %v351, %v351
  %v650 = vmul.f32 %v354, %v354
  %v651 = vmul.f32 %v356, %v356
  %v652 = vmul.f32 %v359, %v359
  %v653 = vmul.f32 %v361, %v361
  %v654 = vmul.f32 %v364, %v364
  %v655 = vmul.f32 %v366, %v366
  %v656 = vmul.f32 %v369, %v369
  %v657 = vmul.f32 %v371, %v371
  %v658 = vmul.f32 %v374, %v374
  %v659 = vmul.f32 %v376, %v376
  %v660 = vmul.f32 %v379, %v379
  %v661 = vmul.f32 %v381, %v381
  %v662 = vmul.f32 %v384, %v384
  %v663 = vmul.f32 %v386, %v386
  %v664 = vmul.f32 %v389, %v389
  %v665 = vmul.f32 %v391, %v391
  %v666 = vmul.f32 %v394, %v394
  %v667 = vmul.f32 %v396, %v396
  %v668 = vmul.f32 %v399, %v399
  %v669 = vmul.f32 %v401, %v401
  %v670 = vmul.f32 %v404, %v404
  %v671 = vmul.f32 %v406, %v406
  %v672 = vmul.f32 %v409, %v409
  %v673 = vmul.f32 %v411, %v411
  %v674 = vmul.f32 %v414, %v414
  %v675 = vmul.f32 %v416, %v416
  %v676 = vmul.f32 %v419, %v419
  %v677 = vmul.f32 %v421, %v421
  %v678 = vmul.f32 %v424, %v424
  %v679 = vmul.f32 %v426, %v426
  %v680 = vmul.f32 %v429, %v429
  %v681 = vmul.f32 %v431, %v431
  %v682 = vmul.f32 %v434, %v434
  %v683 = vmul.f32 %v436, %v436
  %v684 = vmul.f32 %v439, %v439
  %v685 = vmul.f32 %v441, %v441
  %v686 = vmul.f32 %v444, %v444
  %v687 = vmul.f32 %v446, %v446
  %v688 = vmul.f32 %v449, %v449
  %v689 = vmul.f32 %v451, %v451
  %v690 = vmul.f32 %v454, %v454
  %v691 = vmul.f32 %v456, %v456
  %v692 = vmul.f32 %v459, %v459
  %v693 = vmul.f32 %v461, %v461
  %v694 = vmul.f32 %v464, %v464
  %v695 = vmul.f32 %v466, %v466
  %v696 = vmul.f32 %v469, %v469
  %v697 = vmul.f32 %v471, %v471
  %v698 = vmul.f32 %v474, %v474
  %v699 = vmul.f32 %v476, %v476
  %v700 = vmul.f32 %v479, %v479
  %v701 = vmul.f32 %v481, %v481
  %v702 = vmul.f32 %v484, %v484
  %v703 = vmul.f32 %v486, %v486
  %v704 = vmul.f32 %v489, %v489
  %v705 = vmul.f32 %v491, %v491
  %v706 = vmul.f32 %v494, %v494
  %v707 = vmul.f32 %v496, %v496
  %v708 = vmul.f32 %v499, %v499
  %v709 = vmul.f32 %v501, %v501
  %v710 = vadd.f32 %v646, %v647
  %v711 = vadd.f32 %v710, %v648
  %v712 = vadd.f32 %v711, %v649
  %v713 = vadd.f32 %v712, %v650
  %v714 = vadd.f32 %v713, %v651
  %v715 = vadd.f32 %v714, %v652
  %v716 = vadd.f32 %v715, %v653
  %v717 = vadd.f32 %v716, %v654
  %v718 = vadd.f32 %v717, %v655
  %v719 = vadd.f32 %v718, %v656
  %v720 = vadd.f32 %v719, %v657
  %v721 = vadd.f32 %v720, %v658
  %v722 = vadd.f32 %v721, %v659
  %v723 = vadd.f32 %v722, %v660
  %v724 = vadd.f32 %v723, %v661
  %v725 = vadd.f32 %v724, %v662
  %v726 = vadd.f32 %v725, %v663
  %v727 = vadd.f32 %v726, %v664
  %v728 = vadd.f32 %v727, %v665
  %v729 = vadd.f32 %v728, %v666
  %v730 = vadd.f32 %v729, %v667
  %v731 = vadd.f32 %v730, %v668
  %v732 = vadd.f32 %v731, %v669
  %v733 = vadd.f32 %v732, %v670
  %v734 = vadd.f32 %v733, %v671
  %v735 = vadd.f32 %v734, %v672
  %v736 = vadd.f32 %v735, %v673
  %v737 = vadd.f32 %v736, %v674
  %v738 = vadd.f32 %v737, %v675
  %v739 = vadd.f32 %v738, %v676
  %v740 = vadd.f32 %v739, %v677
  %v741 = vadd.f32 %v740, %v678
  %v742 = vadd.f32 %v741, %v679
  %v743 = vadd.f32 %v742, %v680
  %v744 = vadd.f32 %v743, %v681
  %v745 = vadd.f32 %v744, %v682
  %v746 = vadd.f32 %v745, %v683
  %v747 = vadd.f32 %v746, %v684
  %v748 = vadd.f32 %v747, %v685
  %v749 = vadd.f32 %v748, %v686
  %v750 = vadd.f32 %v749, %v687
  %v751 = vadd.f32 %v750, %v688
  %v752 = vadd.f32 %v751, %v689
  %v753 = vadd.f32 %v752, %v690
  %v754 = vadd.f32 %v753, %v691
  %v755 = vadd.f32 %v754, %v692
  %v756 = vadd.f32 %v755, %v693
  %v757 = vadd.f32 %v756, %v694
  %v758 = vadd.f32 %v757, %v695
  %v759 = vadd.f32 %v758, %v696
  %v760 = vadd.f32 %v759, %v697
  %v761 = vadd.f32 %v760, %v698
  %v762 = vadd.f32 %v761, %v699
  %v763 = vadd.f32 %v762, %v700
  %v764 = vadd.f32 %v763, %v701
  %v765 = vadd.f32 %v764, %v702
  %v766 = vadd.f32 %v765, %v703
  %v767 = vadd.f32 %v766, %v704
  %v768 = vadd.f32 %v767, %v705
  %v769 = vadd.f32 %v768, %v706
  %v770 = vadd.f32 %v769, %v707
  %v771 = vadd.f32 %v770, %v708
  %v772 = vadd.f32 %v771, %v709
  %v773 = vrot.slane %v772, 4
  %v774 = vadd.f32 %v772, %v773
  %v775 = vrot.slane %v774, 2
  %v776 = vadd.f32 %v774, %v775
  %v777 = vrot.slane %v776, 1
  %v778 = vadd.f32 %v776, %v777
  %v779 = vadd.f32 %v645, %v778
  %780 = vst [vmem:[%s4] sm:$0x1] %v779
  // Predicated region
  $region14: #{bottleneck_forward.6} parent=0 // pred_check
    _
  $region15: #{bottleneck_forward.6} parent=0 // pred_check_branch
    %782 = sbr.rel (0) target = $region17
  $region16: #{bottleneck_forward.6} parent=0 // pred_region
    _
  $region17: #{bottleneck_forward.6} parent=0 // pred_fallthru
    _
  // Predicated region
  $region18: #{bottleneck_forward.6} parent=0 // pred_check
    _
  $region19: #{bottleneck_forward.6} parent=0 // pred_check_branch
    %784 = sbr.rel (0) target = $region21
  $region20: #{bottleneck_forward.6} parent=0 // pred_region
    _
  $region21: #{bottleneck_forward.6} parent=0 // pred_fallthru
    _
  // Predicated region
  $region22: #{bottleneck_forward.6} parent=0 // pred_check
    _
  $region23: #{bottleneck_forward.6} parent=0 // pred_check_branch
    %786 = sbr.rel (0) target = $region25
  $region24: #{bottleneck_forward.6} parent=0 // pred_region
    _
  $region25: #{bottleneck_forward.6} parent=0 // pred_fallthru
    _
  // Predicated region
  $region26: #{bottleneck_forward.6} parent=0 // pred_check
    _
  $region27: #{bottleneck_forward.6} parent=0 // pred_check_branch
    %788 = sbr.rel (0) target = $region29
  $region28: #{bottleneck_forward.6} parent=0 // pred_region
    _
  $region29: #{bottleneck_forward.6} parent=0 // pred_fallthru
    _
  // Predicated region
  $region30: #{bottleneck_forward.6} parent=0 // pred_check
    _
  $region31: #{bottleneck_forward.6} parent=0 // pred_check_branch
    %790 = sbr.rel (0) target = $region33
  $region32: #{bottleneck_forward.6} parent=0 // pred_region
    _
  $region33: #{bottleneck_forward.6} parent=0 // pred_fallthru
    _
  // Predicated region
  $region34: #{bottleneck_forward.6} parent=0 // pred_check
    _
  $region35: #{bottleneck_forward.6} parent=0 // pred_check_branch
    %792 = sbr.rel (0) target = $region37
  $region36: #{bottleneck_forward.6} parent=0 // pred_region
    _
  $region37: #{bottleneck_forward.6} parent=0 // pred_fallthru
    _

// kernel: bottleneck_forward.9
$region0: #{bottleneck_forward.9}
  #allocation0 [shape = 'u32[]', space=smem, size = 0x4, offset = 0x4, fixed_abs, tag = 'smem constant byte address 0x4 - core index']
  #allocation1 [shape = 'u32[72,128]{1,0:T(1,128)}', space=vmem, size = 0x9000, scoped, tag = 'internal scratch']
  %s0 = inlined_call_operand.vmem [shape: f32[128,128], index: 0, kind: input, shape index: {}]
  %s1 = inlined_call_operand.vmem [shape: f32[1,128], index: 1, kind: input, shape index: {}]
  %s2 = inlined_call_operand.vmem [shape: f32[1,128], index: 2, kind: input, shape index: {}]
  %s3 = inlined_call_operand.vmem [shape: f32[1,128], index: 3, kind: input, shape index: {}]
  %s4 = inlined_call_operand.vmem [shape: f32[1,128], index: 4, kind: input, shape index: {}]
  %s5 = inlined_call_operand.vmem [shape: bf16[128,128], index: 5, kind: input, shape index: {}]
  %s6 = inlined_call_operand.vmem [shape: f32[128,128], index: 6, kind: output, shape index: {0}]
  %s7 = inlined_call_operand.vmem [shape: f32[1,128], index: 7, kind: output, shape index: {1}]
  %s8 = inlined_call_operand.vmem [shape: f32[1,128], index: 8, kind: output, shape index: {2}]
  %9 = xla_tuple %s6, %s7, %s8
  %s10 = sld [smem:[#allocation0]]
  $region54: #{bottleneck_forward.9} parent=0
    _
  %s12 = ssub.s32 1, %s10
  %s13 = scalar_select 0, %s12, %s10
  // Predicated region
  $region2: #{bottleneck_forward.9} parent=0 // pred_check
    _
  $region3: #{bottleneck_forward.9} parent=0 // pred_check_branch
    %15 = sbr.rel (0) target = $region5
  $region4: #{bottleneck_forward.9} parent=0 // pred_region
    _
  $region5: #{bottleneck_forward.9} parent=0 // pred_fallthru
    _
  // Predicated region
  $region6: #{bottleneck_forward.9} parent=0 // pred_check
    _
  $region7: #{bottleneck_forward.9} parent=0 // pred_check_branch
    %17 = sbr.rel (0) target = $region9
  $region8: #{bottleneck_forward.9} parent=0 // pred_region
    _
  $region9: #{bottleneck_forward.9} parent=0 // pred_fallthru
    _
  // Predicated region
  $region10: #{bottleneck_forward.9} parent=0 // pred_check
    _
  $region11: #{bottleneck_forward.9} parent=0 // pred_check_branch
    %19 = sbr.rel (0) target = $region13
  $region12: #{bottleneck_forward.9} parent=0 // pred_region
    _
  $region13: #{bottleneck_forward.9} parent=0 // pred_fallthru
    _
  // Predicated region
  $region14: #{bottleneck_forward.9} parent=0 // pred_check
    _
  $region15: #{bottleneck_forward.9} parent=0 // pred_check_branch
    %21 = sbr.rel (0) target = $region17
  $region16: #{bottleneck_forward.9} parent=0 // pred_region
    _
  $region17: #{bottleneck_forward.9} parent=0 // pred_fallthru
    _
  // Predicated region
  $region18: #{bottleneck_forward.9} parent=0 // pred_check
    _
  $region19: #{bottleneck_forward.9} parent=0 // pred_check_branch
    %23 = sbr.rel (0) target = $region21
  $region20: #{bottleneck_forward.9} parent=0 // pred_region
    _
  $region21: #{bottleneck_forward.9} parent=0 // pred_fallthru
    _
  // Predicated region
  $region22: #{bottleneck_forward.9} parent=0 // pred_check
    _
  $region23: #{bottleneck_forward.9} parent=0 // pred_check_branch
    %25 = sbr.rel (0) target = $region25
  $region24: #{bottleneck_forward.9} parent=0 // pred_region
    _
  $region25: #{bottleneck_forward.9} parent=0 // pred_fallthru
    _
  %v26 = vld [vmem:[%s0] sm:$0xff]
  %v27 = vld [vmem:[%s0 + $0x8] sm:$0xff]
  %v28 = vld [vmem:[%s0 + $0x10] sm:$0xff]
  %v29 = vld [vmem:[%s0 + $0x18] sm:$0xff]
  %v30 = vld [vmem:[%s0 + $0x20] sm:$0xff]
  %v31 = vld [vmem:[%s0 + $0x28] sm:$0xff]
  %v32 = vld [vmem:[%s0 + $0x30] sm:$0xff]
  %v33 = vld [vmem:[%s0 + $0x38] sm:$0xff]
  %v34 = vld [vmem:[%s0 + $0x40] sm:$0xff]
  %v35 = vld [vmem:[%s0 + $0x48] sm:$0xff]
  %v36 = vld [vmem:[%s0 + $0x50] sm:$0xff]
  %v37 = vld [vmem:[%s0 + $0x58] sm:$0xff]
  %v38 = vld [vmem:[%s0 + $0x60] sm:$0xff]
  %v39 = vld [vmem:[%s0 + $0x68] sm:$0xff]
  %v40 = vld [vmem:[%s0 + $0x70] sm:$0xff]
  %v41 = vld [vmem:[%s0 + $0x78] sm:$0xff]
  %v42 = vld [vmem:[%s1] sm:$0x1]
  %v43 = vld [vmem:[%s2] sm:$0x1]
  %v44 = vld [vmem:[%s3] sm:$0x1]
  %v45 = vld [vmem:[%s4] sm:$0x1]
  %v46 = vmul.f32 %v42, 0.0078125
  %v47 = vmul.f32 %v43, 0.0078125
  %v48 = vmul.f32 %v46, %v46
  %v49 = vsub.f32 %v47, %v48
  %v50 = vmax.f32 %v49, 0.0
  %v52 = vperm.slane %v46, 0
  %v54 = vsub.f32 %v26, %v52
  %v55 = vsub.f32 %v27, %v52
  %v56 = vsub.f32 %v28, %v52
  %v57 = vsub.f32 %v29, %v52
  %v58 = vsub.f32 %v30, %v52
  %v59 = vsub.f32 %v31, %v52
  %v60 = vsub.f32 %v32, %v52
  %v61 = vsub.f32 %v33, %v52
  %v62 = vsub.f32 %v34, %v52
  %v63 = vsub.f32 %v35, %v52
  %v64 = vsub.f32 %v36, %v52
  %v65 = vsub.f32 %v37, %v52
  %v66 = vsub.f32 %v38, %v52
  %v67 = vsub.f32 %v39, %v52
  %v68 = vsub.f32 %v40, %v52
  %v69 = vsub.f32 %v41, %v52
  %v70 = vadd.f32 %v50, 1e-05
  %v71 = vrsqrt.pop %v70
  %v72 = vmul.f32 %v71, %v70
  %v73 = vmul.f32 %v72, %v71
  %v74 = vmul.f32 0.5, %v73
  %v75 = vsub.f32 1.5, %v74
  %v76 = vmul.f32 %v71, %v75
  %vm77 = vweird.f32 %v70
  %vm78 = vweird.f32 %v71
  %vm79 = vmor %vm77, %vm78
  %v80 = vsel %vm79, %v71, %v76
  %v81 = vmul.f32 %v80, %v44
  %v83 = vperm.slane %v81, 0
  %v85 = vmul.f32 %v54, %v83
  %v86 = vmul.f32 %v55, %v83
  %v87 = vmul.f32 %v56, %v83
  %v88 = vmul.f32 %v57, %v83
  %v89 = vmul.f32 %v58, %v83
  %v90 = vmul.f32 %v59, %v83
  %v91 = vmul.f32 %v60, %v83
  %v92 = vmul.f32 %v61, %v83
  %v93 = vmul.f32 %v62, %v83
  %v94 = vmul.f32 %v63, %v83
  %v95 = vmul.f32 %v64, %v83
  %v96 = vmul.f32 %v65, %v83
  %v97 = vmul.f32 %v66, %v83
  %v98 = vmul.f32 %v67, %v83
  %v99 = vmul.f32 %v68, %v83
  %v100 = vmul.f32 %v69, %v83
  %v102 = vperm.slane %v45, 0
  %v104 = vadd.f32 %v85, %v102
  %v105 = vadd.f32 %v86, %v102
  %v106 = vadd.f32 %v87, %v102
  %v107 = vadd.f32 %v88, %v102
  %v108 = vadd.f32 %v89, %v102
  %v109 = vadd.f32 %v90, %v102
  %v110 = vadd.f32 %v91, %v102
  %v111 = vadd.f32 %v92, %v102
  %v112 = vadd.f32 %v93, %v102
  %v113 = vadd.f32 %v94, %v102
  %v114 = vadd.f32 %v95, %v102
  %v115 = vadd.f32 %v96, %v102
  %v116 = vadd.f32 %v97, %v102
  %v117 = vadd.f32 %v98, %v102
  %v118 = vadd.f32 %v99, %v102
  %v119 = vadd.f32 %v100, %v102
  %v120 = vmax.f32 %v104, 0.0
  %v121 = vmax.f32 %v105, 0.0
  %v122 = vmax.f32 %v106, 0.0
  %v123 = vmax.f32 %v107, 0.0
  %v124 = vmax.f32 %v108, 0.0
  %v125 = vmax.f32 %v109, 0.0
  %v126 = vmax.f32 %v110, 0.0
  %v127 = vmax.f32 %v111, 0.0
  %v128 = vmax.f32 %v112, 0.0
  %v129 = vmax.f32 %v113, 0.0
  %v130 = vmax.f32 %v114, 0.0
  %v131 = vmax.f32 %v115, 0.0
  %v132 = vmax.f32 %v116, 0.0
  %v133 = vmax.f32 %v117, 0.0
  %v134 = vmax.f32 %v118, 0.0
  %v135 = vmax.f32 %v119, 0.0
  %v136 = vpack.c.bf16 %v121, %v120
  %v137 = vpack.c.bf16 %v123, %v122
  %v138 = vpack.c.bf16 %v125, %v124
  %v139 = vpack.c.bf16 %v127, %v126
  %v140 = vpack.c.bf16 %v129, %v128
  %v141 = vpack.c.bf16 %v131, %v130
  %v142 = vpack.c.bf16 %v133, %v132
  %v143 = vpack.c.bf16 %v135, %v134
  %v144 = vld [vmem:[%s5] sm:$0xf]
  %v145 = vld [vmem:[%s5 + $0x4] sm:$0xf]
  %v146 = vld [vmem:[%s5 + $0x8] sm:$0xf]
  %v147 = vld [vmem:[%s5 + $0xc] sm:$0xf]
  %v148 = vld [vmem:[%s5 + $0x10] sm:$0xf]
  %v149 = vld [vmem:[%s5 + $0x14] sm:$0xf]
  %v150 = vld [vmem:[%s5 + $0x18] sm:$0xf]
  %v151 = vld [vmem:[%s5 + $0x1c] sm:$0xf]
  %v152 = vld [vmem:[%s5 + $0x20] sm:$0xf]
  %v153 = vld [vmem:[%s5 + $0x24] sm:$0xf]
  %v154 = vld [vmem:[%s5 + $0x28] sm:$0xf]
  %v155 = vld [vmem:[%s5 + $0x2c] sm:$0xf]
  %v156 = vld [vmem:[%s5 + $0x30] sm:$0xf]
  %v157 = vld [vmem:[%s5 + $0x34] sm:$0xf]
  %v158 = vld [vmem:[%s5 + $0x38] sm:$0xf]
  %v159 = vld [vmem:[%s5 + $0x3c] sm:$0xf]
  %v176 = vunpack.c.l.b16 %v144
  %v177 = vunpack.c.l.b16 %v145
  %v178 = vunpack.c.l.b16 %v146
  %v179 = vunpack.c.l.b16 %v147
  %v180 = vunpack.c.l.b16 %v148
  %v181 = vunpack.c.l.b16 %v149
  %v182 = vunpack.c.l.b16 %v150
  %v183 = vunpack.c.l.b16 %v151
  %v184 = vunpack.c.l.b16 %v152
  %v185 = vunpack.c.l.b16 %v153
  %v186 = vunpack.c.l.b16 %v154
  %v187 = vunpack.c.l.b16 %v155
  %v188 = vunpack.c.l.b16 %v156
  %v189 = vunpack.c.l.b16 %v157
  %v190 = vunpack.c.l.b16 %v158
  %v191 = vunpack.c.l.b16 %v159
  %v192 = vpack.c.b16 %v177, %v176
  %v193 = vpack.c.b16 %v179, %v178
  %v194 = vpack.c.b16 %v181, %v180
  %v195 = vpack.c.b16 %v183, %v182
  %v196 = vpack.c.b16 %v185, %v184
  %v197 = vpack.c.b16 %v187, %v186
  %v198 = vpack.c.b16 %v189, %v188
  %v199 = vpack.c.b16 %v191, %v190
  %208 = vmatpush.bf16.msra.mxu0 %v199
  %209 = vmatpush.bf16.msra.mxu0 %v198
  %210 = vmatpush.bf16.msra.mxu0 %v197
  %211 = vmatpush.bf16.msra.mxu0 %v196
  %212 = vmatpush.bf16.msra.mxu0 %v195
  %213 = vmatpush.bf16.msra.mxu0 %v194
  %214 = vmatpush.bf16.msra.mxu0 %v193
  %215 = vmatpush.bf16.msra.mxu0 %v192
  %216 = vmatmul.bf16.gmra.mxu0 %v136
  %v217 = vpop.f32.mrf.mxu0
  %v218 = vadd.f32 0.0, %v217
  %v219 = vpop.f32.mrf.mxu0
  %v220 = vadd.f32 0.0, %v219
  %221 = vmatmul.bf16.gmra.mxu0 %v137
  %v222 = vpop.f32.mrf.mxu0
  %v223 = vadd.f32 0.0, %v222
  %v224 = vpop.f32.mrf.mxu0
  %v225 = vadd.f32 0.0, %v224
  %226 = vmatmul.bf16.gmra.mxu0 %v138
  %v227 = vpop.f32.mrf.mxu0
  %v228 = vadd.f32 0.0, %v227
  %v229 = vpop.f32.mrf.mxu0
  %v230 = vadd.f32 0.0, %v229
  %231 = vmatmul.bf16.gmra.mxu0 %v139
  %v232 = vpop.f32.mrf.mxu0
  %v233 = vadd.f32 0.0, %v232
  %v234 = vpop.f32.mrf.mxu0
  %v235 = vadd.f32 0.0, %v234
  %236 = vmatmul.bf16.gmra.mxu0 %v140
  %v237 = vpop.f32.mrf.mxu0
  %v238 = vadd.f32 0.0, %v237
  %v239 = vpop.f32.mrf.mxu0
  %v240 = vadd.f32 0.0, %v239
  %241 = vmatmul.bf16.gmra.mxu0 %v141
  %v242 = vpop.f32.mrf.mxu0
  %v243 = vadd.f32 0.0, %v242
  %v244 = vpop.f32.mrf.mxu0
  %v245 = vadd.f32 0.0, %v244
  %246 = vmatmul.bf16.gmra.mxu0 %v142
  %v247 = vpop.f32.mrf.mxu0
  %v248 = vadd.f32 0.0, %v247
  %v249 = vpop.f32.mrf.mxu0
  %v250 = vadd.f32 0.0, %v249
  %251 = vmatmul.bf16.gmra.mxu0 %v143
  %v252 = vpop.f32.mrf.mxu0
  %v253 = vadd.f32 0.0, %v252
  %v254 = vpop.f32.mrf.mxu0
  %v255 = vadd.f32 0.0, %v254
  %256 = vdwg.mxu0
  %257 = vst [vmem:[%s6] sm:$0xff] %v218
  %258 = vst [vmem:[%s6 + $0x8] sm:$0xff] %v220
  %259 = vst [vmem:[%s6 + $0x10] sm:$0xff] %v223
  %260 = vst [vmem:[%s6 + $0x18] sm:$0xff] %v225
  %261 = vst [vmem:[%s6 + $0x20] sm:$0xff] %v228
  %262 = vst [vmem:[%s6 + $0x28] sm:$0xff] %v230
  %263 = vst [vmem:[%s6 + $0x30] sm:$0xff] %v233
  %264 = vst [vmem:[%s6 + $0x38] sm:$0xff] %v235
  %265 = vst [vmem:[%s6 + $0x40] sm:$0xff] %v238
  %266 = vst [vmem:[%s6 + $0x48] sm:$0xff] %v240
  %267 = vst [vmem:[%s6 + $0x50] sm:$0xff] %v243
  %268 = vst [vmem:[%s6 + $0x58] sm:$0xff] %v245
  %269 = vst [vmem:[%s6 + $0x60] sm:$0xff] %v248
  %270 = vst [vmem:[%s6 + $0x68] sm:$0xff] %v250
  %271 = vst [vmem:[%s6 + $0x70] sm:$0xff] %v253
  %272 = vst [vmem:[%s6 + $0x78] sm:$0xff] %v255
  %p273 = scmp.eq.s32.totalorder 0, 0
  // Predicated region
  $region26: #{bottleneck_forward.9} parent=0 // pred_check
    %p274 = pneg %p273
  $region27: #{bottleneck_forward.9} parent=0 // pred_check_branch
    %276 = sbr.rel (%p274) target = $region29
  $region28: #{bottleneck_forward.9} parent=0 // pred_region
    %277 = vst [vmem:[%s7] sm:$0x1] 0.0
    %278 = vst [vmem:[%s8] sm:$0x1] 0.0
  $region29: #{bottleneck_forward.9} parent=0 // pred_fallthru
    _
  %v279 = vld [vmem:[%s7] sm:$0x1]
  %v280 = vadd.f32 %v218, %v220
  %v281 = vadd.f32 %v280, %v223
  %v282 = vadd.f32 %v281, %v225
  %v283 = vadd.f32 %v282, %v228
  %v284 = vadd.f32 %v283, %v230
  %v285 = vadd.f32 %v284, %v233
  %v286 = vadd.f32 %v285, %v235
  %v287 = vadd.f32 %v286, %v238
  %v288 = vadd.f32 %v287, %v240
  %v289 = vadd.f32 %v288, %v243
  %v290 = vadd.f32 %v289, %v245
  %v291 = vadd.f32 %v290, %v248
  %v292 = vadd.f32 %v291, %v250
  %v293 = vadd.f32 %v292, %v253
  %v294 = vadd.f32 %v293, %v255
  %v295 = vrot.slane %v294, 4
  %v296 = vadd.f32 %v294, %v295
  %v297 = vrot.slane %v296, 2
  %v298 = vadd.f32 %v296, %v297
  %v299 = vrot.slane %v298, 1
  %v300 = vadd.f32 %v298, %v299
  %v301 = vadd.f32 %v279, %v300
  %302 = vst [vmem:[%s7] sm:$0x1] %v301
  %v303 = vld [vmem:[%s8] sm:$0x1]
  %v304 = vmul.f32 %v218, %v218
  %v305 = vmul.f32 %v220, %v220
  %v306 = vmul.f32 %v223, %v223
  %v307 = vmul.f32 %v225, %v225
  %v308 = vmul.f32 %v228, %v228
  %v309 = vmul.f32 %v230, %v230
  %v310 = vmul.f32 %v233, %v233
  %v311 = vmul.f32 %v235, %v235
  %v312 = vmul.f32 %v238, %v238
  %v313 = vmul.f32 %v240, %v240
  %v314 = vmul.f32 %v243, %v243
  %v315 = vmul.f32 %v245, %v245
  %v316 = vmul.f32 %v248, %v248
  %v317 = vmul.f32 %v250, %v250
  %v318 = vmul.f32 %v253, %v253
  %v319 = vmul.f32 %v255, %v255
  %v320 = vadd.f32 %v304, %v305
  %v321 = vadd.f32 %v320, %v306
  %v322 = vadd.f32 %v321, %v307
  %v323 = vadd.f32 %v322, %v308
  %v324 = vadd.f32 %v323, %v309
  %v325 = vadd.f32 %v324, %v310
  %v326 = vadd.f32 %v325, %v311
  %v327 = vadd.f32 %v326, %v312
  %v328 = vadd.f32 %v327, %v313
  %v329 = vadd.f32 %v328, %v314
  %v330 = vadd.f32 %v329, %v315
  %v331 = vadd.f32 %v330, %v316
  %v332 = vadd.f32 %v331, %v317
  %v333 = vadd.f32 %v332, %v318
  %v334 = vadd.f32 %v333, %v319
  %v335 = vrot.slane %v334, 4
  %v336 = vadd.f32 %v334, %v335
  %v337 = vrot.slane %v336, 2
  %v338 = vadd.f32 %v336, %v337
  %v339 = vrot.slane %v338, 1
  %v340 = vadd.f32 %v338, %v339
  %v341 = vadd.f32 %v303, %v340
  %342 = vst [vmem:[%s8] sm:$0x1] %v341
  // Predicated region
  $region30: #{bottleneck_forward.9} parent=0 // pred_check
    _
  $region31: #{bottleneck_forward.9} parent=0 // pred_check_branch
    %344 = sbr.rel (0) target = $region33
  $region32: #{bottleneck_forward.9} parent=0 // pred_region
    _
  $region33: #{bottleneck_forward.9} parent=0 // pred_fallthru
    _
  // Predicated region
  $region34: #{bottleneck_forward.9} parent=0 // pred_check
    _
  $region35: #{bottleneck_forward.9} parent=0 // pred_check_branch
    %346 = sbr.rel (0) target = $region37
  $region36: #{bottleneck_forward.9} parent=0 // pred_region
    _
  $region37: #{bottleneck_forward.9} parent=0 // pred_fallthru
    _
  // Predicated region
  $region38: #{bottleneck_forward.9} parent=0 // pred_check
    _
  $region39: #{bottleneck_forward.9} parent=0 // pred_check_branch
    %348 = sbr.rel (0) target = $region41
  $region40: #{bottleneck_forward.9} parent=0 // pred_region
    _
  $region41: #{bottleneck_forward.9} parent=0 // pred_fallthru
    _
  // Predicated region
  $region42: #{bottleneck_forward.9} parent=0 // pred_check
    _
  $region43: #{bottleneck_forward.9} parent=0 // pred_check_branch
    %350 = sbr.rel (0) target = $region45
  $region44: #{bottleneck_forward.9} parent=0 // pred_region
    _
  $region45: #{bottleneck_forward.9} parent=0 // pred_fallthru
    _
  // Predicated region
  $region46: #{bottleneck_forward.9} parent=0 // pred_check
    _
  $region47: #{bottleneck_forward.9} parent=0 // pred_check_branch
    %352 = sbr.rel (0) target = $region49
  $region48: #{bottleneck_forward.9} parent=0 // pred_region
    _
  $region49: #{bottleneck_forward.9} parent=0 // pred_fallthru
    _
  // Predicated region
  $region50: #{bottleneck_forward.9} parent=0 // pred_check
    _
  $region51: #{bottleneck_forward.9} parent=0 // pred_check_branch
    %354 = sbr.rel (0) target = $region53
  $region52: #{bottleneck_forward.9} parent=0 // pred_region
    _
  $region53: #{bottleneck_forward.9} parent=0 // pred_fallthru
    _

// kernel: bottleneck_forward.8
$region0: #{bottleneck_forward.8}
  #allocation0 [shape = 'u32[]', space=smem, size = 0x4, offset = 0x4, fixed_abs, tag = 'smem constant byte address 0x4 - core index']
  #allocation1 [shape = 'u32[72,128]{1,0:T(1,128)}', space=vmem, size = 0x9000, scoped, tag = 'internal scratch']
  %s0 = inlined_call_operand.vmem [shape: bf16[2,36,9,128], index: 0, kind: input, shape index: {}]
  %s1 = inlined_call_operand.vmem [shape: bf16[9,128,128], index: 1, kind: input, shape index: {}]
  %s2 = inlined_call_operand.vmem [shape: f32[2,64,128], index: 2, kind: output, shape index: {0}]
  %s3 = inlined_call_operand.vmem [shape: f32[1,128], index: 3, kind: output, shape index: {1}]
  %s4 = inlined_call_operand.vmem [shape: f32[1,128], index: 4, kind: output, shape index: {2}]
  %5 = xla_tuple %s2, %s3, %s4
  %s6 = sld [smem:[#allocation0]]
  $region61: #{bottleneck_forward.8} parent=0
    _
  %s8 = ssub.s32 1, %s6
  %s9 = scalar_select 0, %s8, %s6
  loop: start=0, step=1, limit=4
  $region2: #{bottleneck_forward.8} parent=0 // loop_pre_header
    _
  $region3: #{bottleneck_forward.8} parent=0 // loop_header
    %s11 = sphi 0, %s15
    %p12 = scmp.ge.s32.totalorder %s11, 4
    %s21 = sphi 0, %s23
    %s24 = sphi 0, %s21
    %s25 = sphi 0, %s24
    %s41 = sphi 0, %s25
    %s45 = sphi 0, %s45
    %s47 = sphi 0, %s45
    %s48 = sphi 0, %s47
    %s62 = sphi 0, %s48
    %s68 = sphi 0, %s70
    %s71 = sphi 0, %s68
    %s72 = sphi 0, %s71
    %s88 = sphi 0, %s72
    %s92 = sphi 0, %s92
    %s94 = sphi 0, %s92
    %s95 = sphi 0, %s94
    %s109 = sphi 0, %s95
    %s113 = sphi 0, %s113
    %s115 = sphi 0, %s113
    %s116 = sphi 0, %s115
    %s130 = sphi 0, %s116
  $region4: #{bottleneck_forward.8} parent=0 // loop_header_branch
    %14 = sbr.rel (%p12) target = $region8
  $region5: #{bottleneck_forward.8} parent=0 // loop_body
    %s16 = ssub.s32 %s11, 1
    %s17 = ssub.s32 %s11, 2
    %s18 = sadd.s32 %s11, 1
    %s19 = ssub.s32 %s11, %s18
    %p20 = scmp.eq.s32.totalorder %s19, 0
    %s22 = sadd.s32 %s21, 1
    %s23 = scalar_select %p20, %s21, %s22
    %p26 = pneg %p20
    %p27 = scmp.eq.s32.totalorder %s11, 1
    %p28 = por %p26, %p27
    %p29 = scmp.ne.s32.totalorder %s21, %s24
    %p30 = scmp.eq.s32.totalorder %s11, 0
    %p31 = por %p29, %p30
    %p32 = scmp.ne.s32.totalorder %s21, %s24
    %p33 = scmp.eq.s32.totalorder %s16, 1
    %p34 = por %p32, %p33
    %p35 = scmp.ne.s32.totalorder %s24, %s25
    %p36 = scmp.eq.s32.totalorder %s16, 0
    %p37 = por %p35, %p36
    %p38 = scmp.ne.s32.totalorder %s24, %s25
    %p39 = scmp.eq.s32.totalorder %s17, 1
    %p40 = por %p38, %p39
    %p42 = scmp.ne.s32.totalorder %s25, %s41
    %p43 = scmp.eq.s32.totalorder %s17, 0
    %p44 = por %p42, %p43
    %s46 = sadd.s32 %s45, 1
    %p49 = scmp.eq.s32.totalorder %s11, 1
    %p50 = scmp.ne.s32.totalorder %s45, %s47
    %p51 = scmp.eq.s32.totalorder %s11, 0
    %p52 = por %p50, %p51
    %p53 = scmp.ne.s32.totalorder %s45, %s47
    %p54 = scmp.eq.s32.totalorder %s16, 1
    %p55 = por %p53, %p54
    %p56 = scmp.ne.s32.totalorder %s47, %s48
    %p57 = scmp.eq.s32.totalorder %s16, 0
    %p58 = por %p56, %p57
    %p59 = scmp.ne.s32.totalorder %s47, %s48
    %p60 = scmp.eq.s32.totalorder %s17, 1
    %p61 = por %p59, %p60
    %p63 = scmp.ne.s32.totalorder %s48, %s62
    %p64 = scmp.eq.s32.totalorder %s17, 0
    %p65 = por %p63, %p64
    %s66 = ssub.s32 %s11, %s18
    %p67 = scmp.eq.s32.totalorder %s66, 0
    %s69 = sadd.s32 %s68, 1
    %s70 = scalar_select %p67, %s68, %s69
    %p73 = pneg %p67
    %p74 = scmp.eq.s32.totalorder %s11, 1
    %p75 = por %p73, %p74
    %p76 = scmp.ne.s32.totalorder %s68, %s71
    %p77 = scmp.eq.s32.totalorder %s11, 0
    %p78 = por %p76, %p77
    %p79 = scmp.ne.s32.totalorder %s68, %s71
    %p80 = scmp.eq.s32.totalorder %s16, 1
    %p81 = por %p79, %p80
    %p82 = scmp.ne.s32.totalorder %s71, %s72
    %p83 = scmp.eq.s32.totalorder %s16, 0
    %p84 = por %p82, %p83
    %p85 = scmp.ne.s32.totalorder %s71, %s72
    %p86 = scmp.eq.s32.totalorder %s17, 1
    %p87 = por %p85, %p86
    %p89 = scmp.ne.s32.totalorder %s72, %s88
    %p90 = scmp.eq.s32.totalorder %s17, 0
    %p91 = por %p89, %p90
    %s93 = sadd.s32 %s92, 1
    %p96 = scmp.eq.s32.totalorder %s11, 1
    %p97 = scmp.ne.s32.totalorder %s92, %s94
    %p98 = scmp.eq.s32.totalorder %s11, 0
    %p99 = por %p97, %p98
    %p100 = scmp.ne.s32.totalorder %s92, %s94
    %p101 = scmp.eq.s32.totalorder %s16, 1
    %p102 = por %p100, %p101
    %p103 = scmp.ne.s32.totalorder %s94, %s95
    %p104 = scmp.eq.s32.totalorder %s16, 0
    %p105 = por %p103, %p104
    %p106 = scmp.ne.s32.totalorder %s94, %s95
    %p107 = scmp.eq.s32.totalorder %s17, 1
    %p108 = por %p106, %p107
    %p110 = scmp.ne.s32.totalorder %s95, %s109
    %p111 = scmp.eq.s32.totalorder %s17, 0
    %p112 = por %p110, %p111
    %s114 = sadd.s32 %s113, 1
    %p117 = scmp.eq.s32.totalorder %s11, 1
    %p118 = scmp.ne.s32.totalorder %s113, %s115
    %p119 = scmp.eq.s32.totalorder %s11, 0
    %p120 = por %p118, %p119
    %p121 = scmp.ne.s32.totalorder %s113, %s115
    %p122 = scmp.eq.s32.totalorder %s16, 1
    %p123 = por %p121, %p122
    %p124 = scmp.ne.s32.totalorder %s115, %s116
    %p125 = scmp.eq.s32.totalorder %s16, 0
    %p126 = por %p124, %p125
    %p127 = scmp.ne.s32.totalorder %s115, %s116
    %p128 = scmp.eq.s32.totalorder %s17, 1
    %p129 = por %p127, %p128
    %p131 = scmp.ne.s32.totalorder %s116, %s130
    %p132 = scmp.eq.s32.totalorder %s17, 0
    %p133 = por %p131, %p132
    %p134 = scmp.le.s32.totalorder 1, %s11
    %p135 = scmp.lt.s32.totalorder %s11, 3
    %p136 = pnand %p134, %p135
    %p137 = pneg %p136
    // Predicated region
    $region9: #{bottleneck_forward.8} parent=5 // pred_check
      _
    $region10: #{bottleneck_forward.8} parent=5 // pred_check_branch
      %139 = sbr.rel (%p136) target = $region12
    $region11: #{bottleneck_forward.8} parent=5 // pred_region
      %s140 = ssub.s32 %s11, 1
      // Predicated region
      $region13: #{bottleneck_forward.8} parent=11 // pred_check
        %p141 = pneg %p58
      $region14: #{bottleneck_forward.8} parent=11 // pred_check_branch
        %143 = sbr.rel (%p141) target = $region16
      $region15: #{bottleneck_forward.8} parent=11 // pred_region
        _
      $region16: #{bottleneck_forward.8} parent=11 // pred_fallthru
        _
    $region12: #{bottleneck_forward.8} parent=5 // pred_fallthru
      _
    %p144 = scmp.lt.s32.totalorder %s11, 2
    // Predicated region
    $region17: #{bottleneck_forward.8} parent=5 // pred_check
      %p145 = pneg %p144
    $region18: #{bottleneck_forward.8} parent=5 // pred_check_branch
      %147 = sbr.rel (%p145) target = $region20
    $region19: #{bottleneck_forward.8} parent=5 // pred_region
      // Predicated region
      $region21: #{bottleneck_forward.8} parent=19 // pred_check
        %p148 = pneg %p31
      $region22: #{bottleneck_forward.8} parent=19 // pred_check_branch
        %150 = sbr.rel (%p148) target = $region24
      $region23: #{bottleneck_forward.8} parent=19 // pred_region
        %p151 = scmp.lt.s32.totalorder %s11, 1
        %s152 = scalar_select %p151, %s11, 1
        %s153 = smul.addr %s152, 72
        %s154 = smul.addr %s153, 4
        %s155 = scalar_lea.vmem %s0, %s154
      $region24: #{bottleneck_forward.8} parent=19 // pred_fallthru
        _
    $region20: #{bottleneck_forward.8} parent=5 // pred_fallthru
      _
    %p156 = scmp.le.s32.totalorder 1, %s11
    %p157 = scmp.lt.s32.totalorder %s11, 3
    %p158 = pnand %p156, %p157
    %p159 = pneg %p158
    // Predicated region
    $region25: #{bottleneck_forward.8} parent=5 // pred_check
      _
    $region26: #{bottleneck_forward.8} parent=5 // pred_check_branch
      %161 = sbr.rel (%p158) target = $region28
    $region27: #{bottleneck_forward.8} parent=5 // pred_region
      %s162 = ssub.s32 %s11, 1
      %p163 = scmp.lt.s32.totalorder %s16, 1
      %s164 = scalar_select %p163, %s16, 1
      %s165 = smul.addr %s164, 72
      %s166 = smul.addr %s165, 4
      %s167 = scalar_lea.vmem %s0, %s166
      %p168 = pneg %p37
      %p169 = pneg %p34
      %p170 = pneg %p58
      %p171 = pneg %p55
      %p172 = pneg %p84
      %p173 = pneg %p81
      %p174 = scmp.lt.s32.totalorder %s16, 1
      %s175 = scalar_select %p174, %s16, 1
      %s176 = smul.addr %s175, 8
      %s177 = smul.addr %s176, 8
      %s178 = scalar_lea.vmem %s2, %s177
      %p179 = pneg %p105
      %p180 = pneg %p102
      %p181 = pneg %p126
      %p182 = pneg %p123
      %p183 = scmp.lt.s32.totalorder %s16, 1
      %s184 = scalar_select %p183, %s16, 1
      %s185 = smul.addr %s184, 72
      %s186 = smul.addr %s185, 4
      %s187 = scalar_lea.vmem %s0, %s186
      %p188 = scmp.lt.s32.totalorder %s16, 1
      %s189 = scalar_select %p188, %s16, 1
      %s190 = smul.addr %s189, 8
      %s191 = smul.addr %s190, 8
      %s192 = scalar_lea.vmem %s2, %s191
      %v193 = vld [vmem:[%s187] sm:$0xf]
      %v194 = vld [vmem:[%s187 + $0x8] sm:$0xf]
      %v195 = vld [vmem:[%s187 + $0x10] sm:$0xf]
      %v196 = vld [vmem:[%s187 + $0x18] sm:$0xf]
      %v197 = vld [vmem:[%s187 + $0x20] sm:$0xf]
      %v198 = vld [vmem:[%s187 + $0x28] sm:$0xf]
      %v199 = vld [vmem:[%s187 + $0x30] sm:$0xf]
      %v200 = vld [vmem:[%s187 + $0x38] sm:$0xf]
      %v201 = vld [vmem:[%s1] sm:$0xf]
      %v202 = vld [vmem:[%s1 + $0x4] sm:$0xf]
      %v203 = vld [vmem:[%s1 + $0x8] sm:$0xf]
      %v204 = vld [vmem:[%s1 + $0xc] sm:$0xf]
      %v205 = vld [vmem:[%s1 + $0x10] sm:$0xf]
      %v206 = vld [vmem:[%s1 + $0x14] sm:$0xf]
      %v207 = vld [vmem:[%s1 + $0x18] sm:$0xf]
      %v208 = vld [vmem:[%s1 + $0x1c] sm:$0xf]
      %v209 = vld [vmem:[%s1 + $0x20] sm:$0xf]
      %v210 = vld [vmem:[%s1 + $0x24] sm:$0xf]
      %v211 = vld [vmem:[%s1 + $0x28] sm:$0xf]
      %v212 = vld [vmem:[%s1 + $0x2c] sm:$0xf]
      %v213 = vld [vmem:[%s1 + $0x30] sm:$0xf]
      %v214 = vld [vmem:[%s1 + $0x34] sm:$0xf]
      %v215 = vld [vmem:[%s1 + $0x38] sm:$0xf]
      %v216 = vld [vmem:[%s1 + $0x3c] sm:$0xf]
      %s217 = scalar_lea.vmem %s187, 72
      %v218 = vld [vmem:[%s217] sm:$0xf]
      %v219 = vld [vmem:[%s217 + $0x8] sm:$0xf]
      %v220 = vld [vmem:[%s217 + $0x10] sm:$0xf]
      %v221 = vld [vmem:[%s217 + $0x18] sm:$0xf]
      %v222 = vld [vmem:[%s217 + $0x20] sm:$0xf]
      %v223 = vld [vmem:[%s217 + $0x28] sm:$0xf]
      %v224 = vld [vmem:[%s217 + $0x30] sm:$0xf]
      %v225 = vld [vmem:[%s217 + $0x38] sm:$0xf]
      %s226 = scalar_lea.vmem %s1, 64
      %v227 = vld [vmem:[%s226] sm:$0xf]
      %v228 = vld [vmem:[%s226 + $0x4] sm:$0xf]
      %v229 = vld [vmem:[%s226 + $0x8] sm:$0xf]
      %v230 = vld [vmem:[%s226 + $0xc] sm:$0xf]
      %v231 = vld [vmem:[%s226 + $0x10] sm:$0xf]
      %v232 = vld [vmem:[%s226 + $0x14] sm:$0xf]
      %v233 = vld [vmem:[%s226 + $0x18] sm:$0xf]
      %v234 = vld [vmem:[%s226 + $0x1c] sm:$0xf]
      %v235 = vld [vmem:[%s226 + $0x20] sm:$0xf]
      %v236 = vld [vmem:[%s226 + $0x24] sm:$0xf]
      %v237 = vld [vmem:[%s226 + $0x28] sm:$0xf]
      %v238 = vld [vmem:[%s226 + $0x2c] sm:$0xf]
      %v239 = vld [vmem:[%s226 + $0x30] sm:$0xf]
      %v240 = vld [vmem:[%s226 + $0x34] sm:$0xf]
      %v241 = vld [vmem:[%s226 + $0x38] sm:$0xf]
      %v242 = vld [vmem:[%s226 + $0x3c] sm:$0xf]
      %v251 = vunpack.c.l.b16 %v218
      %v252 = vunpack.c.l.b16 %v219
      %v253 = vunpack.c.l.b16 %v220
      %v254 = vunpack.c.l.b16 %v221
      %v255 = vunpack.c.l.b16 %v222
      %v256 = vunpack.c.l.b16 %v223
      %v257 = vunpack.c.l.b16 %v224
      %v258 = vunpack.c.l.b16 %v225
      %v259 = vpack.c.b16 %v252, %v251
      %v260 = vpack.c.b16 %v254, %v253
      %v261 = vpack.c.b16 %v256, %v255
      %v262 = vpack.c.b16 %v258, %v257
      %v283 = vunpack.c.l.b16 %v227
      %v284 = vunpack.c.l.b16 %v228
      %v285 = vunpack.c.l.b16 %v229
      %v286 = vunpack.c.l.b16 %v230
      %v287 = vunpack.c.l.b16 %v231
      %v288 = vunpack.c.l.b16 %v232
      %v289 = vunpack.c.l.b16 %v233
      %v290 = vunpack.c.l.b16 %v234
      %v291 = vunpack.c.l.b16 %v235
      %v292 = vunpack.c.l.b16 %v236
      %v293 = vunpack.c.l.b16 %v237
      %v294 = vunpack.c.l.b16 %v238
      %v295 = vunpack.c.l.b16 %v239
      %v296 = vunpack.c.l.b16 %v240
      %v297 = vunpack.c.l.b16 %v241
      %v298 = vunpack.c.l.b16 %v242
      %v299 = vpack.c.b16 %v284, %v283
      %v300 = vpack.c.b16 %v286, %v285
      %v301 = vpack.c.b16 %v288, %v287
      %v302 = vpack.c.b16 %v290, %v289
      %v303 = vpack.c.b16 %v292, %v291
      %v304 = vpack.c.b16 %v294, %v293
      %v305 = vpack.c.b16 %v296, %v295
      %v306 = vpack.c.b16 %v298, %v297
      %315 = vmatpush.bf16.msra.mxu0 %v306
      %316 = vmatpush.bf16.msra.mxu0 %v305
      %317 = vmatpush.bf16.msra.mxu0 %v304
      %318 = vmatpush.bf16.msra.mxu0 %v303
      %319 = vmatpush.bf16.msra.mxu0 %v302
      %320 = vmatpush.bf16.msra.mxu0 %v301
      %321 = vmatpush.bf16.msra.mxu0 %v300
      %322 = vmatpush.bf16.msra.mxu0 %v299
      %323 = vmatmul.bf16.gmra.mxu0 %v259
      %v324 = vpop.f32.mrf.mxu0
      %v325 = vadd.f32 0.0, %v324
      %v326 = vpop.f32.mrf.mxu0
      %v327 = vadd.f32 0.0, %v326
      %328 = vmatmul.bf16.gmra.mxu0 %v260
      %v329 = vpop.f32.mrf.mxu0
      %v330 = vadd.f32 0.0, %v329
      %v331 = vpop.f32.mrf.mxu0
      %v332 = vadd.f32 0.0, %v331
      %333 = vmatmul.bf16.gmra.mxu0 %v261
      %v334 = vpop.f32.mrf.mxu0
      %v335 = vadd.f32 0.0, %v334
      %v336 = vpop.f32.mrf.mxu0
      %v337 = vadd.f32 0.0, %v336
      %338 = vmatmul.bf16.gmra.mxu0 %v262
      %v339 = vpop.f32.mrf.mxu0
      %v340 = vadd.f32 0.0, %v339
      %v341 = vpop.f32.mrf.mxu0
      %v342 = vadd.f32 0.0, %v341
      %343 = vdwg.mxu0
      %v352 = vunpack.c.l.b16 %v193
      %v353 = vunpack.c.l.b16 %v194
      %v354 = vunpack.c.l.b16 %v195
      %v355 = vunpack.c.l.b16 %v196
      %v356 = vunpack.c.l.b16 %v197
      %v357 = vunpack.c.l.b16 %v198
      %v358 = vunpack.c.l.b16 %v199
      %v359 = vunpack.c.l.b16 %v200
      %v360 = vpack.c.b16 %v353, %v352
      %v361 = vpack.c.b16 %v355, %v354
      %v362 = vpack.c.b16 %v357, %v356
      %v363 = vpack.c.b16 %v359, %v358
      %v384 = vunpack.c.l.b16 %v201
      %v385 = vunpack.c.l.b16 %v202
      %v386 = vunpack.c.l.b16 %v203
      %v387 = vunpack.c.l.b16 %v204
      %v388 = vunpack.c.l.b16 %v205
      %v389 = vunpack.c.l.b16 %v206
      %v390 = vunpack.c.l.b16 %v207
      %v391 = vunpack.c.l.b16 %v208
      %v392 = vunpack.c.l.b16 %v209
      %v393 = vunpack.c.l.b16 %v210
      %v394 = vunpack.c.l.b16 %v211
      %v395 = vunpack.c.l.b16 %v212
      %v396 = vunpack.c.l.b16 %v213
      %v397 = vunpack.c.l.b16 %v214
      %v398 = vunpack.c.l.b16 %v215
      %v399 = vunpack.c.l.b16 %v216
      %v400 = vpack.c.b16 %v385, %v384
      %v401 = vpack.c.b16 %v387, %v386
      %v402 = vpack.c.b16 %v389, %v388
      %v403 = vpack.c.b16 %v391, %v390
      %v404 = vpack.c.b16 %v393, %v392
      %v405 = vpack.c.b16 %v395, %v394
      %v406 = vpack.c.b16 %v397, %v396
      %v407 = vpack.c.b16 %v399, %v398
      %416 = vmatpush.bf16.msra.mxu0 %v407
      %417 = vmatpush.bf16.msra.mxu0 %v406
      %418 = vmatpush.bf16.msra.mxu0 %v405
      %419 = vmatpush.bf16.msra.mxu0 %v404
      %420 = vmatpush.bf16.msra.mxu0 %v403
      %421 = vmatpush.bf16.msra.mxu0 %v402
      %422 = vmatpush.bf16.msra.mxu0 %v401
      %423 = vmatpush.bf16.msra.mxu0 %v400
      %424 = vmatmul.bf16.gmra.mxu0 %v360
      %v425 = vpop.f32.mrf.mxu0
      %v426 = vadd.f32 %v325, %v425
      %v427 = vpop.f32.mrf.mxu0
      %v428 = vadd.f32 %v327, %v427
      %429 = vmatmul.bf16.gmra.mxu0 %v361
      %v430 = vpop.f32.mrf.mxu0
      %v431 = vadd.f32 %v330, %v430
      %v432 = vpop.f32.mrf.mxu0
      %v433 = vadd.f32 %v332, %v432
      %434 = vmatmul.bf16.gmra.mxu0 %v362
      %v435 = vpop.f32.mrf.mxu0
      %v436 = vadd.f32 %v335, %v435
      %v437 = vpop.f32.mrf.mxu0
      %v438 = vadd.f32 %v337, %v437
      %439 = vmatmul.bf16.gmra.mxu0 %v363
      %v440 = vpop.f32.mrf.mxu0
      %v441 = vadd.f32 %v340, %v440
      %v442 = vpop.f32.mrf.mxu0
      %v443 = vadd.f32 %v342, %v442
      %444 = vdwg.mxu0
      %v445 = vld [vmem:[%s187] sm:$0xf]
      %v446 = vld [vmem:[%s187 + $0x4] sm:$0x1]
      %v447 = vld [vmem:[%s187 + $0x8] sm:$0xf]
      %v448 = vld [vmem:[%s187 + $0xc] sm:$0x1]
      %v449 = vld [vmem:[%s187 + $0x10] sm:$0xf]
      %v450 = vld [vmem:[%s187 + $0x14] sm:$0x1]
      %v451 = vld [vmem:[%s187 + $0x18] sm:$0xf]
      %v452 = vld [vmem:[%s187 + $0x1c] sm:$0x1]
      %v453 = vld [vmem:[%s187 + $0x20] sm:$0xf]
      %v454 = vld [vmem:[%s187 + $0x24] sm:$0x1]
      %v455 = vld [vmem:[%s187 + $0x28] sm:$0xf]
      %v456 = vld [vmem:[%s187 + $0x2c] sm:$0x1]
      %v457 = vld [vmem:[%s187 + $0x30] sm:$0xf]
      %v458 = vld [vmem:[%s187 + $0x34] sm:$0x1]
      %v459 = vld [vmem:[%s187 + $0x38] sm:$0xf]
      %v460 = vld [vmem:[%s187 + $0x3c] sm:$0x1]
      %vm461 = vsmask.f32 3328
      %vm462 = vsmask.f32 7440
      %vm463 = vmor %vm461, %vm462
      %v465 = vshrl.u32 %v445, 16
      %v467 = vrot.slane %v465, 4
      %v468 = vshll.u32 %v445, 16
      %v470 = vrot.slane %v468, 5
      %v471 = vor.u32 %v467, %v470
      %v472 = vrot.slane %v471, 4
      %v474 = vshll.u32 %v446, 16
      %v476 = vrot.slane %v474, 5
      %v477 = vsel %vm463, %v472, %v476
      %v479 = vshrl.u32 %v447, 16
      %v481 = vrot.slane %v479, 4
      %v482 = vshll.u32 %v447, 16
      %v484 = vrot.slane %v482, 5
      %v485 = vor.u32 %v481, %v484
      %v486 = vrot.slane %v485, 4
      %v488 = vshll.u32 %v448, 16
      %v490 = vrot.slane %v488, 5
      %v491 = vsel %vm463, %v486, %v490
      %v493 = vshrl.u32 %v449, 16
      %v495 = vrot.slane %v493, 4
      %v496 = vshll.u32 %v449, 16
      %v498 = vrot.slane %v496, 5
      %v499 = vor.u32 %v495, %v498
      %v500 = vrot.slane %v499, 4
      %v502 = vshll.u32 %v450, 16
      %v504 = vrot.slane %v502, 5
      %v505 = vsel %vm463, %v500, %v504
      %v507 = vshrl.u32 %v451, 16
      %v509 = vrot.slane %v507, 4
      %v510 = vshll.u32 %v451, 16
      %v512 = vrot.slane %v510, 5
      %v513 = vor.u32 %v509, %v512
      %v514 = vrot.slane %v513, 4
      %v516 = vshll.u32 %v452, 16
      %v518 = vrot.slane %v516, 5
      %v519 = vsel %vm463, %v514, %v518
      %v521 = vshrl.u32 %v453, 16
      %v523 = vrot.slane %v521, 4
      %v524 = vshll.u32 %v453, 16
      %v526 = vrot.slane %v524, 5
      %v527 = vor.u32 %v523, %v526
      %v528 = vrot.slane %v527, 4
      %v530 = vshll.u32 %v454, 16
      %v532 = vrot.slane %v530, 5
      %v533 = vsel %vm463, %v528, %v532
      %v535 = vshrl.u32 %v455, 16
      %v537 = vrot.slane %v535, 4
      %v538 = vshll.u32 %v455, 16
      %v540 = vrot.slane %v538, 5
      %v541 = vor.u32 %v537, %v540
      %v542 = vrot.slane %v541, 4
      %v544 = vshll.u32 %v456, 16
      %v546 = vrot.slane %v544, 5
      %v547 = vsel %vm463, %v542, %v546
      %v549 = vshrl.u32 %v457, 16
      %v551 = vrot.slane %v549, 4
      %v552 = vshll.u32 %v457, 16
      %v554 = vrot.slane %v552, 5
      %v555 = vor.u32 %v551, %v554
      %v556 = vrot.slane %v555, 4
      %v558 = vshll.u32 %v458, 16
      %v560 = vrot.slane %v558, 5
      %v561 = vsel %vm463, %v556, %v560
      %v563 = vshrl.u32 %v459, 16
      %v565 = vrot.slane %v563, 4
      %v566 = vshll.u32 %v459, 16
      %v568 = vrot.slane %v566, 5
      %v569 = vor.u32 %v565, %v568
      %v570 = vrot.slane %v569, 4
      %v572 = vshll.u32 %v460, 16
      %v574 = vrot.slane %v572, 5
      %v575 = vsel %vm463, %v570, %v574
      %s576 = scalar_lea.vmem %s1, 128
      %v577 = vld [vmem:[%s576] sm:$0xf]
      %v578 = vld [vmem:[%s576 + $0x4] sm:$0xf]
      %v579 = vld [vmem:[%s576 + $0x8] sm:$0xf]
      %v580 = vld [vmem:[%s576 + $0xc] sm:$0xf]
      %v581 = vld [vmem:[%s576 + $0x10] sm:$0xf]
      %v582 = vld [vmem:[%s576 + $0x14] sm:$0xf]
      %v583 = vld [vmem:[%s576 + $0x18] sm:$0xf]
      %v584 = vld [vmem:[%s576 + $0x1c] sm:$0xf]
      %v585 = vld [vmem:[%s576 + $0x20] sm:$0xf]
      %v586 = vld [vmem:[%s576 + $0x24] sm:$0xf]
      %v587 = vld [vmem:[%s576 + $0x28] sm:$0xf]
      %v588 = vld [vmem:[%s576 + $0x2c] sm:$0xf]
      %v589 = vld [vmem:[%s576 + $0x30] sm:$0xf]
      %v590 = vld [vmem:[%s576 + $0x34] sm:$0xf]
      %v591 = vld [vmem:[%s576 + $0x38] sm:$0xf]
      %v592 = vld [vmem:[%s576 + $0x3c] sm:$0xf]
      %v593 = vunpack.c.l.b16 %v477
      %v594 = vunpack.c.l.b16 %v491
      %v595 = vunpack.c.l.b16 %v505
      %v596 = vunpack.c.l.b16 %v519
      %v597 = vunpack.c.l.b16 %v533
      %v598 = vunpack.c.l.b16 %v547
      %v599 = vunpack.c.l.b16 %v561
      %v600 = vunpack.c.l.b16 %v575
      %v601 = vpack.c.b16 %v594, %v593
      %v602 = vpack.c.b16 %v596, %v595
      %v603 = vpack.c.b16 %v598, %v597
      %v604 = vpack.c.b16 %v600, %v599
      %v625 = vunpack.c.l.b16 %v577
      %v626 = vunpack.c.l.b16 %v578
      %v627 = vunpack.c.l.b16 %v579
      %v628 = vunpack.c.l.b16 %v580
      %v629 = vunpack.c.l.b16 %v581
      %v630 = vunpack.c.l.b16 %v582
      %v631 = vunpack.c.l.b16 %v583
      %v632 = vunpack.c.l.b16 %v584
      %v633 = vunpack.c.l.b16 %v585
      %v634 = vunpack.c.l.b16 %v586
      %v635 = vunpack.c.l.b16 %v587
      %v636 = vunpack.c.l.b16 %v588
      %v637 = vunpack.c.l.b16 %v589
      %v638 = vunpack.c.l.b16 %v590
      %v639 = vunpack.c.l.b16 %v591
      %v640 = vunpack.c.l.b16 %v592
      %v641 = vpack.c.b16 %v626, %v625
      %v642 = vpack.c.b16 %v628, %v627
      %v643 = vpack.c.b16 %v630, %v629
      %v644 = vpack.c.b16 %v632, %v631
      %v645 = vpack.c.b16 %v634, %v633
      %v646 = vpack.c.b16 %v636, %v635
      %v647 = vpack.c.b16 %v638, %v637
      %v648 = vpack.c.b16 %v640, %v639
      %657 = vmatpush.bf16.msra.mxu0 %v648
      %658 = vmatpush.bf16.msra.mxu0 %v647
      %659 = vmatpush.bf16.msra.mxu0 %v646
      %660 = vmatpush.bf16.msra.mxu0 %v645
      %661 = vmatpush.bf16.msra.mxu0 %v644
      %662 = vmatpush.bf16.msra.mxu0 %v643
      %663 = vmatpush.bf16.msra.mxu0 %v642
      %664 = vmatpush.bf16.msra.mxu0 %v641
      %665 = vmatmul.bf16.gmra.mxu0 %v601
      %v666 = vpop.f32.mrf.mxu0
      %v667 = vadd.f32 0.0, %v666
      %v668 = vpop.f32.mrf.mxu0
      %v669 = vadd.f32 0.0, %v668
      %670 = vmatmul.bf16.gmra.mxu0 %v602
      %v671 = vpop.f32.mrf.mxu0
      %v672 = vadd.f32 0.0, %v671
      %v673 = vpop.f32.mrf.mxu0
      %v674 = vadd.f32 0.0, %v673
      %675 = vmatmul.bf16.gmra.mxu0 %v603
      %v676 = vpop.f32.mrf.mxu0
      %v677 = vadd.f32 0.0, %v676
      %v678 = vpop.f32.mrf.mxu0
      %v679 = vadd.f32 0.0, %v678
      %680 = vmatmul.bf16.gmra.mxu0 %v604
      %v681 = vpop.f32.mrf.mxu0
      %v682 = vadd.f32 0.0, %v681
      %v683 = vpop.f32.mrf.mxu0
      %v684 = vadd.f32 0.0, %v683
      %685 = vdwg.mxu0
      %v686 = vadd.f32 %v426, %v667
      %v687 = vadd.f32 %v428, %v669
      %v688 = vadd.f32 %v431, %v672
      %v689 = vadd.f32 %v433, %v674
      %v690 = vadd.f32 %v436, %v677
      %v691 = vadd.f32 %v438, %v679
      %v692 = vadd.f32 %v441, %v682
      %v693 = vadd.f32 %v443, %v684
      %s694 = scalar_lea.vmem %s187, 144
      %v695 = vld [vmem:[%s694] sm:$0xf]
      %v696 = vld [vmem:[%s694 + $0x8] sm:$0xf]
      %v697 = vld [vmem:[%s694 + $0x10] sm:$0xf]
      %v698 = vld [vmem:[%s694 + $0x18] sm:$0xf]
      %v699 = vld [vmem:[%s694 + $0x20] sm:$0xf]
      %v700 = vld [vmem:[%s694 + $0x28] sm:$0xf]
      %v701 = vld [vmem:[%s694 + $0x30] sm:$0xf]
      %v702 = vld [vmem:[%s694 + $0x38] sm:$0xf]
      %s703 = scalar_lea.vmem %s1, 192
      %v704 = vld [vmem:[%s703] sm:$0xf]
      %v705 = vld [vmem:[%s703 + $0x4] sm:$0xf]
      %v706 = vld [vmem:[%s703 + $0x8] sm:$0xf]
      %v707 = vld [vmem:[%s703 + $0xc] sm:$0xf]
      %v708 = vld [vmem:[%s703 + $0x10] sm:$0xf]
      %v709 = vld [vmem:[%s703 + $0x14] sm:$0xf]
      %v710 = vld [vmem:[%s703 + $0x18] sm:$0xf]
      %v711 = vld [vmem:[%s703 + $0x1c] sm:$0xf]
      %v712 = vld [vmem:[%s703 + $0x20] sm:$0xf]
      %v713 = vld [vmem:[%s703 + $0x24] sm:$0xf]
      %v714 = vld [vmem:[%s703 + $0x28] sm:$0xf]
      %v715 = vld [vmem:[%s703 + $0x2c] sm:$0xf]
      %v716 = vld [vmem:[%s703 + $0x30] sm:$0xf]
      %v717 = vld [vmem:[%s703 + $0x34] sm:$0xf]
      %v718 = vld [vmem:[%s703 + $0x38] sm:$0xf]
      %v719 = vld [vmem:[%s703 + $0x3c] sm:$0xf]
      %v728 = vunpack.c.l.b16 %v695
      %v729 = vunpack.c.l.b16 %v696
      %v730 = vunpack.c.l.b16 %v697
      %v731 = vunpack.c.l.b16 %v698
      %v732 = vunpack.c.l.b16 %v699
      %v733 = vunpack.c.l.b16 %v700
      %v734 = vunpack.c.l.b16 %v701
      %v735 = vunpack.c.l.b16 %v702
      %v736 = vpack.c.b16 %v729, %v728
      %v737 = vpack.c.b16 %v731, %v730
      %v738 = vpack.c.b16 %v733, %v732
      %v739 = vpack.c.b16 %v735, %v734
      %v760 = vunpack.c.l.b16 %v704
      %v761 = vunpack.c.l.b16 %v705
      %v762 = vunpack.c.l.b16 %v706
      %v763 = vunpack.c.l.b16 %v707
      %v764 = vunpack.c.l.b16 %v708
      %v765 = vunpack.c.l.b16 %v709
      %v766 = vunpack.c.l.b16 %v710
      %v767 = vunpack.c.l.b16 %v711
      %v768 = vunpack.c.l.b16 %v712
      %v769 = vunpack.c.l.b16 %v713
      %v770 = vunpack.c.l.b16 %v714
      %v771 = vunpack.c.l.b16 %v715
      %v772 = vunpack.c.l.b16 %v716
      %v773 = vunpack.c.l.b16 %v717
      %v774 = vunpack.c.l.b16 %v718
      %v775 = vunpack.c.l.b16 %v719
      %v776 = vpack.c.b16 %v761, %v760
      %v777 = vpack.c.b16 %v763, %v762
      %v778 = vpack.c.b16 %v765, %v764
      %v779 = vpack.c.b16 %v767, %v766
      %v780 = vpack.c.b16 %v769, %v768
      %v781 = vpack.c.b16 %v771, %v770
      %v782 = vpack.c.b16 %v773, %v772
      %v783 = vpack.c.b16 %v775, %v774
      %792 = vmatpush.bf16.msra.mxu0 %v783
      %793 = vmatpush.bf16.msra.mxu0 %v782
      %794 = vmatpush.bf16.msra.mxu0 %v781
      %795 = vmatpush.bf16.msra.mxu0 %v780
      %796 = vmatpush.bf16.msra.mxu0 %v779
      %797 = vmatpush.bf16.msra.mxu0 %v778
      %798 = vmatpush.bf16.msra.mxu0 %v777
      %799 = vmatpush.bf16.msra.mxu0 %v776
      %800 = vmatmul.bf16.gmra.mxu0 %v736
      %v801 = vpop.f32.mrf.mxu0
      %v802 = vadd.f32 0.0, %v801
      %v803 = vpop.f32.mrf.mxu0
      %v804 = vadd.f32 0.0, %v803
      %805 = vmatmul.bf16.gmra.mxu0 %v737
      %v806 = vpop.f32.mrf.mxu0
      %v807 = vadd.f32 0.0, %v806
      %v808 = vpop.f32.mrf.mxu0
      %v809 = vadd.f32 0.0, %v808
      %810 = vmatmul.bf16.gmra.mxu0 %v738
      %v811 = vpop.f32.mrf.mxu0
      %v812 = vadd.f32 0.0, %v811
      %v813 = vpop.f32.mrf.mxu0
      %v814 = vadd.f32 0.0, %v813
      %815 = vmatmul.bf16.gmra.mxu0 %v739
      %v816 = vpop.f32.mrf.mxu0
      %v817 = vadd.f32 0.0, %v816
      %v818 = vpop.f32.mrf.mxu0
      %v819 = vadd.f32 0.0, %v818
      %820 = vdwg.mxu0
      %v821 = vadd.f32 %v686, %v802
      %v822 = vadd.f32 %v687, %v804
      %v823 = vadd.f32 %v688, %v807
      %v824 = vadd.f32 %v689, %v809
      %v825 = vadd.f32 %v690, %v812
      %v826 = vadd.f32 %v691, %v814
      %v827 = vadd.f32 %v692, %v817
      %v828 = vadd.f32 %v693, %v819
      %s829 = scalar_lea.vmem %s187, 216
      %v830 = vld [vmem:[%s829] sm:$0xf]
      %v831 = vld [vmem:[%s829 + $0x8] sm:$0xf]
      %v832 = vld [vmem:[%s829 + $0x10] sm:$0xf]
      %v833 = vld [vmem:[%s829 + $0x18] sm:$0xf]
      %v834 = vld [vmem:[%s829 + $0x20] sm:$0xf]
      %v835 = vld [vmem:[%s829 + $0x28] sm:$0xf]
      %v836 = vld [vmem:[%s829 + $0x30] sm:$0xf]
      %v837 = vld [vmem:[%s829 + $0x38] sm:$0xf]
      %s838 = scalar_lea.vmem %s1, 256
      %v839 = vld [vmem:[%s838] sm:$0xf]
      %v840 = vld [vmem:[%s838 + $0x4] sm:$0xf]
      %v841 = vld [vmem:[%s838 + $0x8] sm:$0xf]
      %v842 = vld [vmem:[%s838 + $0xc] sm:$0xf]
      %v843 = vld [vmem:[%s838 + $0x10] sm:$0xf]
      %v844 = vld [vmem:[%s838 + $0x14] sm:$0xf]
      %v845 = vld [vmem:[%s838 + $0x18] sm:$0xf]
      %v846 = vld [vmem:[%s838 + $0x1c] sm:$0xf]
      %v847 = vld [vmem:[%s838 + $0x20] sm:$0xf]
      %v848 = vld [vmem:[%s838 + $0x24] sm:$0xf]
      %v849 = vld [vmem:[%s838 + $0x28] sm:$0xf]
      %v850 = vld [vmem:[%s838 + $0x2c] sm:$0xf]
      %v851 = vld [vmem:[%s838 + $0x30] sm:$0xf]
      %v852 = vld [vmem:[%s838 + $0x34] sm:$0xf]
      %v853 = vld [vmem:[%s838 + $0x38] sm:$0xf]
      %v854 = vld [vmem:[%s838 + $0x3c] sm:$0xf]
      %v863 = vunpack.c.l.b16 %v830
      %v864 = vunpack.c.l.b16 %v831
      %v865 = vunpack.c.l.b16 %v832
      %v866 = vunpack.c.l.b16 %v833
      %v867 = vunpack.c.l.b16 %v834
      %v868 = vunpack.c.l.b16 %v835
      %v869 = vunpack.c.l.b16 %v836
      %v870 = vunpack.c.l.b16 %v837
      %v871 = vpack.c.b16 %v864, %v863
      %v872 = vpack.c.b16 %v866, %v865
      %v873 = vpack.c.b16 %v868, %v867
      %v874 = vpack.c.b16 %v870, %v869
      %v895 = vunpack.c.l.b16 %v839
      %v896 = vunpack.c.l.b16 %v840
      %v897 = vunpack.c.l.b16 %v841
      %v898 = vunpack.c.l.b16 %v842
      %v899 = vunpack.c.l.b16 %v843
      %v900 = vunpack.c.l.b16 %v844
      %v901 = vunpack.c.l.b16 %v845
      %v902 = vunpack.c.l.b16 %v846
      %v903 = vunpack.c.l.b16 %v847
      %v904 = vunpack.c.l.b16 %v848
      %v905 = vunpack.c.l.b16 %v849
      %v906 = vunpack.c.l.b16 %v850
      %v907 = vunpack.c.l.b16 %v851
      %v908 = vunpack.c.l.b16 %v852
      %v909 = vunpack.c.l.b16 %v853
      %v910 = vunpack.c.l.b16 %v854
      %v911 = vpack.c.b16 %v896, %v895
      %v912 = vpack.c.b16 %v898, %v897
      %v913 = vpack.c.b16 %v900, %v899
      %v914 = vpack.c.b16 %v902, %v901
      %v915 = vpack.c.b16 %v904, %v903
      %v916 = vpack.c.b16 %v906, %v905
      %v917 = vpack.c.b16 %v908, %v907
      %v918 = vpack.c.b16 %v910, %v909
      %927 = vmatpush.bf16.msra.mxu0 %v918
      %928 = vmatpush.bf16.msra.mxu0 %v917
      %929 = vmatpush.bf16.msra.mxu0 %v916
      %930 = vmatpush.bf16.msra.mxu0 %v915
      %931 = vmatpush.bf16.msra.mxu0 %v914
      %932 = vmatpush.bf16.msra.mxu0 %v913
      %933 = vmatpush.bf16.msra.mxu0 %v912
      %934 = vmatpush.bf16.msra.mxu0 %v911
      %935 = vmatmul.bf16.gmra.mxu0 %v871
      %v936 = vpop.f32.mrf.mxu0
      %v937 = vadd.f32 0.0, %v936
      %v938 = vpop.f32.mrf.mxu0
      %v939 = vadd.f32 0.0, %v938
      %940 = vmatmul.bf16.gmra.mxu0 %v872
      %v941 = vpop.f32.mrf.mxu0
      %v942 = vadd.f32 0.0, %v941
      %v943 = vpop.f32.mrf.mxu0
      %v944 = vadd.f32 0.0, %v943
      %945 = vmatmul.bf16.gmra.mxu0 %v873
      %v946 = vpop.f32.mrf.mxu0
      %v947 = vadd.f32 0.0, %v946
      %v948 = vpop.f32.mrf.mxu0
      %v949 = vadd.f32 0.0, %v948
      %950 = vmatmul.bf16.gmra.mxu0 %v874
      %v951 = vpop.f32.mrf.mxu0
      %v952 = vadd.f32 0.0, %v951
      %v953 = vpop.f32.mrf.mxu0
      %v954 = vadd.f32 0.0, %v953
      %955 = vdwg.mxu0
      %v956 = vadd.f32 %v821, %v937
      %v957 = vadd.f32 %v822, %v939
      %v958 = vadd.f32 %v823, %v942
      %v959 = vadd.f32 %v824, %v944
      %v960 = vadd.f32 %v825, %v947
      %v961 = vadd.f32 %v826, %v949
      %v962 = vadd.f32 %v827, %v952
      %v963 = vadd.f32 %v828, %v954
      %v964 = vld [vmem:[%s694] sm:$0xf]
      %v965 = vld [vmem:[%s694 + $0x4] sm:$0x1]
      %v966 = vld [vmem:[%s694 + $0x8] sm:$0xf]
      %v967 = vld [vmem:[%s694 + $0xc] sm:$0x1]
      %v968 = vld [vmem:[%s694 + $0x10] sm:$0xf]
      %v969 = vld [vmem:[%s694 + $0x14] sm:$0x1]
      %v970 = vld [vmem:[%s694 + $0x18] sm:$0xf]
      %v971 = vld [vmem:[%s694 + $0x1c] sm:$0x1]
      %v972 = vld [vmem:[%s694 + $0x20] sm:$0xf]
      %v973 = vld [vmem:[%s694 + $0x24] sm:$0x1]
      %v974 = vld [vmem:[%s694 + $0x28] sm:$0xf]
      %v975 = vld [vmem:[%s694 + $0x2c] sm:$0x1]
      %v976 = vld [vmem:[%s694 + $0x30] sm:$0xf]
      %v977 = vld [vmem:[%s694 + $0x34] sm:$0x1]
      %v978 = vld [vmem:[%s694 + $0x38] sm:$0xf]
      %v979 = vld [vmem:[%s694 + $0x3c] sm:$0x1]
      %v981 = vshrl.u32 %v964, 16
      %v983 = vrot.slane %v981, 4
      %v984 = vshll.u32 %v964, 16
      %v986 = vrot.slane %v984, 5
      %v987 = vor.u32 %v983, %v986
      %v988 = vrot.slane %v987, 4
      %v990 = vshll.u32 %v965, 16
      %v992 = vrot.slane %v990, 5
      %v993 = vsel %vm463, %v988, %v992
      %v995 = vshrl.u32 %v966, 16
      %v997 = vrot.slane %v995, 4
      %v998 = vshll.u32 %v966, 16
      %v1000 = vrot.slane %v998, 5
      %v1001 = vor.u32 %v997, %v1000
      %v1002 = vrot.slane %v1001, 4
      %v1004 = vshll.u32 %v967, 16
      %v1006 = vrot.slane %v1004, 5
      %v1007 = vsel %vm463, %v1002, %v1006
      %v1009 = vshrl.u32 %v968, 16
      %v1011 = vrot.slane %v1009, 4
      %v1012 = vshll.u32 %v968, 16
      %v1014 = vrot.slane %v1012, 5
      %v1015 = vor.u32 %v1011, %v1014
      %v1016 = vrot.slane %v1015, 4
      %v1018 = vshll.u32 %v969, 16
      %v1020 = vrot.slane %v1018, 5
      %v1021 = vsel %vm463, %v1016, %v1020
      %v1023 = vshrl.u32 %v970, 16
      %v1025 = vrot.slane %v1023, 4
      %v1026 = vshll.u32 %v970, 16
      %v1028 = vrot.slane %v1026, 5
      %v1029 = vor.u32 %v1025, %v1028
      %v1030 = vrot.slane %v1029, 4
      %v1032 = vshll.u32 %v971, 16
      %v1034 = vrot.slane %v1032, 5
      %v1035 = vsel %vm463, %v1030, %v1034
      %v1037 = vshrl.u32 %v972, 16
      %v1039 = vrot.slane %v1037, 4
      %v1040 = vshll.u32 %v972, 16
      %v1042 = vrot.slane %v1040, 5
      %v1043 = vor.u32 %v1039, %v1042
      %v1044 = vrot.slane %v1043, 4
      %v1046 = vshll.u32 %v973, 16
      %v1048 = vrot.slane %v1046, 5
      %v1049 = vsel %vm463, %v1044, %v1048
      %v1051 = vshrl.u32 %v974, 16
      %v1053 = vrot.slane %v1051, 4
      %v1054 = vshll.u32 %v974, 16
      %v1056 = vrot.slane %v1054, 5
      %v1057 = vor.u32 %v1053, %v1056
      %v1058 = vrot.slane %v1057, 4
      %v1060 = vshll.u32 %v975, 16
      %v1062 = vrot.slane %v1060, 5
      %v1063 = vsel %vm463, %v1058, %v1062
      %v1065 = vshrl.u32 %v976, 16
      %v1067 = vrot.slane %v1065, 4
      %v1068 = vshll.u32 %v976, 16
      %v1070 = vrot.slane %v1068, 5
      %v1071 = vor.u32 %v1067, %v1070
      %v1072 = vrot.slane %v1071, 4
      %v1074 = vshll.u32 %v977, 16
      %v1076 = vrot.slane %v1074, 5
      %v1077 = vsel %vm463, %v1072, %v1076
      %v1079 = vshrl.u32 %v978, 16
      %v1081 = vrot.slane %v1079, 4
      %v1082 = vshll.u32 %v978, 16
      %v1084 = vrot.slane %v1082, 5
      %v1085 = vor.u32 %v1081, %v1084
      %v1086 = vrot.slane %v1085, 4
      %v1088 = vshll.u32 %v979, 16
      %v1090 = vrot.slane %v1088, 5
      %v1091 = vsel %vm463, %v1086, %v1090
      %s1092 = scalar_lea.vmem %s1, 320
      %v1093 = vld [vmem:[%s1092] sm:$0xf]
      %v1094 = vld [vmem:[%s1092 + $0x4] sm:$0xf]
      %v1095 = vld [vmem:[%s1092 + $0x8] sm:$0xf]
      %v1096 = vld [vmem:[%s1092 + $0xc] sm:$0xf]
      %v1097 = vld [vmem:[%s1092 + $0x10] sm:$0xf]
      %v1098 = vld [vmem:[%s1092 + $0x14] sm:$0xf]
      %v1099 = vld [vmem:[%s1092 + $0x18] sm:$0xf]
      %v1100 = vld [vmem:[%s1092 + $0x1c] sm:$0xf]
      %v1101 = vld [vmem:[%s1092 + $0x20] sm:$0xf]
      %v1102 = vld [vmem:[%s1092 + $0x24] sm:$0xf]
      %v1103 = vld [vmem:[%s1092 + $0x28] sm:$0xf]
      %v1104 = vld [vmem:[%s1092 + $0x2c] sm:$0xf]
      %v1105 = vld [vmem:[%s1092 + $0x30] sm:$0xf]
      %v1106 = vld [vmem:[%s1092 + $0x34] sm:$0xf]
      %v1107 = vld [vmem:[%s1092 + $0x38] sm:$0xf]
      %v1108 = vld [vmem:[%s1092 + $0x3c] sm:$0xf]
      %v1109 = vunpack.c.l.b16 %v993
      %v1110 = vunpack.c.l.b16 %v1007
      %v1111 = vunpack.c.l.b16 %v1021
      %v1112 = vunpack.c.l.b16 %v1035
      %v1113 = vunpack.c.l.b16 %v1049
      %v1114 = vunpack.c.l.b16 %v1063
      %v1115 = vunpack.c.l.b16 %v1077
      %v1116 = vunpack.c.l.b16 %v1091
      %v1117 = vpack.c.b16 %v1110, %v1109
      %v1118 = vpack.c.b16 %v1112, %v1111
      %v1119 = vpack.c.b16 %v1114, %v1113
      %v1120 = vpack.c.b16 %v1116, %v1115
      %v1141 = vunpack.c.l.b16 %v1093
      %v1142 = vunpack.c.l.b16 %v1094
      %v1143 = vunpack.c.l.b16 %v1095
      %v1144 = vunpack.c.l.b16 %v1096
      %v1145 = vunpack.c.l.b16 %v1097
      %v1146 = vunpack.c.l.b16 %v1098
      %v1147 = vunpack.c.l.b16 %v1099
      %v1148 = vunpack.c.l.b16 %v1100
      %v1149 = vunpack.c.l.b16 %v1101
      %v1150 = vunpack.c.l.b16 %v1102
      %v1151 = vunpack.c.l.b16 %v1103
      %v1152 = vunpack.c.l.b16 %v1104
      %v1153 = vunpack.c.l.b16 %v1105
      %v1154 = vunpack.c.l.b16 %v1106
      %v1155 = vunpack.c.l.b16 %v1107
      %v1156 = vunpack.c.l.b16 %v1108
      %v1157 = vpack.c.b16 %v1142, %v1141
      %v1158 = vpack.c.b16 %v1144, %v1143
      %v1159 = vpack.c.b16 %v1146, %v1145
      %v1160 = vpack.c.b16 %v1148, %v1147
      %v1161 = vpack.c.b16 %v1150, %v1149
      %v1162 = vpack.c.b16 %v1152, %v1151
      %v1163 = vpack.c.b16 %v1154, %v1153
      %v1164 = vpack.c.b16 %v1156, %v1155
      %1173 = vmatpush.bf16.msra.mxu0 %v1164
      %1174 = vmatpush.bf16.msra.mxu0 %v1163
      %1175 = vmatpush.bf16.msra.mxu0 %v1162
      %1176 = vmatpush.bf16.msra.mxu0 %v1161
      %1177 = vmatpush.bf16.msra.mxu0 %v1160
      %1178 = vmatpush.bf16.msra.mxu0 %v1159
      %1179 = vmatpush.bf16.msra.mxu0 %v1158
      %1180 = vmatpush.bf16.msra.mxu0 %v1157
      %1181 = vmatmul.bf16.gmra.mxu0 %v1117
      %v1182 = vpop.f32.mrf.mxu0
      %v1183 = vadd.f32 0.0, %v1182
      %v1184 = vpop.f32.mrf.mxu0
      %v1185 = vadd.f32 0.0, %v1184
      %1186 = vmatmul.bf16.gmra.mxu0 %v1118
      %v1187 = vpop.f32.mrf.mxu0
      %v1188 = vadd.f32 0.0, %v1187
      %v1189 = vpop.f32.mrf.mxu0
      %v1190 = vadd.f32 0.0, %v1189
      %1191 = vmatmul.bf16.gmra.mxu0 %v1119
      %v1192 = vpop.f32.mrf.mxu0
      %v1193 = vadd.f32 0.0, %v1192
      %v1194 = vpop.f32.mrf.mxu0
      %v1195 = vadd.f32 0.0, %v1194
      %1196 = vmatmul.bf16.gmra.mxu0 %v1120
      %v1197 = vpop.f32.mrf.mxu0
      %v1198 = vadd.f32 0.0, %v1197
      %v1199 = vpop.f32.mrf.mxu0
      %v1200 = vadd.f32 0.0, %v1199
      %1201 = vdwg.mxu0
      %v1202 = vadd.f32 %v956, %v1183
      %v1203 = vadd.f32 %v957, %v1185
      %v1204 = vadd.f32 %v958, %v1188
      %v1205 = vadd.f32 %v959, %v1190
      %v1206 = vadd.f32 %v960, %v1193
      %v1207 = vadd.f32 %v961, %v1195
      %v1208 = vadd.f32 %v962, %v1198
      %v1209 = vadd.f32 %v963, %v1200
      %s1210 = scalar_lea.vmem %s187, 8
      %v1211 = vld [vmem:[%s1210] sm:$0xf]
      %v1212 = vld [vmem:[%s1210 + $0x8] sm:$0xf]
      %v1213 = vld [vmem:[%s1210 + $0x10] sm:$0xf]
      %v1214 = vld [vmem:[%s1210 + $0x18] sm:$0xf]
      %v1215 = vld [vmem:[%s1210 + $0x20] sm:$0xf]
      %v1216 = vld [vmem:[%s1210 + $0x28] sm:$0xf]
      %v1217 = vld [vmem:[%s1210 + $0x30] sm:$0xf]
      %v1218 = vld [vmem:[%s1210 + $0x38] sm:$0xf]
      %s1219 = scalar_lea.vmem %s1, 384
      %v1220 = vld [vmem:[%s1219] sm:$0xf]
      %v1221 = vld [vmem:[%s1219 + $0x4] sm:$0xf]
      %v1222 = vld [vmem:[%s1219 + $0x8] sm:$0xf]
      %v1223 = vld [vmem:[%s1219 + $0xc] sm:$0xf]
      %v1224 = vld [vmem:[%s1219 + $0x10] sm:$0xf]
      %v1225 = vld [vmem:[%s1219 + $0x14] sm:$0xf]
      %v1226 = vld [vmem:[%s1219 + $0x18] sm:$0xf]
      %v1227 = vld [vmem:[%s1219 + $0x1c] sm:$0xf]
      %v1228 = vld [vmem:[%s1219 + $0x20] sm:$0xf]
      %v1229 = vld [vmem:[%s1219 + $0x24] sm:$0xf]
      %v1230 = vld [vmem:[%s1219 + $0x28] sm:$0xf]
      %v1231 = vld [vmem:[%s1219 + $0x2c] sm:$0xf]
      %v1232 = vld [vmem:[%s1219 + $0x30] sm:$0xf]
      %v1233 = vld [vmem:[%s1219 + $0x34] sm:$0xf]
      %v1234 = vld [vmem:[%s1219 + $0x38] sm:$0xf]
      %v1235 = vld [vmem:[%s1219 + $0x3c] sm:$0xf]
      %v1244 = vunpack.c.l.b16 %v1211
      %v1245 = vunpack.c.l.b16 %v1212
      %v1246 = vunpack.c.l.b16 %v1213
      %v1247 = vunpack.c.l.b16 %v1214
      %v1248 = vunpack.c.l.b16 %v1215
      %v1249 = vunpack.c.l.b16 %v1216
      %v1250 = vunpack.c.l.b16 %v1217
      %v1251 = vunpack.c.l.b16 %v1218
      %v1252 = vpack.c.b16 %v1245, %v1244
      %v1253 = vpack.c.b16 %v1247, %v1246
      %v1254 = vpack.c.b16 %v1249, %v1248
      %v1255 = vpack.c.b16 %v1251, %v1250
      %v1276 = vunpack.c.l.b16 %v1220
      %v1277 = vunpack.c.l.b16 %v1221
      %v1278 = vunpack.c.l.b16 %v1222
      %v1279 = vunpack.c.l.b16 %v1223
      %v1280 = vunpack.c.l.b16 %v1224
      %v1281 = vunpack.c.l.b16 %v1225
      %v1282 = vunpack.c.l.b16 %v1226
      %v1283 = vunpack.c.l.b16 %v1227
      %v1284 = vunpack.c.l.b16 %v1228
      %v1285 = vunpack.c.l.b16 %v1229
      %v1286 = vunpack.c.l.b16 %v1230
      %v1287 = vunpack.c.l.b16 %v1231
      %v1288 = vunpack.c.l.b16 %v1232
      %v1289 = vunpack.c.l.b16 %v1233
      %v1290 = vunpack.c.l.b16 %v1234
      %v1291 = vunpack.c.l.b16 %v1235
      %v1292 = vpack.c.b16 %v1277, %v1276
      %v1293 = vpack.c.b16 %v1279, %v1278
      %v1294 = vpack.c.b16 %v1281, %v1280
      %v1295 = vpack.c.b16 %v1283, %v1282
      %v1296 = vpack.c.b16 %v1285, %v1284
      %v1297 = vpack.c.b16 %v1287, %v1286
      %v1298 = vpack.c.b16 %v1289, %v1288
      %v1299 = vpack.c.b16 %v1291, %v1290
      %1308 = vmatpush.bf16.msra.mxu0 %v1299
      %1309 = vmatpush.bf16.msra.mxu0 %v1298
      %1310 = vmatpush.bf16.msra.mxu0 %v1297
      %1311 = vmatpush.bf16.msra.mxu0 %v1296
      %1312 = vmatpush.bf16.msra.mxu0 %v1295
      %1313 = vmatpush.bf16.msra.mxu0 %v1294
      %1314 = vmatpush.bf16.msra.mxu0 %v1293
      %1315 = vmatpush.bf16.msra.mxu0 %v1292
      %1316 = vmatmul.bf16.gmra.mxu0 %v1252
      %v1317 = vpop.f32.mrf.mxu0
      %v1318 = vadd.f32 0.0, %v1317
      %v1319 = vpop.f32.mrf.mxu0
      %v1320 = vadd.f32 0.0, %v1319
      %1321 = vmatmul.bf16.gmra.mxu0 %v1253
      %v1322 = vpop.f32.mrf.mxu0
      %v1323 = vadd.f32 0.0, %v1322
      %v1324 = vpop.f32.mrf.mxu0
      %v1325 = vadd.f32 0.0, %v1324
      %1326 = vmatmul.bf16.gmra.mxu0 %v1254
      %v1327 = vpop.f32.mrf.mxu0
      %v1328 = vadd.f32 0.0, %v1327
      %v1329 = vpop.f32.mrf.mxu0
      %v1330 = vadd.f32 0.0, %v1329
      %1331 = vmatmul.bf16.gmra.mxu0 %v1255
      %v1332 = vpop.f32.mrf.mxu0
      %v1333 = vadd.f32 0.0, %v1332
      %v1334 = vpop.f32.mrf.mxu0
      %v1335 = vadd.f32 0.0, %v1334
      %1336 = vdwg.mxu0
      %v1337 = vadd.f32 %v1202, %v1318
      %v1338 = vadd.f32 %v1203, %v1320
      %v1339 = vadd.f32 %v1204, %v1323
      %v1340 = vadd.f32 %v1205, %v1325
      %v1341 = vadd.f32 %v1206, %v1328
      %v1342 = vadd.f32 %v1207, %v1330
      %v1343 = vadd.f32 %v1208, %v1333
      %v1344 = vadd.f32 %v1209, %v1335
      %s1345 = scalar_lea.vmem %s187, 80
      %v1346 = vld [vmem:[%s1345] sm:$0xf]
      %v1347 = vld [vmem:[%s1345 + $0x8] sm:$0xf]
      %v1348 = vld [vmem:[%s1345 + $0x10] sm:$0xf]
      %v1349 = vld [vmem:[%s1345 + $0x18] sm:$0xf]
      %v1350 = vld [vmem:[%s1345 + $0x20] sm:$0xf]
      %v1351 = vld [vmem:[%s1345 + $0x28] sm:$0xf]
      %v1352 = vld [vmem:[%s1345 + $0x30] sm:$0xf]
      %v1353 = vld [vmem:[%s1345 + $0x38] sm:$0xf]
      %s1354 = scalar_lea.vmem %s1, 448
      %v1355 = vld [vmem:[%s1354] sm:$0xf]
      %v1356 = vld [vmem:[%s1354 + $0x4] sm:$0xf]
      %v1357 = vld [vmem:[%s1354 + $0x8] sm:$0xf]
      %v1358 = vld [vmem:[%s1354 + $0xc] sm:$0xf]
      %v1359 = vld [vmem:[%s1354 + $0x10] sm:$0xf]
      %v1360 = vld [vmem:[%s1354 + $0x14] sm:$0xf]
      %v1361 = vld [vmem:[%s1354 + $0x18] sm:$0xf]
      %v1362 = vld [vmem:[%s1354 + $0x1c] sm:$0xf]
      %v1363 = vld [vmem:[%s1354 + $0x20] sm:$0xf]
      %v1364 = vld [vmem:[%s1354 + $0x24] sm:$0xf]
      %v1365 = vld [vmem:[%s1354 + $0x28] sm:$0xf]
      %v1366 = vld [vmem:[%s1354 + $0x2c] sm:$0xf]
      %v1367 = vld [vmem:[%s1354 + $0x30] sm:$0xf]
      %v1368 = vld [vmem:[%s1354 + $0x34] sm:$0xf]
      %v1369 = vld [vmem:[%s1354 + $0x38] sm:$0xf]
      %v1370 = vld [vmem:[%s1354 + $0x3c] sm:$0xf]
      %v1379 = vunpack.c.l.b16 %v1346
      %v1380 = vunpack.c.l.b16 %v1347
      %v1381 = vunpack.c.l.b16 %v1348
      %v1382 = vunpack.c.l.b16 %v1349
      %v1383 = vunpack.c.l.b16 %v1350
      %v1384 = vunpack.c.l.b16 %v1351
      %v1385 = vunpack.c.l.b16 %v1352
      %v1386 = vunpack.c.l.b16 %v1353
      %v1387 = vpack.c.b16 %v1380, %v1379
      %v1388 = vpack.c.b16 %v1382, %v1381
      %v1389 = vpack.c.b16 %v1384, %v1383
      %v1390 = vpack.c.b16 %v1386, %v1385
      %v1411 = vunpack.c.l.b16 %v1355
      %v1412 = vunpack.c.l.b16 %v1356
      %v1413 = vunpack.c.l.b16 %v1357
      %v1414 = vunpack.c.l.b16 %v1358
      %v1415 = vunpack.c.l.b16 %v1359
      %v1416 = vunpack.c.l.b16 %v1360
      %v1417 = vunpack.c.l.b16 %v1361
      %v1418 = vunpack.c.l.b16 %v1362
      %v1419 = vunpack.c.l.b16 %v1363
      %v1420 = vunpack.c.l.b16 %v1364
      %v1421 = vunpack.c.l.b16 %v1365
      %v1422 = vunpack.c.l.b16 %v1366
      %v1423 = vunpack.c.l.b16 %v1367
      %v1424 = vunpack.c.l.b16 %v1368
      %v1425 = vunpack.c.l.b16 %v1369
      %v1426 = vunpack.c.l.b16 %v1370
      %v1427 = vpack.c.b16 %v1412, %v1411
      %v1428 = vpack.c.b16 %v1414, %v1413
      %v1429 = vpack.c.b16 %v1416, %v1415
      %v1430 = vpack.c.b16 %v1418, %v1417
      %v1431 = vpack.c.b16 %v1420, %v1419
      %v1432 = vpack.c.b16 %v1422, %v1421
      %v1433 = vpack.c.b16 %v1424, %v1423
      %v1434 = vpack.c.b16 %v1426, %v1425
      %1443 = vmatpush.bf16.msra.mxu0 %v1434
      %1444 = vmatpush.bf16.msra.mxu0 %v1433
      %1445 = vmatpush.bf16.msra.mxu0 %v1432
      %1446 = vmatpush.bf16.msra.mxu0 %v1431
      %1447 = vmatpush.bf16.msra.mxu0 %v1430
      %1448 = vmatpush.bf16.msra.mxu0 %v1429
      %1449 = vmatpush.bf16.msra.mxu0 %v1428
      %1450 = vmatpush.bf16.msra.mxu0 %v1427
      %1451 = vmatmul.bf16.gmra.mxu0 %v1387
      %v1452 = vpop.f32.mrf.mxu0
      %v1453 = vadd.f32 0.0, %v1452
      %v1454 = vpop.f32.mrf.mxu0
      %v1455 = vadd.f32 0.0, %v1454
      %1456 = vmatmul.bf16.gmra.mxu0 %v1388
      %v1457 = vpop.f32.mrf.mxu0
      %v1458 = vadd.f32 0.0, %v1457
      %v1459 = vpop.f32.mrf.mxu0
      %v1460 = vadd.f32 0.0, %v1459
      %1461 = vmatmul.bf16.gmra.mxu0 %v1389
      %v1462 = vpop.f32.mrf.mxu0
      %v1463 = vadd.f32 0.0, %v1462
      %v1464 = vpop.f32.mrf.mxu0
      %v1465 = vadd.f32 0.0, %v1464
      %1466 = vmatmul.bf16.gmra.mxu0 %v1390
      %v1467 = vpop.f32.mrf.mxu0
      %v1468 = vadd.f32 0.0, %v1467
      %v1469 = vpop.f32.mrf.mxu0
      %v1470 = vadd.f32 0.0, %v1469
      %1471 = vdwg.mxu0
      %v1472 = vadd.f32 %v1337, %v1453
      %v1473 = vadd.f32 %v1338, %v1455
      %v1474 = vadd.f32 %v1339, %v1458
      %v1475 = vadd.f32 %v1340, %v1460
      %v1476 = vadd.f32 %v1341, %v1463
      %v1477 = vadd.f32 %v1342, %v1465
      %v1478 = vadd.f32 %v1343, %v1468
      %v1479 = vadd.f32 %v1344, %v1470
      %v1480 = vld [vmem:[%s1210] sm:$0xf]
      %v1481 = vld [vmem:[%s1210 + $0x4] sm:$0x1]
      %v1482 = vld [vmem:[%s1210 + $0x8] sm:$0xf]
      %v1483 = vld [vmem:[%s1210 + $0xc] sm:$0x1]
      %v1484 = vld [vmem:[%s1210 + $0x10] sm:$0xf]
      %v1485 = vld [vmem:[%s1210 + $0x14] sm:$0x1]
      %v1486 = vld [vmem:[%s1210 + $0x18] sm:$0xf]
      %v1487 = vld [vmem:[%s1210 + $0x1c] sm:$0x1]
      %v1488 = vld [vmem:[%s1210 + $0x20] sm:$0xf]
      %v1489 = vld [vmem:[%s1210 + $0x24] sm:$0x1]
      %v1490 = vld [vmem:[%s1210 + $0x28] sm:$0xf]
      %v1491 = vld [vmem:[%s1210 + $0x2c] sm:$0x1]
      %v1492 = vld [vmem:[%s1210 + $0x30] sm:$0xf]
      %v1493 = vld [vmem:[%s1210 + $0x34] sm:$0x1]
      %v1494 = vld [vmem:[%s1210 + $0x38] sm:$0xf]
      %v1495 = vld [vmem:[%s1210 + $0x3c] sm:$0x1]
      %v1497 = vshrl.u32 %v1480, 16
      %v1499 = vrot.slane %v1497, 4
      %v1500 = vshll.u32 %v1480, 16
      %v1502 = vrot.slane %v1500, 5
      %v1503 = vor.u32 %v1499, %v1502
      %v1504 = vrot.slane %v1503, 4
      %v1506 = vshll.u32 %v1481, 16
      %v1508 = vrot.slane %v1506, 5
      %v1509 = vsel %vm463, %v1504, %v1508
      %v1511 = vshrl.u32 %v1482, 16
      %v1513 = vrot.slane %v1511, 4
      %v1514 = vshll.u32 %v1482, 16
      %v1516 = vrot.slane %v1514, 5
      %v1517 = vor.u32 %v1513, %v1516
      %v1518 = vrot.slane %v1517, 4
      %v1520 = vshll.u32 %v1483, 16
      %v1522 = vrot.slane %v1520, 5
      %v1523 = vsel %vm463, %v1518, %v1522
      %v1525 = vshrl.u32 %v1484, 16
      %v1527 = vrot.slane %v1525, 4
      %v1528 = vshll.u32 %v1484, 16
      %v1530 = vrot.slane %v1528, 5
      %v1531 = vor.u32 %v1527, %v1530
      %v1532 = vrot.slane %v1531, 4
      %v1534 = vshll.u32 %v1485, 16
      %v1536 = vrot.slane %v1534, 5
      %v1537 = vsel %vm463, %v1532, %v1536
      %v1539 = vshrl.u32 %v1486, 16
      %v1541 = vrot.slane %v1539, 4
      %v1542 = vshll.u32 %v1486, 16
      %v1544 = vrot.slane %v1542, 5
      %v1545 = vor.u32 %v1541, %v1544
      %v1546 = vrot.slane %v1545, 4
      %v1548 = vshll.u32 %v1487, 16
      %v1550 = vrot.slane %v1548, 5
      %v1551 = vsel %vm463, %v1546, %v1550
      %v1553 = vshrl.u32 %v1488, 16
      %v1555 = vrot.slane %v1553, 4
      %v1556 = vshll.u32 %v1488, 16
      %v1558 = vrot.slane %v1556, 5
      %v1559 = vor.u32 %v1555, %v1558
      %v1560 = vrot.slane %v1559, 4
      %v1562 = vshll.u32 %v1489, 16
      %v1564 = vrot.slane %v1562, 5
      %v1565 = vsel %vm463, %v1560, %v1564
      %v1567 = vshrl.u32 %v1490, 16
      %v1569 = vrot.slane %v1567, 4
      %v1570 = vshll.u32 %v1490, 16
      %v1572 = vrot.slane %v1570, 5
      %v1573 = vor.u32 %v1569, %v1572
      %v1574 = vrot.slane %v1573, 4
      %v1576 = vshll.u32 %v1491, 16
      %v1578 = vrot.slane %v1576, 5
      %v1579 = vsel %vm463, %v1574, %v1578
      %v1581 = vshrl.u32 %v1492, 16
      %v1583 = vrot.slane %v1581, 4
      %v1584 = vshll.u32 %v1492, 16
      %v1586 = vrot.slane %v1584, 5
      %v1587 = vor.u32 %v1583, %v1586
      %v1588 = vrot.slane %v1587, 4
      %v1590 = vshll.u32 %v1493, 16
      %v1592 = vrot.slane %v1590, 5
      %v1593 = vsel %vm463, %v1588, %v1592
      %v1595 = vshrl.u32 %v1494, 16
      %v1597 = vrot.slane %v1595, 4
      %v1598 = vshll.u32 %v1494, 16
      %v1600 = vrot.slane %v1598, 5
      %v1601 = vor.u32 %v1597, %v1600
      %v1602 = vrot.slane %v1601, 4
      %v1604 = vshll.u32 %v1495, 16
      %v1606 = vrot.slane %v1604, 5
      %v1607 = vsel %vm463, %v1602, %v1606
      %s1608 = scalar_lea.vmem %s1, 512
      %v1609 = vld [vmem:[%s1608] sm:$0xf]
      %v1610 = vld [vmem:[%s1608 + $0x4] sm:$0xf]
      %v1611 = vld [vmem:[%s1608 + $0x8] sm:$0xf]
      %v1612 = vld [vmem:[%s1608 + $0xc] sm:$0xf]
      %v1613 = vld [vmem:[%s1608 + $0x10] sm:$0xf]
      %v1614 = vld [vmem:[%s1608 + $0x14] sm:$0xf]
      %v1615 = vld [vmem:[%s1608 + $0x18] sm:$0xf]
      %v1616 = vld [vmem:[%s1608 + $0x1c] sm:$0xf]
      %v1617 = vld [vmem:[%s1608 + $0x20] sm:$0xf]
      %v1618 = vld [vmem:[%s1608 + $0x24] sm:$0xf]
      %v1619 = vld [vmem:[%s1608 + $0x28] sm:$0xf]
      %v1620 = vld [vmem:[%s1608 + $0x2c] sm:$0xf]
      %v1621 = vld [vmem:[%s1608 + $0x30] sm:$0xf]
      %v1622 = vld [vmem:[%s1608 + $0x34] sm:$0xf]
      %v1623 = vld [vmem:[%s1608 + $0x38] sm:$0xf]
      %v1624 = vld [vmem:[%s1608 + $0x3c] sm:$0xf]
      %v1625 = vunpack.c.l.b16 %v1509
      %v1626 = vunpack.c.l.b16 %v1523
      %v1627 = vunpack.c.l.b16 %v1537
      %v1628 = vunpack.c.l.b16 %v1551
      %v1629 = vunpack.c.l.b16 %v1565
      %v1630 = vunpack.c.l.b16 %v1579
      %v1631 = vunpack.c.l.b16 %v1593
      %v1632 = vunpack.c.l.b16 %v1607
      %v1633 = vpack.c.b16 %v1626, %v1625
      %v1634 = vpack.c.b16 %v1628, %v1627
      %v1635 = vpack.c.b16 %v1630, %v1629
      %v1636 = vpack.c.b16 %v1632, %v1631
      %v1657 = vunpack.c.l.b16 %v1609
      %v1658 = vunpack.c.l.b16 %v1610
      %v1659 = vunpack.c.l.b16 %v1611
      %v1660 = vunpack.c.l.b16 %v1612
      %v1661 = vunpack.c.l.b16 %v1613
      %v1662 = vunpack.c.l.b16 %v1614
      %v1663 = vunpack.c.l.b16 %v1615
      %v1664 = vunpack.c.l.b16 %v1616
      %v1665 = vunpack.c.l.b16 %v1617
      %v1666 = vunpack.c.l.b16 %v1618
      %v1667 = vunpack.c.l.b16 %v1619
      %v1668 = vunpack.c.l.b16 %v1620
      %v1669 = vunpack.c.l.b16 %v1621
      %v1670 = vunpack.c.l.b16 %v1622
      %v1671 = vunpack.c.l.b16 %v1623
      %v1672 = vunpack.c.l.b16 %v1624
      %v1673 = vpack.c.b16 %v1658, %v1657
      %v1674 = vpack.c.b16 %v1660, %v1659
      %v1675 = vpack.c.b16 %v1662, %v1661
      %v1676 = vpack.c.b16 %v1664, %v1663
      %v1677 = vpack.c.b16 %v1666, %v1665
      %v1678 = vpack.c.b16 %v1668, %v1667
      %v1679 = vpack.c.b16 %v1670, %v1669
      %v1680 = vpack.c.b16 %v1672, %v1671
      %1689 = vmatpush.bf16.msra.mxu0 %v1680
      %1690 = vmatpush.bf16.msra.mxu0 %v1679
      %1691 = vmatpush.bf16.msra.mxu0 %v1678
      %1692 = vmatpush.bf16.msra.mxu0 %v1677
      %1693 = vmatpush.bf16.msra.mxu0 %v1676
      %1694 = vmatpush.bf16.msra.mxu0 %v1675
      %1695 = vmatpush.bf16.msra.mxu0 %v1674
      %1696 = vmatpush.bf16.msra.mxu0 %v1673
      %1697 = vmatmul.bf16.gmra.mxu0 %v1633
      %v1698 = vpop.f32.mrf.mxu0
      %v1699 = vadd.f32 0.0, %v1698
      %v1700 = vpop.f32.mrf.mxu0
      %v1701 = vadd.f32 0.0, %v1700
      %1702 = vmatmul.bf16.gmra.mxu0 %v1634
      %v1703 = vpop.f32.mrf.mxu0
      %v1704 = vadd.f32 0.0, %v1703
      %v1705 = vpop.f32.mrf.mxu0
      %v1706 = vadd.f32 0.0, %v1705
      %1707 = vmatmul.bf16.gmra.mxu0 %v1635
      %v1708 = vpop.f32.mrf.mxu0
      %v1709 = vadd.f32 0.0, %v1708
      %v1710 = vpop.f32.mrf.mxu0
      %v1711 = vadd.f32 0.0, %v1710
      %1712 = vmatmul.bf16.gmra.mxu0 %v1636
      %v1713 = vpop.f32.mrf.mxu0
      %v1714 = vadd.f32 0.0, %v1713
      %v1715 = vpop.f32.mrf.mxu0
      %v1716 = vadd.f32 0.0, %v1715
      %1717 = vdwg.mxu0
      %v1718 = vadd.f32 %v1472, %v1699
      %v1719 = vadd.f32 %v1473, %v1701
      %v1720 = vadd.f32 %v1474, %v1704
      %v1721 = vadd.f32 %v1475, %v1706
      %v1722 = vadd.f32 %v1476, %v1709
      %v1723 = vadd.f32 %v1477, %v1711
      %v1724 = vadd.f32 %v1478, %v1714
      %v1725 = vadd.f32 %v1479, %v1716
      %1726 = vst [vmem:[%s192] sm:$0xff] %v1718
      %1727 = vst [vmem:[%s192 + $0x8] sm:$0xff] %v1719
      %1728 = vst [vmem:[%s192 + $0x10] sm:$0xff] %v1720
      %1729 = vst [vmem:[%s192 + $0x18] sm:$0xff] %v1721
      %1730 = vst [vmem:[%s192 + $0x20] sm:$0xff] %v1722
      %1731 = vst [vmem:[%s192 + $0x28] sm:$0xff] %v1723
      %1732 = vst [vmem:[%s192 + $0x30] sm:$0xff] %v1724
      %1733 = vst [vmem:[%s192 + $0x38] sm:$0xff] %v1725
      %p1734 = scmp.eq.s32.totalorder %s16, 0
      // Predicated region
      $region29: #{bottleneck_forward.8} parent=27 // pred_check
        %p1735 = pneg %p1734
      $region30: #{bottleneck_forward.8} parent=27 // pred_check_branch
        %1737 = sbr.rel (%p1735) target = $region32
      $region31: #{bottleneck_forward.8} parent=27 // pred_region
        %1738 = vst [vmem:[%s3] sm:$0x1] 0.0
        %1739 = vst [vmem:[%s4] sm:$0x1] 0.0
      $region32: #{bottleneck_forward.8} parent=27 // pred_fallthru
        _
      %v1740 = vld [vmem:[%s3] sm:$0x1]
      %v1741 = vadd.f32 %v1718, %v1719
      %v1742 = vadd.f32 %v1741, %v1720
      %v1743 = vadd.f32 %v1742, %v1721
      %v1744 = vadd.f32 %v1743, %v1722
      %v1745 = vadd.f32 %v1744, %v1723
      %v1746 = vadd.f32 %v1745, %v1724
      %v1747 = vadd.f32 %v1746, %v1725
      %v1748 = vrot.slane %v1747, 4
      %v1749 = vadd.f32 %v1747, %v1748
      %v1750 = vrot.slane %v1749, 2
      %v1751 = vadd.f32 %v1749, %v1750
      %v1752 = vrot.slane %v1751, 1
      %v1753 = vadd.f32 %v1751, %v1752
      %v1754 = vadd.f32 %v1740, %v1753
      %1755 = vst [vmem:[%s3] sm:$0x1] %v1754
      %v1756 = vld [vmem:[%s4] sm:$0x1]
      %v1757 = vmul.f32 %v1718, %v1718
      %v1758 = vmul.f32 %v1719, %v1719
      %v1759 = vmul.f32 %v1720, %v1720
      %v1760 = vmul.f32 %v1721, %v1721
      %v1761 = vmul.f32 %v1722, %v1722
      %v1762 = vmul.f32 %v1723, %v1723
      %v1763 = vmul.f32 %v1724, %v1724
      %v1764 = vmul.f32 %v1725, %v1725
      %v1765 = vadd.f32 %v1757, %v1758
      %v1766 = vadd.f32 %v1765, %v1759
      %v1767 = vadd.f32 %v1766, %v1760
      %v1768 = vadd.f32 %v1767, %v1761
      %v1769 = vadd.f32 %v1768, %v1762
      %v1770 = vadd.f32 %v1769, %v1763
      %v1771 = vadd.f32 %v1770, %v1764
      %v1772 = vrot.slane %v1771, 4
      %v1773 = vadd.f32 %v1771, %v1772
      %v1774 = vrot.slane %v1773, 2
      %v1775 = vadd.f32 %v1773, %v1774
      %v1776 = vrot.slane %v1775, 1
      %v1777 = vadd.f32 %v1775, %v1776
      %v1778 = vadd.f32 %v1756, %v1777
      %1779 = vst [vmem:[%s4] sm:$0x1] %v1778
      %p1780 = scmp.lt.s32.totalorder %s16, 1
      %s1781 = scalar_select %p1780, %s16, 1
      %s1782 = smul.addr %s1781, 8
      %s1783 = smul.addr %s1782, 8
      %s1784 = scalar_lea.vmem %s2, %s1783
      // Predicated region
      $region33: #{bottleneck_forward.8} parent=27 // pred_check
        %p1785 = pneg %p81
      $region34: #{bottleneck_forward.8} parent=27 // pred_check_branch
        %1787 = sbr.rel (%p1785) target = $region36
      $region35: #{bottleneck_forward.8} parent=27 // pred_region
        _
      $region36: #{bottleneck_forward.8} parent=27 // pred_fallthru
        _
      // Predicated region
      $region37: #{bottleneck_forward.8} parent=27 // pred_check
        %p1788 = pneg %p102
      $region38: #{bottleneck_forward.8} parent=27 // pred_check_branch
        %1790 = sbr.rel (%p1788) target = $region40
      $region39: #{bottleneck_forward.8} parent=27 // pred_region
        _
      $region40: #{bottleneck_forward.8} parent=27 // pred_fallthru
        _
      // Predicated region
      $region41: #{bottleneck_forward.8} parent=27 // pred_check
        %p1791 = pneg %p123
      $region42: #{bottleneck_forward.8} parent=27 // pred_check_branch
        %1793 = sbr.rel (%p1791) target = $region44
      $region43: #{bottleneck_forward.8} parent=27 // pred_region
        _
      $region44: #{bottleneck_forward.8} parent=27 // pred_fallthru
        _
      // Predicated region
      $region45: #{bottleneck_forward.8} parent=27 // pred_check
        %p1794 = pneg %p102
      $region46: #{bottleneck_forward.8} parent=27 // pred_check_branch
        %1796 = sbr.rel (%p1794) target = $region48
      $region47: #{bottleneck_forward.8} parent=27 // pred_region
        _
      $region48: #{bottleneck_forward.8} parent=27 // pred_fallthru
        _
      // Predicated region
      $region49: #{bottleneck_forward.8} parent=27 // pred_check
        %p1797 = pneg %p123
      $region50: #{bottleneck_forward.8} parent=27 // pred_check_branch
        %1799 = sbr.rel (%p1797) target = $region52
      $region51: #{bottleneck_forward.8} parent=27 // pred_region
        _
      $region52: #{bottleneck_forward.8} parent=27 // pred_fallthru
        _
    $region28: #{bottleneck_forward.8} parent=5 // pred_fallthru
      _
    %p1800 = scmp.le.s32.totalorder 2, %s11
    // Predicated region
    $region53: #{bottleneck_forward.8} parent=5 // pred_check
      %p1801 = pneg %p1800
    $region54: #{bottleneck_forward.8} parent=5 // pred_check_branch
      %1803 = sbr.rel (%p1801) target = $region56
    $region55: #{bottleneck_forward.8} parent=5 // pred_region
      %s1804 = ssub.s32 %s11, 2
      // Predicated region
      $region57: #{bottleneck_forward.8} parent=55 // pred_check
        %p1805 = pneg %p87
      $region58: #{bottleneck_forward.8} parent=55 // pred_check_branch
        %1807 = sbr.rel (%p1805) target = $region60
      $region59: #{bottleneck_forward.8} parent=55 // pred_region
        %p1808 = scmp.lt.s32.totalorder %s17, 1
        %s1809 = scalar_select %p1808, %s17, 1
        %s1810 = smul.addr %s1809, 8
        %s1811 = smul.addr %s1810, 8
        %s1812 = scalar_lea.vmem %s2, %s1811
      $region60: #{bottleneck_forward.8} parent=55 // pred_fallthru
        _
    $region56: #{bottleneck_forward.8} parent=5 // pred_fallthru
      _
  $region6: #{bottleneck_forward.8} parent=0 // loop_footer
    %s15 = sadd.s32 1, %s11
  $region7: #{bottleneck_forward.8} parent=0 // loop_footer_branch
    %10 = sbr.rel target = $region3
  $region8: #{bottleneck_forward.8} parent=0 // loop_exit
    _

// kernel: bottleneck_forward.10
$region0: #{bottleneck_forward.10}
  #allocation0 [shape = 'u32[]', space=smem, size = 0x4, offset = 0x4, fixed_abs, tag = 'smem constant byte address 0x4 - core index']
  #allocation1 [shape = 'u32[72,128]{1,0:T(1,128)}', space=vmem, size = 0x9000, scoped, tag = 'internal scratch']
  %s0 = inlined_call_operand.vmem [shape: bf16[128,128], index: 0, kind: input, shape index: {}]
  %s1 = inlined_call_operand.vmem [shape: bf16[128,128], index: 1, kind: input, shape index: {}]
  %s2 = inlined_call_operand.vmem [shape: f32[128,128], index: 2, kind: output, shape index: {0}]
  %s3 = inlined_call_operand.vmem [shape: f32[1,128], index: 3, kind: output, shape index: {1}]
  %s4 = inlined_call_operand.vmem [shape: f32[1,128], index: 4, kind: output, shape index: {2}]
  %5 = xla_tuple %s2, %s3, %s4
  %s6 = sld [smem:[#allocation0]]
  $region38: #{bottleneck_forward.10} parent=0
    _
  %s8 = ssub.s32 1, %s6
  %s9 = scalar_select 0, %s8, %s6
  // Predicated region
  $region2: #{bottleneck_forward.10} parent=0 // pred_check
    _
  $region3: #{bottleneck_forward.10} parent=0 // pred_check_branch
    %11 = sbr.rel (0) target = $region5
  $region4: #{bottleneck_forward.10} parent=0 // pred_region
    _
  $region5: #{bottleneck_forward.10} parent=0 // pred_fallthru
    _
  // Predicated region
  $region6: #{bottleneck_forward.10} parent=0 // pred_check
    _
  $region7: #{bottleneck_forward.10} parent=0 // pred_check_branch
    %13 = sbr.rel (0) target = $region9
  $region8: #{bottleneck_forward.10} parent=0 // pred_region
    _
  $region9: #{bottleneck_forward.10} parent=0 // pred_fallthru
    _
  %v14 = vld [vmem:[%s0] sm:$0xf]
  %v15 = vld [vmem:[%s0 + $0x4] sm:$0xf]
  %v16 = vld [vmem:[%s0 + $0x8] sm:$0xf]
  %v17 = vld [vmem:[%s0 + $0xc] sm:$0xf]
  %v18 = vld [vmem:[%s0 + $0x10] sm:$0xf]
  %v19 = vld [vmem:[%s0 + $0x14] sm:$0xf]
  %v20 = vld [vmem:[%s0 + $0x18] sm:$0xf]
  %v21 = vld [vmem:[%s0 + $0x1c] sm:$0xf]
  %v22 = vld [vmem:[%s0 + $0x20] sm:$0xf]
  %v23 = vld [vmem:[%s0 + $0x24] sm:$0xf]
  %v24 = vld [vmem:[%s0 + $0x28] sm:$0xf]
  %v25 = vld [vmem:[%s0 + $0x2c] sm:$0xf]
  %v26 = vld [vmem:[%s0 + $0x30] sm:$0xf]
  %v27 = vld [vmem:[%s0 + $0x34] sm:$0xf]
  %v28 = vld [vmem:[%s0 + $0x38] sm:$0xf]
  %v29 = vld [vmem:[%s0 + $0x3c] sm:$0xf]
  %v30 = vld [vmem:[%s1] sm:$0xf]
  %v31 = vld [vmem:[%s1 + $0x4] sm:$0xf]
  %v32 = vld [vmem:[%s1 + $0x8] sm:$0xf]
  %v33 = vld [vmem:[%s1 + $0xc] sm:$0xf]
  %v34 = vld [vmem:[%s1 + $0x10] sm:$0xf]
  %v35 = vld [vmem:[%s1 + $0x14] sm:$0xf]
  %v36 = vld [vmem:[%s1 + $0x18] sm:$0xf]
  %v37 = vld [vmem:[%s1 + $0x1c] sm:$0xf]
  %v38 = vld [vmem:[%s1 + $0x20] sm:$0xf]
  %v39 = vld [vmem:[%s1 + $0x24] sm:$0xf]
  %v40 = vld [vmem:[%s1 + $0x28] sm:$0xf]
  %v41 = vld [vmem:[%s1 + $0x2c] sm:$0xf]
  %v42 = vld [vmem:[%s1 + $0x30] sm:$0xf]
  %v43 = vld [vmem:[%s1 + $0x34] sm:$0xf]
  %v44 = vld [vmem:[%s1 + $0x38] sm:$0xf]
  %v45 = vld [vmem:[%s1 + $0x3c] sm:$0xf]
  %v62 = vunpack.c.l.b16 %v14
  %v63 = vunpack.c.l.b16 %v15
  %v64 = vunpack.c.l.b16 %v16
  %v65 = vunpack.c.l.b16 %v17
  %v66 = vunpack.c.l.b16 %v18
  %v67 = vunpack.c.l.b16 %v19
  %v68 = vunpack.c.l.b16 %v20
  %v69 = vunpack.c.l.b16 %v21
  %v70 = vunpack.c.l.b16 %v22
  %v71 = vunpack.c.l.b16 %v23
  %v72 = vunpack.c.l.b16 %v24
  %v73 = vunpack.c.l.b16 %v25
  %v74 = vunpack.c.l.b16 %v26
  %v75 = vunpack.c.l.b16 %v27
  %v76 = vunpack.c.l.b16 %v28
  %v77 = vunpack.c.l.b16 %v29
  %v78 = vpack.c.b16 %v63, %v62
  %v79 = vpack.c.b16 %v65, %v64
  %v80 = vpack.c.b16 %v67, %v66
  %v81 = vpack.c.b16 %v69, %v68
  %v82 = vpack.c.b16 %v71, %v70
  %v83 = vpack.c.b16 %v73, %v72
  %v84 = vpack.c.b16 %v75, %v74
  %v85 = vpack.c.b16 %v77, %v76
  %v110 = vunpack.c.l.b16 %v30
  %v111 = vunpack.c.l.b16 %v31
  %v112 = vunpack.c.l.b16 %v32
  %v113 = vunpack.c.l.b16 %v33
  %v114 = vunpack.c.l.b16 %v34
  %v115 = vunpack.c.l.b16 %v35
  %v116 = vunpack.c.l.b16 %v36
  %v117 = vunpack.c.l.b16 %v37
  %v118 = vunpack.c.l.b16 %v38
  %v119 = vunpack.c.l.b16 %v39
  %v120 = vunpack.c.l.b16 %v40
  %v121 = vunpack.c.l.b16 %v41
  %v122 = vunpack.c.l.b16 %v42
  %v123 = vunpack.c.l.b16 %v43
  %v124 = vunpack.c.l.b16 %v44
  %v125 = vunpack.c.l.b16 %v45
  %v126 = vpack.c.b16 %v111, %v110
  %v127 = vpack.c.b16 %v113, %v112
  %v128 = vpack.c.b16 %v115, %v114
  %v129 = vpack.c.b16 %v117, %v116
  %v130 = vpack.c.b16 %v119, %v118
  %v131 = vpack.c.b16 %v121, %v120
  %v132 = vpack.c.b16 %v123, %v122
  %v133 = vpack.c.b16 %v125, %v124
  %142 = vmatpush.bf16.msra.mxu0 %v133
  %143 = vmatpush.bf16.msra.mxu0 %v132
  %144 = vmatpush.bf16.msra.mxu0 %v131
  %145 = vmatpush.bf16.msra.mxu0 %v130
  %146 = vmatpush.bf16.msra.mxu0 %v129
  %147 = vmatpush.bf16.msra.mxu0 %v128
  %148 = vmatpush.bf16.msra.mxu0 %v127
  %149 = vmatpush.bf16.msra.mxu0 %v126
  %150 = vmatmul.bf16.gmra.mxu0 %v78
  %v151 = vpop.f32.mrf.mxu0
  %v152 = vadd.f32 0.0, %v151
  %v153 = vpop.f32.mrf.mxu0
  %v154 = vadd.f32 0.0, %v153
  %155 = vmatmul.bf16.gmra.mxu0 %v79
  %v156 = vpop.f32.mrf.mxu0
  %v157 = vadd.f32 0.0, %v156
  %v158 = vpop.f32.mrf.mxu0
  %v159 = vadd.f32 0.0, %v158
  %160 = vmatmul.bf16.gmra.mxu0 %v80
  %v161 = vpop.f32.mrf.mxu0
  %v162 = vadd.f32 0.0, %v161
  %v163 = vpop.f32.mrf.mxu0
  %v164 = vadd.f32 0.0, %v163
  %165 = vmatmul.bf16.gmra.mxu0 %v81
  %v166 = vpop.f32.mrf.mxu0
  %v167 = vadd.f32 0.0, %v166
  %v168 = vpop.f32.mrf.mxu0
  %v169 = vadd.f32 0.0, %v168
  %170 = vmatmul.bf16.gmra.mxu0 %v82
  %v171 = vpop.f32.mrf.mxu0
  %v172 = vadd.f32 0.0, %v171
  %v173 = vpop.f32.mrf.mxu0
  %v174 = vadd.f32 0.0, %v173
  %175 = vmatmul.bf16.gmra.mxu0 %v83
  %v176 = vpop.f32.mrf.mxu0
  %v177 = vadd.f32 0.0, %v176
  %v178 = vpop.f32.mrf.mxu0
  %v179 = vadd.f32 0.0, %v178
  %180 = vmatmul.bf16.gmra.mxu0 %v84
  %v181 = vpop.f32.mrf.mxu0
  %v182 = vadd.f32 0.0, %v181
  %v183 = vpop.f32.mrf.mxu0
  %v184 = vadd.f32 0.0, %v183
  %185 = vmatmul.bf16.gmra.mxu0 %v85
  %v186 = vpop.f32.mrf.mxu0
  %v187 = vadd.f32 0.0, %v186
  %v188 = vpop.f32.mrf.mxu0
  %v189 = vadd.f32 0.0, %v188
  %190 = vdwg.mxu0
  %191 = vst [vmem:[%s2] sm:$0xff] %v152
  %192 = vst [vmem:[%s2 + $0x8] sm:$0xff] %v154
  %193 = vst [vmem:[%s2 + $0x10] sm:$0xff] %v157
  %194 = vst [vmem:[%s2 + $0x18] sm:$0xff] %v159
  %195 = vst [vmem:[%s2 + $0x20] sm:$0xff] %v162
  %196 = vst [vmem:[%s2 + $0x28] sm:$0xff] %v164
  %197 = vst [vmem:[%s2 + $0x30] sm:$0xff] %v167
  %198 = vst [vmem:[%s2 + $0x38] sm:$0xff] %v169
  %199 = vst [vmem:[%s2 + $0x40] sm:$0xff] %v172
  %200 = vst [vmem:[%s2 + $0x48] sm:$0xff] %v174
  %201 = vst [vmem:[%s2 + $0x50] sm:$0xff] %v177
  %202 = vst [vmem:[%s2 + $0x58] sm:$0xff] %v179
  %203 = vst [vmem:[%s2 + $0x60] sm:$0xff] %v182
  %204 = vst [vmem:[%s2 + $0x68] sm:$0xff] %v184
  %205 = vst [vmem:[%s2 + $0x70] sm:$0xff] %v187
  %206 = vst [vmem:[%s2 + $0x78] sm:$0xff] %v189
  %p207 = scmp.eq.s32.totalorder 0, 0
  // Predicated region
  $region10: #{bottleneck_forward.10} parent=0 // pred_check
    %p208 = pneg %p207
  $region11: #{bottleneck_forward.10} parent=0 // pred_check_branch
    %210 = sbr.rel (%p208) target = $region13
  $region12: #{bottleneck_forward.10} parent=0 // pred_region
    %211 = vst [vmem:[%s3] sm:$0x1] 0.0
    %212 = vst [vmem:[%s4] sm:$0x1] 0.0
  $region13: #{bottleneck_forward.10} parent=0 // pred_fallthru
    _
  %v213 = vld [vmem:[%s3] sm:$0x1]
  %v214 = vadd.f32 %v152, %v154
  %v215 = vadd.f32 %v214, %v157
  %v216 = vadd.f32 %v215, %v159
  %v217 = vadd.f32 %v216, %v162
  %v218 = vadd.f32 %v217, %v164
  %v219 = vadd.f32 %v218, %v167
  %v220 = vadd.f32 %v219, %v169
  %v221 = vadd.f32 %v220, %v172
  %v222 = vadd.f32 %v221, %v174
  %v223 = vadd.f32 %v222, %v177
  %v224 = vadd.f32 %v223, %v179
  %v225 = vadd.f32 %v224, %v182
  %v226 = vadd.f32 %v225, %v184
  %v227 = vadd.f32 %v226, %v187
  %v228 = vadd.f32 %v227, %v189
  %v229 = vrot.slane %v228, 4
  %v230 = vadd.f32 %v228, %v229
  %v231 = vrot.slane %v230, 2
  %v232 = vadd.f32 %v230, %v231
  %v233 = vrot.slane %v232, 1
  %v234 = vadd.f32 %v232, %v233
  %v235 = vadd.f32 %v213, %v234
  %236 = vst [vmem:[%s3] sm:$0x1] %v235
  %v237 = vld [vmem:[%s4] sm:$0x1]
  %v238 = vmul.f32 %v152, %v152
  %v239 = vmul.f32 %v154, %v154
  %v240 = vmul.f32 %v157, %v157
  %v241 = vmul.f32 %v159, %v159
  %v242 = vmul.f32 %v162, %v162
  %v243 = vmul.f32 %v164, %v164
  %v244 = vmul.f32 %v167, %v167
  %v245 = vmul.f32 %v169, %v169
  %v246 = vmul.f32 %v172, %v172
  %v247 = vmul.f32 %v174, %v174
  %v248 = vmul.f32 %v177, %v177
  %v249 = vmul.f32 %v179, %v179
  %v250 = vmul.f32 %v182, %v182
  %v251 = vmul.f32 %v184, %v184
  %v252 = vmul.f32 %v187, %v187
  %v253 = vmul.f32 %v189, %v189
  %v254 = vadd.f32 %v238, %v239
  %v255 = vadd.f32 %v254, %v240
  %v256 = vadd.f32 %v255, %v241
  %v257 = vadd.f32 %v256, %v242
  %v258 = vadd.f32 %v257, %v243
  %v259 = vadd.f32 %v258, %v244
  %v260 = vadd.f32 %v259, %v245
  %v261 = vadd.f32 %v260, %v246
  %v262 = vadd.f32 %v261, %v247
  %v263 = vadd.f32 %v262, %v248
  %v264 = vadd.f32 %v263, %v249
  %v265 = vadd.f32 %v264, %v250
  %v266 = vadd.f32 %v265, %v251
  %v267 = vadd.f32 %v266, %v252
  %v268 = vadd.f32 %v267, %v253
  %v269 = vrot.slane %v268, 4
  %v270 = vadd.f32 %v268, %v269
  %v271 = vrot.slane %v270, 2
  %v272 = vadd.f32 %v270, %v271
  %v273 = vrot.slane %v272, 1
  %v274 = vadd.f32 %v272, %v273
  %v275 = vadd.f32 %v237, %v274
  %276 = vst [vmem:[%s4] sm:$0x1] %v275
  // Predicated region
  $region14: #{bottleneck_forward.10} parent=0 // pred_check
    _
  $region15: #{bottleneck_forward.10} parent=0 // pred_check_branch
    %278 = sbr.rel (0) target = $region17
  $region16: #{bottleneck_forward.10} parent=0 // pred_region
    _
  $region17: #{bottleneck_forward.10} parent=0 // pred_fallthru
    _
  // Predicated region
  $region18: #{bottleneck_forward.10} parent=0 // pred_check
    _
  $region19: #{bottleneck_forward.10} parent=0 // pred_check_branch
    %280 = sbr.rel (0) target = $region21
  $region20: #{bottleneck_forward.10} parent=0 // pred_region
    _
  $region21: #{bottleneck_forward.10} parent=0 // pred_fallthru
    _
  // Predicated region
  $region22: #{bottleneck_forward.10} parent=0 // pred_check
    _
  $region23: #{bottleneck_forward.10} parent=0 // pred_check_branch
    %282 = sbr.rel (0) target = $region25
  $region24: #{bottleneck_forward.10} parent=0 // pred_region
    _
  $region25: #{bottleneck_forward.10} parent=0 // pred_fallthru
    _
  // Predicated region
  $region26: #{bottleneck_forward.10} parent=0 // pred_check
    _
  $region27: #{bottleneck_forward.10} parent=0 // pred_check_branch
    %284 = sbr.rel (0) target = $region29
  $region28: #{bottleneck_forward.10} parent=0 // pred_region
    _
  $region29: #{bottleneck_forward.10} parent=0 // pred_fallthru
    _
  // Predicated region
  $region30: #{bottleneck_forward.10} parent=0 // pred_check
    _
  $region31: #{bottleneck_forward.10} parent=0 // pred_check_branch
    %286 = sbr.rel (0) target = $region33
  $region32: #{bottleneck_forward.10} parent=0 // pred_region
    _
  $region33: #{bottleneck_forward.10} parent=0 // pred_fallthru
    _
  // Predicated region
  $region34: #{bottleneck_forward.10} parent=0 // pred_check
    _
  $region35: #{bottleneck_forward.10} parent=0 // pred_check_branch
    %288 = sbr.rel (0) target = $region37
  $region36: #{bottleneck_forward.10} parent=0 // pred_region
    _
  $region37: #{bottleneck_forward.10} parent=0 // pred_fallthru
    _

// kernel: bottleneck_forward.11
$region0: #{bottleneck_forward.11}
  #allocation0 [shape = 'u32[]', space=smem, size = 0x4, offset = 0x4, fixed_abs, tag = 'smem constant byte address 0x4 - core index']
  #allocation1 [shape = 'u32[72,128]{1,0:T(1,128)}', space=vmem, size = 0x9000, scoped, tag = 'internal scratch']
  %s0 = inlined_call_operand.vmem [shape: f32[128,128], index: 0, kind: input, shape index: {}]
  %s1 = inlined_call_operand.vmem [shape: f32[1,128], index: 1, kind: input, shape index: {}]
  %s2 = inlined_call_operand.vmem [shape: f32[1,128], index: 2, kind: input, shape index: {}]
  %s3 = inlined_call_operand.vmem [shape: f32[1,128], index: 3, kind: input, shape index: {}]
  %s4 = inlined_call_operand.vmem [shape: f32[1,128], index: 4, kind: input, shape index: {}]
  %s5 = inlined_call_operand.vmem [shape: f32[128,128], index: 5, kind: input, shape index: {}]
  %s6 = inlined_call_operand.vmem [shape: f32[1,128], index: 6, kind: input, shape index: {}]
  %s7 = inlined_call_operand.vmem [shape: f32[1,128], index: 7, kind: input, shape index: {}]
  %s8 = inlined_call_operand.vmem [shape: f32[1,128], index: 8, kind: input, shape index: {}]
  %s9 = inlined_call_operand.vmem [shape: f32[1,128], index: 9, kind: input, shape index: {}]
  %s10 = inlined_call_operand.hbm [shape: f32[128,128], index: 10, kind: output, shape index: {}]
  %s11 = sld [smem:[#allocation0]]
  $region50: #{bottleneck_forward.11} parent=0
    _
  %s13 = ssub.s32 1, %s11
  %s14 = scalar_select 0, %s13, %s11
  $region1: #{bottleneck_forward.11} parent=0
    #allocation2 [shape = 'u8[65536]{0}', space=vmem, size = 0x10000, scoped, tag = 'output window, operand 0, single buffered']
    #allocation3 [shape = 's32[1]{0}', space=sflag, size = 0x4, scoped, tag = 'scoped memory for bottleneck_forward.11']
    %15 = vsyncpa [#allocation3], 0
    // Predicated region
    $region2: #{bottleneck_forward.11} parent=1 // pred_check
      _
    $region3: #{bottleneck_forward.11} parent=1 // pred_check_branch
      %17 = sbr.rel (0) target = $region5
    $region4: #{bottleneck_forward.11} parent=1 // pred_region
      _
    $region5: #{bottleneck_forward.11} parent=1 // pred_fallthru
      _
    // Predicated region
    $region6: #{bottleneck_forward.11} parent=1 // pred_check
      _
    $region7: #{bottleneck_forward.11} parent=1 // pred_check_branch
      %19 = sbr.rel (0) target = $region9
    $region8: #{bottleneck_forward.11} parent=1 // pred_region
      _
    $region9: #{bottleneck_forward.11} parent=1 // pred_fallthru
      _
    // Predicated region
    $region10: #{bottleneck_forward.11} parent=1 // pred_check
      _
    $region11: #{bottleneck_forward.11} parent=1 // pred_check_branch
      %21 = sbr.rel (0) target = $region13
    $region12: #{bottleneck_forward.11} parent=1 // pred_region
      _
    $region13: #{bottleneck_forward.11} parent=1 // pred_fallthru
      _
    // Predicated region
    $region14: #{bottleneck_forward.11} parent=1 // pred_check
      _
    $region15: #{bottleneck_forward.11} parent=1 // pred_check_branch
      %23 = sbr.rel (0) target = $region17
    $region16: #{bottleneck_forward.11} parent=1 // pred_region
      _
    $region17: #{bottleneck_forward.11} parent=1 // pred_fallthru
      _
    // Predicated region
    $region18: #{bottleneck_forward.11} parent=1 // pred_check
      _
    $region19: #{bottleneck_forward.11} parent=1 // pred_check_branch
      %25 = sbr.rel (0) target = $region21
    $region20: #{bottleneck_forward.11} parent=1 // pred_region
      _
    $region21: #{bottleneck_forward.11} parent=1 // pred_fallthru
      _
    // Predicated region
    $region22: #{bottleneck_forward.11} parent=1 // pred_check
      _
    $region23: #{bottleneck_forward.11} parent=1 // pred_check_branch
      %27 = sbr.rel (0) target = $region25
    $region24: #{bottleneck_forward.11} parent=1 // pred_region
      _
    $region25: #{bottleneck_forward.11} parent=1 // pred_fallthru
      _
    // Predicated region
    $region26: #{bottleneck_forward.11} parent=1 // pred_check
      _
    $region27: #{bottleneck_forward.11} parent=1 // pred_check_branch
      %29 = sbr.rel (0) target = $region29
    $region28: #{bottleneck_forward.11} parent=1 // pred_region
      _
    $region29: #{bottleneck_forward.11} parent=1 // pred_fallthru
      _
    // Predicated region
    $region30: #{bottleneck_forward.11} parent=1 // pred_check
      _
    $region31: #{bottleneck_forward.11} parent=1 // pred_check_branch
      %31 = sbr.rel (0) target = $region33
    $region32: #{bottleneck_forward.11} parent=1 // pred_region
      _
    $region33: #{bottleneck_forward.11} parent=1 // pred_fallthru
      _
    // Predicated region
    $region34: #{bottleneck_forward.11} parent=1 // pred_check
      _
    $region35: #{bottleneck_forward.11} parent=1 // pred_check_branch
      %33 = sbr.rel (0) target = $region37
    $region36: #{bottleneck_forward.11} parent=1 // pred_region
      _
    $region37: #{bottleneck_forward.11} parent=1 // pred_fallthru
      _
    // Predicated region
    $region38: #{bottleneck_forward.11} parent=1 // pred_check
      _
    $region39: #{bottleneck_forward.11} parent=1 // pred_check_branch
      %35 = sbr.rel (0) target = $region41
    $region40: #{bottleneck_forward.11} parent=1 // pred_region
      _
    $region41: #{bottleneck_forward.11} parent=1 // pred_fallthru
      _
    %v36 = vld [vmem:[%s0] sm:$0xff]
    %v37 = vld [vmem:[%s0 + $0x8] sm:$0xff]
    %v38 = vld [vmem:[%s0 + $0x10] sm:$0xff]
    %v39 = vld [vmem:[%s0 + $0x18] sm:$0xff]
    %v40 = vld [vmem:[%s0 + $0x20] sm:$0xff]
    %v41 = vld [vmem:[%s0 + $0x28] sm:$0xff]
    %v42 = vld [vmem:[%s0 + $0x30] sm:$0xff]
    %v43 = vld [vmem:[%s0 + $0x38] sm:$0xff]
    %v44 = vld [vmem:[%s0 + $0x40] sm:$0xff]
    %v45 = vld [vmem:[%s0 + $0x48] sm:$0xff]
    %v46 = vld [vmem:[%s0 + $0x50] sm:$0xff]
    %v47 = vld [vmem:[%s0 + $0x58] sm:$0xff]
    %v48 = vld [vmem:[%s0 + $0x60] sm:$0xff]
    %v49 = vld [vmem:[%s0 + $0x68] sm:$0xff]
    %v50 = vld [vmem:[%s0 + $0x70] sm:$0xff]
    %v51 = vld [vmem:[%s0 + $0x78] sm:$0xff]
    %v52 = vld [vmem:[%s1] sm:$0x1]
    %v53 = vld [vmem:[%s2] sm:$0x1]
    %v54 = vld [vmem:[%s3] sm:$0x1]
    %v55 = vld [vmem:[%s4] sm:$0x1]
    %v56 = vmul.f32 %v52, 0.0078125
    %v57 = vmul.f32 %v53, 0.0078125
    %v58 = vmul.f32 %v56, %v56
    %v59 = vsub.f32 %v57, %v58
    %v60 = vmax.f32 %v59, 0.0
    %v62 = vperm.slane %v56, 0
    %v64 = vsub.f32 %v36, %v62
    %v65 = vsub.f32 %v37, %v62
    %v66 = vsub.f32 %v38, %v62
    %v67 = vsub.f32 %v39, %v62
    %v68 = vsub.f32 %v40, %v62
    %v69 = vsub.f32 %v41, %v62
    %v70 = vsub.f32 %v42, %v62
    %v71 = vsub.f32 %v43, %v62
    %v72 = vsub.f32 %v44, %v62
    %v73 = vsub.f32 %v45, %v62
    %v74 = vsub.f32 %v46, %v62
    %v75 = vsub.f32 %v47, %v62
    %v76 = vsub.f32 %v48, %v62
    %v77 = vsub.f32 %v49, %v62
    %v78 = vsub.f32 %v50, %v62
    %v79 = vsub.f32 %v51, %v62
    %v80 = vadd.f32 %v60, 1e-05
    %v81 = vrsqrt.pop %v80
    %v82 = vmul.f32 %v81, %v80
    %v83 = vmul.f32 %v82, %v81
    %v84 = vmul.f32 0.5, %v83
    %v85 = vsub.f32 1.5, %v84
    %v86 = vmul.f32 %v81, %v85
    %vm87 = vweird.f32 %v80
    %vm88 = vweird.f32 %v81
    %vm89 = vmor %vm87, %vm88
    %v90 = vsel %vm89, %v81, %v86
    %v91 = vmul.f32 %v90, %v54
    %v93 = vperm.slane %v91, 0
    %v95 = vmul.f32 %v64, %v93
    %v96 = vmul.f32 %v65, %v93
    %v97 = vmul.f32 %v66, %v93
    %v98 = vmul.f32 %v67, %v93
    %v99 = vmul.f32 %v68, %v93
    %v100 = vmul.f32 %v69, %v93
    %v101 = vmul.f32 %v70, %v93
    %v102 = vmul.f32 %v71, %v93
    %v103 = vmul.f32 %v72, %v93
    %v104 = vmul.f32 %v73, %v93
    %v105 = vmul.f32 %v74, %v93
    %v106 = vmul.f32 %v75, %v93
    %v107 = vmul.f32 %v76, %v93
    %v108 = vmul.f32 %v77, %v93
    %v109 = vmul.f32 %v78, %v93
    %v110 = vmul.f32 %v79, %v93
    %v112 = vperm.slane %v55, 0
    %v114 = vadd.f32 %v95, %v112
    %v115 = vadd.f32 %v96, %v112
    %v116 = vadd.f32 %v97, %v112
    %v117 = vadd.f32 %v98, %v112
    %v118 = vadd.f32 %v99, %v112
    %v119 = vadd.f32 %v100, %v112
    %v120 = vadd.f32 %v101, %v112
    %v121 = vadd.f32 %v102, %v112
    %v122 = vadd.f32 %v103, %v112
    %v123 = vadd.f32 %v104, %v112
    %v124 = vadd.f32 %v105, %v112
    %v125 = vadd.f32 %v106, %v112
    %v126 = vadd.f32 %v107, %v112
    %v127 = vadd.f32 %v108, %v112
    %v128 = vadd.f32 %v109, %v112
    %v129 = vadd.f32 %v110, %v112
    %v130 = vld [vmem:[%s5] sm:$0xff]
    %v131 = vld [vmem:[%s5 + $0x8] sm:$0xff]
    %v132 = vld [vmem:[%s5 + $0x10] sm:$0xff]
    %v133 = vld [vmem:[%s5 + $0x18] sm:$0xff]
    %v134 = vld [vmem:[%s5 + $0x20] sm:$0xff]
    %v135 = vld [vmem:[%s5 + $0x28] sm:$0xff]
    %v136 = vld [vmem:[%s5 + $0x30] sm:$0xff]
    %v137 = vld [vmem:[%s5 + $0x38] sm:$0xff]
    %v138 = vld [vmem:[%s5 + $0x40] sm:$0xff]
    %v139 = vld [vmem:[%s5 + $0x48] sm:$0xff]
    %v140 = vld [vmem:[%s5 + $0x50] sm:$0xff]
    %v141 = vld [vmem:[%s5 + $0x58] sm:$0xff]
    %v142 = vld [vmem:[%s5 + $0x60] sm:$0xff]
    %v143 = vld [vmem:[%s5 + $0x68] sm:$0xff]
    %v144 = vld [vmem:[%s5 + $0x70] sm:$0xff]
    %v145 = vld [vmem:[%s5 + $0x78] sm:$0xff]
    %v146 = vld [vmem:[%s6] sm:$0x1]
    %v147 = vld [vmem:[%s7] sm:$0x1]
    %v148 = vld [vmem:[%s8] sm:$0x1]
    %v149 = vld [vmem:[%s9] sm:$0x1]
    %v150 = vmul.f32 %v146, 0.0078125
    %v151 = vmul.f32 %v147, 0.0078125
    %v152 = vmul.f32 %v150, %v150
    %v153 = vsub.f32 %v151, %v152
    %v154 = vmax.f32 %v153, 0.0
    %v156 = vperm.slane %v150, 0
    %v158 = vsub.f32 %v130, %v156
    %v159 = vsub.f32 %v131, %v156
    %v160 = vsub.f32 %v132, %v156
    %v161 = vsub.f32 %v133, %v156
    %v162 = vsub.f32 %v134, %v156
    %v163 = vsub.f32 %v135, %v156
    %v164 = vsub.f32 %v136, %v156
    %v165 = vsub.f32 %v137, %v156
    %v166 = vsub.f32 %v138, %v156
    %v167 = vsub.f32 %v139, %v156
    %v168 = vsub.f32 %v140, %v156
    %v169 = vsub.f32 %v141, %v156
    %v170 = vsub.f32 %v142, %v156
    %v171 = vsub.f32 %v143, %v156
    %v172 = vsub.f32 %v144, %v156
    %v173 = vsub.f32 %v145, %v156
    %v174 = vadd.f32 %v154, 1e-05
    %v175 = vrsqrt.pop %v174
    %v176 = vmul.f32 %v175, %v174
    %v177 = vmul.f32 %v176, %v175
    %v178 = vmul.f32 0.5, %v177
    %v179 = vsub.f32 1.5, %v178
    %v180 = vmul.f32 %v175, %v179
    %vm181 = vweird.f32 %v174
    %vm182 = vweird.f32 %v175
    %vm183 = vmor %vm181, %vm182
    %v184 = vsel %vm183, %v175, %v180
    %v185 = vmul.f32 %v184, %v148
    %v187 = vperm.slane %v185, 0
    %v189 = vmul.f32 %v158, %v187
    %v190 = vmul.f32 %v159, %v187
    %v191 = vmul.f32 %v160, %v187
    %v192 = vmul.f32 %v161, %v187
    %v193 = vmul.f32 %v162, %v187
    %v194 = vmul.f32 %v163, %v187
    %v195 = vmul.f32 %v164, %v187
    %v196 = vmul.f32 %v165, %v187
    %v197 = vmul.f32 %v166, %v187
    %v198 = vmul.f32 %v167, %v187
    %v199 = vmul.f32 %v168, %v187
    %v200 = vmul.f32 %v169, %v187
    %v201 = vmul.f32 %v170, %v187
    %v202 = vmul.f32 %v171, %v187
    %v203 = vmul.f32 %v172, %v187
    %v204 = vmul.f32 %v173, %v187
    %v206 = vperm.slane %v149, 0
    %v208 = vadd.f32 %v189, %v206
    %v209 = vadd.f32 %v190, %v206
    %v210 = vadd.f32 %v191, %v206
    %v211 = vadd.f32 %v192, %v206
    %v212 = vadd.f32 %v193, %v206
    %v213 = vadd.f32 %v194, %v206
    %v214 = vadd.f32 %v195, %v206
    %v215 = vadd.f32 %v196, %v206
    %v216 = vadd.f32 %v197, %v206
    %v217 = vadd.f32 %v198, %v206
    %v218 = vadd.f32 %v199, %v206
    %v219 = vadd.f32 %v200, %v206
    %v220 = vadd.f32 %v201, %v206
    %v221 = vadd.f32 %v202, %v206
    %v222 = vadd.f32 %v203, %v206
    %v223 = vadd.f32 %v204, %v206
    %v224 = vadd.f32 %v114, %v208
    %v225 = vadd.f32 %v115, %v209
    %v226 = vadd.f32 %v116, %v210
    %v227 = vadd.f32 %v117, %v211
    %v228 = vadd.f32 %v118, %v212
    %v229 = vadd.f32 %v119, %v213
    %v230 = vadd.f32 %v120, %v214
    %v231 = vadd.f32 %v121, %v215
    %v232 = vadd.f32 %v122, %v216
    %v233 = vadd.f32 %v123, %v217
    %v234 = vadd.f32 %v124, %v218
    %v235 = vadd.f32 %v125, %v219
    %v236 = vadd.f32 %v126, %v220
    %v237 = vadd.f32 %v127, %v221
    %v238 = vadd.f32 %v128, %v222
    %v239 = vadd.f32 %v129, %v223
    %v240 = vmax.f32 %v224, 0.0
    %v241 = vmax.f32 %v225, 0.0
    %v242 = vmax.f32 %v226, 0.0
    %v243 = vmax.f32 %v227, 0.0
    %v244 = vmax.f32 %v228, 0.0
    %v245 = vmax.f32 %v229, 0.0
    %v246 = vmax.f32 %v230, 0.0
    %v247 = vmax.f32 %v231, 0.0
    %v248 = vmax.f32 %v232, 0.0
    %v249 = vmax.f32 %v233, 0.0
    %v250 = vmax.f32 %v234, 0.0
    %v251 = vmax.f32 %v235, 0.0
    %v252 = vmax.f32 %v236, 0.0
    %v253 = vmax.f32 %v237, 0.0
    %v254 = vmax.f32 %v238, 0.0
    %v255 = vmax.f32 %v239, 0.0
    %256 = vst [vmem:[#allocation2] sm:$0xff] %v240
    %257 = vst [vmem:[#allocation2 + $0x8] sm:$0xff] %v241
    %258 = vst [vmem:[#allocation2 + $0x10] sm:$0xff] %v242
    %259 = vst [vmem:[#allocation2 + $0x18] sm:$0xff] %v243
    %260 = vst [vmem:[#allocation2 + $0x20] sm:$0xff] %v244
    %261 = vst [vmem:[#allocation2 + $0x28] sm:$0xff] %v245
    %262 = vst [vmem:[#allocation2 + $0x30] sm:$0xff] %v246
    %263 = vst [vmem:[#allocation2 + $0x38] sm:$0xff] %v247
    %264 = vst [vmem:[#allocation2 + $0x40] sm:$0xff] %v248
    %265 = vst [vmem:[#allocation2 + $0x48] sm:$0xff] %v249
    %266 = vst [vmem:[#allocation2 + $0x50] sm:$0xff] %v250
    %267 = vst [vmem:[#allocation2 + $0x58] sm:$0xff] %v251
    %268 = vst [vmem:[#allocation2 + $0x60] sm:$0xff] %v252
    %269 = vst [vmem:[#allocation2 + $0x68] sm:$0xff] %v253
    %270 = vst [vmem:[#allocation2 + $0x70] sm:$0xff] %v254
    %271 = vst [vmem:[#allocation2 + $0x78] sm:$0xff] %v255
    // Predicated region
    $region42: #{bottleneck_forward.11} parent=1 // pred_check
      _
    $region43: #{bottleneck_forward.11} parent=1 // pred_check_branch
      %273 = sbr.rel (0) target = $region45
    $region44: #{bottleneck_forward.11} parent=1 // pred_region
      %275 = vsyncadd [#allocation3], 0
      %s276 = sshll.u32 [#allocation2], 4
      %s277 = int_to_ptr.vmem [resolvable:$true] %s276
      %s278 = sshll.u32 %s10, 4
      %s279 = int_to_ptr.hbm [resolvable:$true] %s278
      %284 = dma.vmem_to_hbm [thread:$0]  %s277, 2048, %s279, [#allocation3], 128, 128, 8
    $region45: #{bottleneck_forward.11} parent=1 // pred_fallthru
      _
    // Predicated region
    $region46: #{bottleneck_forward.11} parent=1 // pred_check
      _
    $region47: #{bottleneck_forward.11} parent=1 // pred_check_branch
      %286 = sbr.rel (0) target = $region49
    $region48: #{bottleneck_forward.11} parent=1 // pred_region
      %288 = dma.done [#allocation3], 2048
    $region49: #{bottleneck_forward.11} parent=1 // pred_fallthru
      _
    %289 = vsyncpa [#allocation3], 1

</llo_original>
